<compile_context>
chip_gen: v7x
topology: tpu7x:2x2x1
jax: 0.10.0
libtpu: 0.0.40
codegen_flags: <defaults>
</compile_context>

<pallas_src>
import math

import jax
import jax.numpy as jnp
from jax import lax
from jax.experimental import pallas as pl
from jax.experimental.pallas import tpu as pltpu


# ---------------------------------------------------------------------------
# Pallas kernel
# ---------------------------------------------------------------------------
def _make_conv3x3_kernel(H, W, Cin, TN, TH, has_bias, mxu_dtype):
    """3x3 conv with in-kernel zero halo; weights are already theta-folded.

    Refs:
      x_ref  : (1, H, W, Cin)    f32
      w_ref  : (9, Cin, TN)      mxu_dtype
      b_ref  : (1, TN)           f32            (only if has_bias)
      o_ref  : (1, H, W, TN)     f32
      xs_ref : (H+2, W+2, Cin)   mxu_dtype      VMEM scratch (zero halo)
    """
    n_row_tiles = H // TH

    def kernel(x_ref, w_ref, *rest):
        if has_bias:
            b_ref, o_ref, xs_ref = rest
        else:
            o_ref, xs_ref = rest
            b_ref = None

        # Build the zero-padded copy of the input block in VMEM (no HBM pad
        # round trip) and cast to the MXU operand dtype on the way.
        xs_ref[...] = jnp.zeros_like(xs_ref)
        xs_ref[1:H + 1, 1:W + 1, :] = x_ref[0].astype(mxu_dtype)

        def row_tile(rt, carry):
            r0 = pl.multiple_of(rt * TH, TH)
            acc = jnp.zeros((TH * W, TN), jnp.float32)
            # 9 shifted-window matmuls (taps fully unrolled), f32 accumulation.
            for k in range(9):
                dy, dx = divmod(k, 3)
                patch = xs_ref[pl.ds(r0 + dy, TH), dx:dx + W, :]
                patch = patch.reshape(TH * W, Cin)
                acc = acc + jnp.dot(patch, w_ref[k],
                                    preferred_element_type=jnp.float32)
            if b_ref is not None:
                acc = acc + b_ref[0, :][None, :]
            o_ref[0, pl.ds(r0, TH), :, :] = (
                acc.reshape(TH, W, TN).astype(o_ref.dtype))
            return carry

        lax.fori_loop(0, n_row_tiles, row_tile, 0, unroll=True)

    return kernel


# ---------------------------------------------------------------------------
# Wrappers
# ---------------------------------------------------------------------------
def conv2d_cd_nhwc(x, w_hwio, b=None, *, theta=0.7, mxu_dtype=jnp.bfloat16):
    """Central-difference conv. x: (N,H,W,Cin) f32; w: (3,3,Cin,Cout); b: (Cout,)|None."""
    N, H, W, Cin = x.shape
    kh, kw, wci, Cout = w_hwio.shape
    assert (kh, kw) == (3, 3) and wci == Cin

    # ---- Fold the central-difference term into the weights (exact algebra) ----
    w9 = w_hwio.astype(jnp.float32).reshape(9, Cin, Cout)
    if abs(float(theta)) >= 1e-8:
        w9 = w9.at[4].add(-theta * jnp.sum(w9, axis=0))   # center tap = idx 4
        b = None if b is None else (1.0 - float(theta)) * b
    w9 = w9.astype(mxu_dtype)
    has_bias = b is not None

    # ---- Tiling choices ----
    TN = 128 if Cout % 128 == 0 else Cout            # lane-dense Cout tiles
    n_co = Cout // TN
    TH = 1                                           # ~128 accumulator rows
    for cand in range(min(H, max(1, 128 // W)), 0, -1):
        if H % cand == 0:
            TH = cand
            break

    kernel = _make_conv3x3_kernel(H, W, Cin, TN, TH, has_bias, mxu_dtype)

    in_specs = [
        pl.BlockSpec((1, H, W, Cin), lambda n, co: (n, 0, 0, 0)),
        pl.BlockSpec((9, Cin, TN), lambda n, co: (0, 0, co)),
    ]
    args = [x.astype(jnp.float32), w9]
    if has_bias:
        in_specs.append(pl.BlockSpec((1, TN), lambda n, co: (0, co)))
        args.append(jnp.asarray(b, jnp.float32).reshape(1, Cout))

    return pl.pallas_call(
        kernel,
        out_shape=jax.ShapeDtypeStruct((N, H, W, Cout), jnp.float32),
        grid=(N, n_co),
        in_specs=in_specs,
        out_specs=pl.BlockSpec((1, H, W, TN), lambda n, co: (n, 0, 0, co)),
        scratch_shapes=[pltpu.VMEM((H + 2, W + 2, Cin), mxu_dtype)],
        compiler_params=pltpu.CompilerParams(
            dimension_semantics=("parallel", "parallel")),
    )(*args)


def conv2d_cd(x_nchw, w_oihw, b=None, *, theta=0.7, mxu_dtype=jnp.bfloat16):
    """PyTorch-facing layout: x (N,Cin,H,W), w (Cout,Cin,3,3) -> (N,Cout,H,W)."""
    x_nhwc = jnp.transpose(x_nchw, (0, 2, 3, 1))
    w_hwio = jnp.transpose(w_oihw, (2, 3, 1, 0))
    out = conv2d_cd_nhwc(x_nhwc, w_hwio, b, theta=theta, mxu_dtype=mxu_dtype)
    return jnp.transpose(out, (0, 3, 1, 2))


# ---------------------------------------------------------------------------
# Pure-JAX reference (mirrors the PyTorch forward exactly, un-folded)
# ---------------------------------------------------------------------------
def conv2d_cd_reference(x_nchw, w_oihw, b=None, theta=0.7):
    dn = ("NCHW", "OIHW", "NCHW")
    out = lax.conv_general_dilated(x_nchw, w_oihw, (1, 1), ((1, 1), (1, 1)),
                                   dimension_numbers=dn)
    if b is not None:
        out = out + b[None, :, None, None]
    if abs(float(theta)) < 1e-8:
        return out
    kernel_diff = jnp.sum(w_oihw, axis=(2, 3))[:, :, None, None]
    out_diff = lax.conv_general_dilated(x_nchw, kernel_diff, (1, 1),
                                        ((0, 0), (0, 0)), dimension_numbers=dn)
    if b is not None:
        out_diff = out_diff + b[None, :, None, None]
    return out - theta * out_diff


# ---------------------------------------------------------------------------
if __name__ == "__main__":
    N, Cin, Cout, H, W = 2, 32, 128, 16, 16
    theta = 0.7

    key = jax.random.PRNGKey(0)
    kx, kw, kb = jax.random.split(key, 3)
    x = jax.random.normal(kx, (N, Cin, H, W), jnp.float32)
    w = jax.random.normal(kw, (Cout, Cin, 3, 3), jnp.float32) / math.sqrt(9 * Cin)
    bias = jax.random.normal(kb, (Cout,), jnp.float32) * 0.1

    # 1) Default Conv2d_cd config (bias=False, theta=0.7), bf16 MXU operands.
    out = jax.block_until_ready(conv2d_cd(x, w, None, theta=theta))
    ref = conv2d_cd_reference(x, w, None, theta)
    assert out.shape == (N, Cout, H, W)
    # Loose tolerance: operands are bf16 on the MXU (f32 accumulation).
    assert jnp.allclose(out, ref, atol=5e-2, rtol=5e-2), (
        float(jnp.max(jnp.abs(out - ref))))

    # 2) f32 MXU operands: tight check of the theta-folded math.
    out_hi = jax.block_until_ready(
        conv2d_cd(x, w, None, theta=theta, mxu_dtype=jnp.float32))
    assert jnp.allclose(out_hi, ref, atol=1e-4, rtol=1e-4), (
        float(jnp.max(jnp.abs(out_hi - ref))))

    # 3) Bias branch (bias folded by (1 - theta)), f32 operands, tight check.
    out_b = jax.block_until_ready(
        conv2d_cd(x, w, bias, theta=theta, mxu_dtype=jnp.float32))
    ref_b = conv2d_cd_reference(x, w, bias, theta)
    assert jnp.allclose(out_b, ref_b, atol=1e-4, rtol=1e-4), (
        float(jnp.max(jnp.abs(out_b - ref_b))))

    # 4) theta == 0 path (plain conv).
    out0 = jax.block_until_ready(
        conv2d_cd(x, w, None, theta=0.0, mxu_dtype=jnp.float32))
    ref0 = conv2d_cd_reference(x, w, None, 0.0)
    assert jnp.allclose(out0, ref0, atol=1e-4, rtol=1e-4), (
        float(jnp.max(jnp.abs(out0 - ref0))))

    print("KERNEL_OK")
</pallas_src>

<mosaic_0001>
module attributes {stable_mosaic.version = 11 : i64} {
  func.func @kernel(%arg0: i32, %arg1: i32, %arg2: memref<1x16x16x32xf32, #tpu.memory_space<vmem>>, %arg3: memref<9x32x128xbf16, #tpu.memory_space<vmem>>, %arg4: memref<1x16x16x128xf32, #tpu.memory_space<vmem>>, %arg5: memref<18x18x32xbf16, #tpu.memory_space<vmem>>) attributes {dimension_semantics = [#tpu.dimension_semantics<parallel>, #tpu.dimension_semantics<parallel>], iteration_bounds = array<i64: 2, 1>, scalar_prefetch = 0 : i64, scratch_operands = 1 : i64, tpu.core_type = #tpu.core_type<tc>, window_params = [{transform_indices = @transform_0, window_bounds = array<i64: 1, 16, 16, 32>}, {transform_indices = @transform_1, window_bounds = array<i64: 9, 32, 128>}, {transform_indices = @transform_2, window_bounds = array<i64: 1, 16, 16, 128>}]} {
    %cst = arith.constant 0.000000e+00 : bf16
    %0 = vector.broadcast %cst : bf16 to vector<18x18x32xbf16>
    %c0 = arith.constant 0 : index
    %c0_0 = arith.constant 0 : index
    %c0_1 = arith.constant 0 : index
    %1 = vector.load %arg5[%c0, %c0_0, %c0_1] : memref<18x18x32xbf16, #tpu.memory_space<vmem>>, vector<18x18x32xbf16>
    tpu.vector_store %arg5[%c0, %c0_0, %c0_1], %0 {strides = array<i32>} : memref<18x18x32xbf16, #tpu.memory_space<vmem>>, vector<18x18x32xbf16>,
    %c0_2 = arith.constant 0 : index
    %c0_3 = arith.constant 0 : index
    %c0_4 = arith.constant 0 : index
    %c0_5 = arith.constant 0 : index
    %2 = vector.load %arg2[%c0_2, %c0_3, %c0_4, %c0_5] : memref<1x16x16x32xf32, #tpu.memory_space<vmem>>, vector<1x16x16x32xf32>
    %3 = vector.shape_cast %2 : vector<1x16x16x32xf32> to vector<16x16x32xf32>
    %4 = arith.truncf %3 : vector<16x16x32xf32> to vector<16x16x32xbf16>
    %c1 = arith.constant 1 : index
    %c1_6 = arith.constant 1 : index
    %c0_7 = arith.constant 0 : index
    %5 = vector.load %arg5[%c1, %c1_6, %c0_7] : memref<18x18x32xbf16, #tpu.memory_space<vmem>>, vector<16x16x32xbf16>
    tpu.vector_store %arg5[%c1, %c1_6, %c0_7], %4 {strides = array<i32>} : memref<18x18x32xbf16, #tpu.memory_space<vmem>>, vector<16x16x32xbf16>,
    %c0_i32 = arith.constant 0 : i32
    %c8_i32 = arith.constant 8 : i32
    %6 = arith.muli %c0_i32, %c8_i32 : i32
    %7 = tpu.assume_multiple %6, 8 : i32
    %cst_8 = arith.constant 0.000000e+00 : f32
    %8 = vector.broadcast %cst_8 : f32 to vector<128x128xf32>
    %c0_i32_9 = arith.constant 0 : i32
    %9 = arith.addi %7, %c0_i32_9 : i32
    %10 = arith.index_cast %9 : i32 to index
    %c0_10 = arith.constant 0 : index
    %c0_11 = arith.constant 0 : index
    %11 = vector.load %arg5[%10, %c0_10, %c0_11] : memref<18x18x32xbf16, #tpu.memory_space<vmem>>, vector<8x16x32xbf16>
    %12 = vector.shape_cast %11 : vector<8x16x32xbf16> to vector<128x32xbf16>
    %c0_12 = arith.constant 0 : index
    %c0_13 = arith.constant 0 : index
    %c0_14 = arith.constant 0 : index
    %13 = vector.load %arg3[%c0_12, %c0_13, %c0_14] : memref<9x32x128xbf16, #tpu.memory_space<vmem>>, vector<1x32x128xbf16>
    %14 = vector.shape_cast %13 : vector<1x32x128xbf16> to vector<32x128xbf16>
    %cst_15 = arith.constant dense<0.000000e+00> : vector<128x128xf32>
    %15 = tpu.matmul %12, %14, %cst_15 {dimension_numbers = #tpu.dot_dimension_numbers<[1], [0], [0], [1], [0, 0, 1, 1], [], []>} : vector<128x32xbf16>, vector<32x128xbf16>, vector<128x128xf32> -> vector<128x128xf32>
    %16 = arith.addf %8, %15 : vector<128x128xf32>
    %c0_i32_16 = arith.constant 0 : i32
    %17 = arith.addi %7, %c0_i32_16 : i32
    %18 = arith.index_cast %17 : i32 to index
    %c1_17 = arith.constant 1 : index
    %c0_18 = arith.constant 0 : index
    %19 = vector.load %arg5[%18, %c1_17, %c0_18] : memref<18x18x32xbf16, #tpu.memory_space<vmem>>, vector<8x16x32xbf16>
    %20 = vector.shape_cast %19 : vector<8x16x32xbf16> to vector<128x32xbf16>
    %c1_19 = arith.constant 1 : index
    %c0_20 = arith.constant 0 : index
    %c0_21 = arith.constant 0 : index
    %21 = vector.load %arg3[%c1_19, %c0_20, %c0_21] : memref<9x32x128xbf16, #tpu.memory_space<vmem>>, vector<1x32x128xbf16>
    %22 = vector.shape_cast %21 : vector<1x32x128xbf16> to vector<32x128xbf16>
    %cst_22 = arith.constant dense<0.000000e+00> : vector<128x128xf32>
    %23 = tpu.matmul %20, %22, %cst_22 {dimension_numbers = #tpu.dot_dimension_numbers<[1], [0], [0], [1], [0, 0, 1, 1], [], []>} : vector<128x32xbf16>, vector<32x128xbf16>, vector<128x128xf32> -> vector<128x128xf32>
    %24 = arith.addf %16, %23 : vector<128x128xf32>
    %c0_i32_23 = arith.constant 0 : i32
    %25 = arith.addi %7, %c0_i32_23 : i32
    %26 = arith.index_cast %25 : i32 to index
    %c2 = arith.constant 2 : index
    %c0_24 = arith.constant 0 : index
    %27 = vector.load %arg5[%26, %c2, %c0_24] : memref<18x18x32xbf16, #tpu.memory_space<vmem>>, vector<8x16x32xbf16>
    %28 = vector.shape_cast %27 : vector<8x16x32xbf16> to vector<128x32xbf16>
    %c2_25 = arith.constant 2 : index
    %c0_26 = arith.constant 0 : index
    %c0_27 = arith.constant 0 : index
    %29 = vector.load %arg3[%c2_25, %c0_26, %c0_27] : memref<9x32x128xbf16, #tpu.memory_space<vmem>>, vector<1x32x128xbf16>
    %30 = vector.shape_cast %29 : vector<1x32x128xbf16> to vector<32x128xbf16>
    %cst_28 = arith.constant dense<0.000000e+00> : vector<128x128xf32>
    %31 = tpu.matmul %28, %30, %cst_28 {dimension_numbers = #tpu.dot_dimension_numbers<[1], [0], [0], [1], [0, 0, 1, 1], [], []>} : vector<128x32xbf16>, vector<32x128xbf16>, vector<128x128xf32> -> vector<128x128xf32>
    %32 = arith.addf %24, %31 : vector<128x128xf32>
    %c1_i32 = arith.constant 1 : i32
    %33 = arith.addi %7, %c1_i32 : i32
    %34 = arith.index_cast %33 : i32 to index
    %c0_29 = arith.constant 0 : index
    %c0_30 = arith.constant 0 : index
    %35 = vector.load %arg5[%34, %c0_29, %c0_30] : memref<18x18x32xbf16, #tpu.memory_space<vmem>>, vector<8x16x32xbf16>
    %36 = vector.shape_cast %35 : vector<8x16x32xbf16> to vector<128x32xbf16>
    %c3 = arith.constant 3 : index
    %c0_31 = arith.constant 0 : index
    %c0_32 = arith.constant 0 : index
    %37 = vector.load %arg3[%c3, %c0_31, %c0_32] : memref<9x32x128xbf16, #tpu.memory_space<vmem>>, vector<1x32x128xbf16>
    %38 = vector.shape_cast %37 : vector<1x32x128xbf16> to vector<32x128xbf16>
    %cst_33 = arith.constant dense<0.000000e+00> : vector<128x128xf32>
    %39 = tpu.matmul %36, %38, %cst_33 {dimension_numbers = #tpu.dot_dimension_numbers<[1], [0], [0], [1], [0, 0, 1, 1], [], []>} : vector<128x32xbf16>, vector<32x128xbf16>, vector<128x128xf32> -> vector<128x128xf32>
    %40 = arith.addf %32, %39 : vector<128x128xf32>
    %c1_i32_34 = arith.constant 1 : i32
    %41 = arith.addi %7, %c1_i32_34 : i32
    %42 = arith.index_cast %41 : i32 to index
    %c1_35 = arith.constant 1 : index
    %c0_36 = arith.constant 0 : index
    %43 = vector.load %arg5[%42, %c1_35, %c0_36] : memref<18x18x32xbf16, #tpu.memory_space<vmem>>, vector<8x16x32xbf16>
    %44 = vector.shape_cast %43 : vector<8x16x32xbf16> to vector<128x32xbf16>
    %c4 = arith.constant 4 : index
    %c0_37 = arith.constant 0 : index
    %c0_38 = arith.constant 0 : index
    %45 = vector.load %arg3[%c4, %c0_37, %c0_38] : memref<9x32x128xbf16, #tpu.memory_space<vmem>>, vector<1x32x128xbf16>
    %46 = vector.shape_cast %45 : vector<1x32x128xbf16> to vector<32x128xbf16>
    %cst_39 = arith.constant dense<0.000000e+00> : vector<128x128xf32>
    %47 = tpu.matmul %44, %46, %cst_39 {dimension_numbers = #tpu.dot_dimension_numbers<[1], [0], [0], [1], [0, 0, 1, 1], [], []>} : vector<128x32xbf16>, vector<32x128xbf16>, vector<128x128xf32> -> vector<128x128xf32>
    %48 = arith.addf %40, %47 : vector<128x128xf32>
    %c1_i32_40 = arith.constant 1 : i32
    %49 = arith.addi %7, %c1_i32_40 : i32
    %50 = arith.index_cast %49 : i32 to index
    %c2_41 = arith.constant 2 : index
    %c0_42 = arith.constant 0 : index
    %51 = vector.load %arg5[%50, %c2_41, %c0_42] : memref<18x18x32xbf16, #tpu.memory_space<vmem>>, vector<8x16x32xbf16>
    %52 = vector.shape_cast %51 : vector<8x16x32xbf16> to vector<128x32xbf16>
    %c5 = arith.constant 5 : index
    %c0_43 = arith.constant 0 : index
    %c0_44 = arith.constant 0 : index
    %53 = vector.load %arg3[%c5, %c0_43, %c0_44] : memref<9x32x128xbf16, #tpu.memory_space<vmem>>, vector<1x32x128xbf16>
    %54 = vector.shape_cast %53 : vector<1x32x128xbf16> to vector<32x128xbf16>
    %cst_45 = arith.constant dense<0.000000e+00> : vector<128x128xf32>
    %55 = tpu.matmul %52, %54, %cst_45 {dimension_numbers = #tpu.dot_dimension_numbers<[1], [0], [0], [1], [0, 0, 1, 1], [], []>} : vector<128x32xbf16>, vector<32x128xbf16>, vector<128x128xf32> -> vector<128x128xf32>
    %56 = arith.addf %48, %55 : vector<128x128xf32>
    %c2_i32 = arith.constant 2 : i32
    %57 = arith.addi %7, %c2_i32 : i32
    %58 = arith.index_cast %57 : i32 to index
    %c0_46 = arith.constant 0 : index
    %c0_47 = arith.constant 0 : index
    %59 = vector.load %arg5[%58, %c0_46, %c0_47] : memref<18x18x32xbf16, #tpu.memory_space<vmem>>, vector<8x16x32xbf16>
    %60 = vector.shape_cast %59 : vector<8x16x32xbf16> to vector<128x32xbf16>
    %c6 = arith.constant 6 : index
    %c0_48 = arith.constant 0 : index
    %c0_49 = arith.constant 0 : index
    %61 = vector.load %arg3[%c6, %c0_48, %c0_49] : memref<9x32x128xbf16, #tpu.memory_space<vmem>>, vector<1x32x128xbf16>
    %62 = vector.shape_cast %61 : vector<1x32x128xbf16> to vector<32x128xbf16>
    %cst_50 = arith.constant dense<0.000000e+00> : vector<128x128xf32>
    %63 = tpu.matmul %60, %62, %cst_50 {dimension_numbers = #tpu.dot_dimension_numbers<[1], [0], [0], [1], [0, 0, 1, 1], [], []>} : vector<128x32xbf16>, vector<32x128xbf16>, vector<128x128xf32> -> vector<128x128xf32>
    %64 = arith.addf %56, %63 : vector<128x128xf32>
    %c2_i32_51 = arith.constant 2 : i32
    %65 = arith.addi %7, %c2_i32_51 : i32
    %66 = arith.index_cast %65 : i32 to index
    %c1_52 = arith.constant 1 : index
    %c0_53 = arith.constant 0 : index
    %67 = vector.load %arg5[%66, %c1_52, %c0_53] : memref<18x18x32xbf16, #tpu.memory_space<vmem>>, vector<8x16x32xbf16>
    %68 = vector.shape_cast %67 : vector<8x16x32xbf16> to vector<128x32xbf16>
    %c7 = arith.constant 7 : index
    %c0_54 = arith.constant 0 : index
    %c0_55 = arith.constant 0 : index
    %69 = vector.load %arg3[%c7, %c0_54, %c0_55] : memref<9x32x128xbf16, #tpu.memory_space<vmem>>, vector<1x32x128xbf16>
    %70 = vector.shape_cast %69 : vector<1x32x128xbf16> to vector<32x128xbf16>
    %cst_56 = arith.constant dense<0.000000e+00> : vector<128x128xf32>
    %71 = tpu.matmul %68, %70, %cst_56 {dimension_numbers = #tpu.dot_dimension_numbers<[1], [0], [0], [1], [0, 0, 1, 1], [], []>} : vector<128x32xbf16>, vector<32x128xbf16>, vector<128x128xf32> -> vector<128x128xf32>
    %72 = arith.addf %64, %71 : vector<128x128xf32>
    %c2_i32_57 = arith.constant 2 : i32
    %73 = arith.addi %7, %c2_i32_57 : i32
    %74 = arith.index_cast %73 : i32 to index
    %c2_58 = arith.constant 2 : index
    %c0_59 = arith.constant 0 : index
    %75 = vector.load %arg5[%74, %c2_58, %c0_59] : memref<18x18x32xbf16, #tpu.memory_space<vmem>>, vector<8x16x32xbf16>
    %76 = vector.shape_cast %75 : vector<8x16x32xbf16> to vector<128x32xbf16>
    %c8 = arith.constant 8 : index
    %c0_60 = arith.constant 0 : index
    %c0_61 = arith.constant 0 : index
    %77 = vector.load %arg3[%c8, %c0_60, %c0_61] : memref<9x32x128xbf16, #tpu.memory_space<vmem>>, vector<1x32x128xbf16>
    %78 = vector.shape_cast %77 : vector<1x32x128xbf16> to vector<32x128xbf16>
    %cst_62 = arith.constant dense<0.000000e+00> : vector<128x128xf32>
    %79 = tpu.matmul %76, %78, %cst_62 {dimension_numbers = #tpu.dot_dimension_numbers<[1], [0], [0], [1], [0, 0, 1, 1], [], []>} : vector<128x32xbf16>, vector<32x128xbf16>, vector<128x128xf32> -> vector<128x128xf32>
    %80 = arith.addf %72, %79 : vector<128x128xf32>
    %81 = vector.shape_cast %80 : vector<128x128xf32> to vector<8x16x128xf32>
    %c0_63 = arith.constant 0 : index
    %82 = arith.index_cast %7 : i32 to index
    %c0_64 = arith.constant 0 : index
    %c0_65 = arith.constant 0 : index
    %83 = vector.load %arg4[%c0_63, %82, %c0_64, %c0_65] : memref<1x16x16x128xf32, #tpu.memory_space<vmem>>, vector<1x8x16x128xf32>
    %84 = vector.shape_cast %83 : vector<1x8x16x128xf32> to vector<8x16x128xf32>
    %85 = vector.shape_cast %81 : vector<8x16x128xf32> to vector<1x8x16x128xf32>
    tpu.vector_store %arg4[%c0_63, %82, %c0_64, %c0_65], %85 {strides = array<i32>} : memref<1x16x16x128xf32, #tpu.memory_space<vmem>>, vector<1x8x16x128xf32>,
    %c1_i32_66 = arith.constant 1 : i32
    %c8_i32_67 = arith.constant 8 : i32
    %86 = arith.muli %c1_i32_66, %c8_i32_67 : i32
    %87 = tpu.assume_multiple %86, 8 : i32
    %cst_68 = arith.constant 0.000000e+00 : f32
    %88 = vector.broadcast %cst_68 : f32 to vector<128x128xf32>
    %c0_i32_69 = arith.constant 0 : i32
    %89 = arith.addi %87, %c0_i32_69 : i32
    %90 = arith.index_cast %89 : i32 to index
    %c0_70 = arith.constant 0 : index
    %c0_71 = arith.constant 0 : index
    %91 = vector.load %arg5[%90, %c0_70, %c0_71] : memref<18x18x32xbf16, #tpu.memory_space<vmem>>, vector<8x16x32xbf16>
    %92 = vector.shape_cast %91 : vector<8x16x32xbf16> to vector<128x32xbf16>
    %c0_72 = arith.constant 0 : index
    %c0_73 = arith.constant 0 : index
    %c0_74 = arith.constant 0 : index
    %93 = vector.load %arg3[%c0_72, %c0_73, %c0_74] : memref<9x32x128xbf16, #tpu.memory_space<vmem>>, vector<1x32x128xbf16>
    %94 = vector.shape_cast %93 : vector<1x32x128xbf16> to vector<32x128xbf16>
    %cst_75 = arith.constant dense<0.000000e+00> : vector<128x128xf32>
    %95 = tpu.matmul %92, %94, %cst_75 {dimension_numbers = #tpu.dot_dimension_numbers<[1], [0], [0], [1], [0, 0, 1, 1], [], []>} : vector<128x32xbf16>, vector<32x128xbf16>, vector<128x128xf32> -> vector<128x128xf32>
    %96 = arith.addf %88, %95 : vector<128x128xf32>
    %c0_i32_76 = arith.constant 0 : i32
    %97 = arith.addi %87, %c0_i32_76 : i32
    %98 = arith.index_cast %97 : i32 to index
    %c1_77 = arith.constant 1 : index
    %c0_78 = arith.constant 0 : index
    %99 = vector.load %arg5[%98, %c1_77, %c0_78] : memref<18x18x32xbf16, #tpu.memory_space<vmem>>, vector<8x16x32xbf16>
    %100 = vector.shape_cast %99 : vector<8x16x32xbf16> to vector<128x32xbf16>
    %c1_79 = arith.constant 1 : index
    %c0_80 = arith.constant 0 : index
    %c0_81 = arith.constant 0 : index
    %101 = vector.load %arg3[%c1_79, %c0_80, %c0_81] : memref<9x32x128xbf16, #tpu.memory_space<vmem>>, vector<1x32x128xbf16>
    %102 = vector.shape_cast %101 : vector<1x32x128xbf16> to vector<32x128xbf16>
    %cst_82 = arith.constant dense<0.000000e+00> : vector<128x128xf32>
    %103 = tpu.matmul %100, %102, %cst_82 {dimension_numbers = #tpu.dot_dimension_numbers<[1], [0], [0], [1], [0, 0, 1, 1], [], []>} : vector<128x32xbf16>, vector<32x128xbf16>, vector<128x128xf32> -> vector<128x128xf32>
    %104 = arith.addf %96, %103 : vector<128x128xf32>
    %c0_i32_83 = arith.constant 0 : i32
    %105 = arith.addi %87, %c0_i32_83 : i32
    %106 = arith.index_cast %105 : i32 to index
    %c2_84 = arith.constant 2 : index
    %c0_85 = arith.constant 0 : index
    %107 = vector.load %arg5[%106, %c2_84, %c0_85] : memref<18x18x32xbf16, #tpu.memory_space<vmem>>, vector<8x16x32xbf16>
    %108 = vector.shape_cast %107 : vector<8x16x32xbf16> to vector<128x32xbf16>
    %c2_86 = arith.constant 2 : index
    %c0_87 = arith.constant 0 : index
    %c0_88 = arith.constant 0 : index
    %109 = vector.load %arg3[%c2_86, %c0_87, %c0_88] : memref<9x32x128xbf16, #tpu.memory_space<vmem>>, vector<1x32x128xbf16>
    %110 = vector.shape_cast %109 : vector<1x32x128xbf16> to vector<32x128xbf16>
    %cst_89 = arith.constant dense<0.000000e+00> : vector<128x128xf32>
    %111 = tpu.matmul %108, %110, %cst_89 {dimension_numbers = #tpu.dot_dimension_numbers<[1], [0], [0], [1], [0, 0, 1, 1], [], []>} : vector<128x32xbf16>, vector<32x128xbf16>, vector<128x128xf32> -> vector<128x128xf32>
    %112 = arith.addf %104, %111 : vector<128x128xf32>
    %c1_i32_90 = arith.constant 1 : i32
    %113 = arith.addi %87, %c1_i32_90 : i32
    %114 = arith.index_cast %113 : i32 to index
    %c0_91 = arith.constant 0 : index
    %c0_92 = arith.constant 0 : index
    %115 = vector.load %arg5[%114, %c0_91, %c0_92] : memref<18x18x32xbf16, #tpu.memory_space<vmem>>, vector<8x16x32xbf16>
    %116 = vector.shape_cast %115 : vector<8x16x32xbf16> to vector<128x32xbf16>
    %c3_93 = arith.constant 3 : index
    %c0_94 = arith.constant 0 : index
    %c0_95 = arith.constant 0 : index
    %117 = vector.load %arg3[%c3_93, %c0_94, %c0_95] : memref<9x32x128xbf16, #tpu.memory_space<vmem>>, vector<1x32x128xbf16>
    %118 = vector.shape_cast %117 : vector<1x32x128xbf16> to vector<32x128xbf16>
    %cst_96 = arith.constant dense<0.000000e+00> : vector<128x128xf32>
    %119 = tpu.matmul %116, %118, %cst_96 {dimension_numbers = #tpu.dot_dimension_numbers<[1], [0], [0], [1], [0, 0, 1, 1], [], []>} : vector<128x32xbf16>, vector<32x128xbf16>, vector<128x128xf32> -> vector<128x128xf32>
    %120 = arith.addf %112, %119 : vector<128x128xf32>
    %c1_i32_97 = arith.constant 1 : i32
    %121 = arith.addi %87, %c1_i32_97 : i32
    %122 = arith.index_cast %121 : i32 to index
    %c1_98 = arith.constant 1 : index
    %c0_99 = arith.constant 0 : index
    %123 = vector.load %arg5[%122, %c1_98, %c0_99] : memref<18x18x32xbf16, #tpu.memory_space<vmem>>, vector<8x16x32xbf16>
    %124 = vector.shape_cast %123 : vector<8x16x32xbf16> to vector<128x32xbf16>
    %c4_100 = arith.constant 4 : index
    %c0_101 = arith.constant 0 : index
    %c0_102 = arith.constant 0 : index
    %125 = vector.load %arg3[%c4_100, %c0_101, %c0_102] : memref<9x32x128xbf16, #tpu.memory_space<vmem>>, vector<1x32x128xbf16>
    %126 = vector.shape_cast %125 : vector<1x32x128xbf16> to vector<32x128xbf16>
    %cst_103 = arith.constant dense<0.000000e+00> : vector<128x128xf32>
    %127 = tpu.matmul %124, %126, %cst_103 {dimension_numbers = #tpu.dot_dimension_numbers<[1], [0], [0], [1], [0, 0, 1, 1], [], []>} : vector<128x32xbf16>, vector<32x128xbf16>, vector<128x128xf32> -> vector<128x128xf32>
    %128 = arith.addf %120, %127 : vector<128x128xf32>
    %c1_i32_104 = arith.constant 1 : i32
    %129 = arith.addi %87, %c1_i32_104 : i32
    %130 = arith.index_cast %129 : i32 to index
    %c2_105 = arith.constant 2 : index
    %c0_106 = arith.constant 0 : index
    %131 = vector.load %arg5[%130, %c2_105, %c0_106] : memref<18x18x32xbf16, #tpu.memory_space<vmem>>, vector<8x16x32xbf16>
    %132 = vector.shape_cast %131 : vector<8x16x32xbf16> to vector<128x32xbf16>
    %c5_107 = arith.constant 5 : index
    %c0_108 = arith.constant 0 : index
    %c0_109 = arith.constant 0 : index
    %133 = vector.load %arg3[%c5_107, %c0_108, %c0_109] : memref<9x32x128xbf16, #tpu.memory_space<vmem>>, vector<1x32x128xbf16>
    %134 = vector.shape_cast %133 : vector<1x32x128xbf16> to vector<32x128xbf16>
    %cst_110 = arith.constant dense<0.000000e+00> : vector<128x128xf32>
    %135 = tpu.matmul %132, %134, %cst_110 {dimension_numbers = #tpu.dot_dimension_numbers<[1], [0], [0], [1], [0, 0, 1, 1], [], []>} : vector<128x32xbf16>, vector<32x128xbf16>, vector<128x128xf32> -> vector<128x128xf32>
    %136 = arith.addf %128, %135 : vector<128x128xf32>
    %c2_i32_111 = arith.constant 2 : i32
    %137 = arith.addi %87, %c2_i32_111 : i32
    %138 = arith.index_cast %137 : i32 to index
    %c0_112 = arith.constant 0 : index
    %c0_113 = arith.constant 0 : index
    %139 = vector.load %arg5[%138, %c0_112, %c0_113] : memref<18x18x32xbf16, #tpu.memory_space<vmem>>, vector<8x16x32xbf16>
    %140 = vector.shape_cast %139 : vector<8x16x32xbf16> to vector<128x32xbf16>
    %c6_114 = arith.constant 6 : index
    %c0_115 = arith.constant 0 : index
    %c0_116 = arith.constant 0 : index
    %141 = vector.load %arg3[%c6_114, %c0_115, %c0_116] : memref<9x32x128xbf16, #tpu.memory_space<vmem>>, vector<1x32x128xbf16>
    %142 = vector.shape_cast %141 : vector<1x32x128xbf16> to vector<32x128xbf16>
    %cst_117 = arith.constant dense<0.000000e+00> : vector<128x128xf32>
    %143 = tpu.matmul %140, %142, %cst_117 {dimension_numbers = #tpu.dot_dimension_numbers<[1], [0], [0], [1], [0, 0, 1, 1], [], []>} : vector<128x32xbf16>, vector<32x128xbf16>, vector<128x128xf32> -> vector<128x128xf32>
    %144 = arith.addf %136, %143 : vector<128x128xf32>
    %c2_i32_118 = arith.constant 2 : i32
    %145 = arith.addi %87, %c2_i32_118 : i32
    %146 = arith.index_cast %145 : i32 to index
    %c1_119 = arith.constant 1 : index
    %c0_120 = arith.constant 0 : index
    %147 = vector.load %arg5[%146, %c1_119, %c0_120] : memref<18x18x32xbf16, #tpu.memory_space<vmem>>, vector<8x16x32xbf16>
    %148 = vector.shape_cast %147 : vector<8x16x32xbf16> to vector<128x32xbf16>
    %c7_121 = arith.constant 7 : index
    %c0_122 = arith.constant 0 : index
    %c0_123 = arith.constant 0 : index
    %149 = vector.load %arg3[%c7_121, %c0_122, %c0_123] : memref<9x32x128xbf16, #tpu.memory_space<vmem>>, vector<1x32x128xbf16>
    %150 = vector.shape_cast %149 : vector<1x32x128xbf16> to vector<32x128xbf16>
    %cst_124 = arith.constant dense<0.000000e+00> : vector<128x128xf32>
    %151 = tpu.matmul %148, %150, %cst_124 {dimension_numbers = #tpu.dot_dimension_numbers<[1], [0], [0], [1], [0, 0, 1, 1], [], []>} : vector<128x32xbf16>, vector<32x128xbf16>, vector<128x128xf32> -> vector<128x128xf32>
    %152 = arith.addf %144, %151 : vector<128x128xf32>
    %c2_i32_125 = arith.constant 2 : i32
    %153 = arith.addi %87, %c2_i32_125 : i32
    %154 = arith.index_cast %153 : i32 to index
    %c2_126 = arith.constant 2 : index
    %c0_127 = arith.constant 0 : index
    %155 = vector.load %arg5[%154, %c2_126, %c0_127] : memref<18x18x32xbf16, #tpu.memory_space<vmem>>, vector<8x16x32xbf16>
    %156 = vector.shape_cast %155 : vector<8x16x32xbf16> to vector<128x32xbf16>
    %c8_128 = arith.constant 8 : index
    %c0_129 = arith.constant 0 : index
    %c0_130 = arith.constant 0 : index
    %157 = vector.load %arg3[%c8_128, %c0_129, %c0_130] : memref<9x32x128xbf16, #tpu.memory_space<vmem>>, vector<1x32x128xbf16>
    %158 = vector.shape_cast %157 : vector<1x32x128xbf16> to vector<32x128xbf16>
    %cst_131 = arith.constant dense<0.000000e+00> : vector<128x128xf32>
    %159 = tpu.matmul %156, %158, %cst_131 {dimension_numbers = #tpu.dot_dimension_numbers<[1], [0], [0], [1], [0, 0, 1, 1], [], []>} : vector<128x32xbf16>, vector<32x128xbf16>, vector<128x128xf32> -> vector<128x128xf32>
    %160 = arith.addf %152, %159 : vector<128x128xf32>
    %161 = vector.shape_cast %160 : vector<128x128xf32> to vector<8x16x128xf32>
    %c0_132 = arith.constant 0 : index
    %162 = arith.index_cast %87 : i32 to index
    %c0_133 = arith.constant 0 : index
    %c0_134 = arith.constant 0 : index
    %163 = vector.load %arg4[%c0_132, %162, %c0_133, %c0_134] : memref<1x16x16x128xf32, #tpu.memory_space<vmem>>, vector<1x8x16x128xf32>
    %164 = vector.shape_cast %163 : vector<1x8x16x128xf32> to vector<8x16x128xf32>
    %165 = vector.shape_cast %161 : vector<8x16x128xf32> to vector<1x8x16x128xf32>
    tpu.vector_store %arg4[%c0_132, %162, %c0_133, %c0_134], %165 {strides = array<i32>} : memref<1x16x16x128xf32, #tpu.memory_space<vmem>>, vector<1x8x16x128xf32>,
    %c2_i32_135 = arith.constant 2 : i32
    return
  }
  func.func @transform_0(%arg0: i32, %arg1: i32) -> (i32, i32, i32, i32) {
    %c0_i32 = arith.constant 0 : i32
    %c0_i32_0 = arith.constant 0 : i32
    %c0_i32_1 = arith.constant 0 : i32
    %c0_i32_2 = arith.constant 0 : i32
    return %arg0, %c0_i32, %c0_i32_0, %c0_i32_1 : i32, i32, i32, i32
  }
  func.func @transform_1(%arg0: i32, %arg1: i32) -> (i32, i32, i32) {
    %c0_i32 = arith.constant 0 : i32
    %c0_i32_0 = arith.constant 0 : i32
    %c0_i32_1 = arith.constant 0 : i32
    return %c0_i32, %c0_i32_0, %arg1 : i32, i32, i32
  }
  func.func @transform_2(%arg0: i32, %arg1: i32) -> (i32, i32, i32, i32) {
    %c0_i32 = arith.constant 0 : i32
    %c0_i32_0 = arith.constant 0 : i32
    %c0_i32_1 = arith.constant 0 : i32
    return %arg0, %c0_i32, %c0_i32_0, %arg1 : i32, i32, i32, i32
  }
}

</mosaic_0001>

<llo_original>
// kernel: tpu_custom_call.1
$region0: #{tpu_custom_call.1}
  #allocation0 [shape = 'u32[]', space=smem, size = 0x4, offset = 0x4, fixed_abs, tag = 'smem constant byte address 0x4 - core index']
  #allocation1 [shape = 'u32[144,128]{1,0:T(1,128)}', space=vmem, size = 0x12000, scoped, tag = 'internal scratch']
  #allocation2 [shape = 'bf16[18,18,32]{2,1,0:T(8,128)(2,1)}', space=vmem, size = 0x1b000, scoped, tag = 'scratch operand']
  %s0 = inlined_call_operand.hbm [shape: f32[2,16,16,32], index: 0, kind: input, shape index: {}]
  %s1 = inlined_call_operand.hbm [shape: bf16[9,32,128], index: 1, kind: input, shape index: {}]
  %s2 = inlined_call_operand.hbm [shape: f32[2,16,16,128], index: 2, kind: output, shape index: {}]
  %s3 = sld [smem:[#allocation0]]
  $region49: #{tpu_custom_call.1} parent=0
    _
  %s5 = ssub.s32 1, %s3
  %s6 = scalar_select 0, %s5, %s3
  $region1: #{tpu_custom_call.1} parent=0
    #allocation3 [shape = 'u8[262144]{0}', space=vmem, size = 0x40000, scoped, tag = 'input window, operand 0']
    #allocation4 [shape = 's32[2]{0}', space=sflag, size = 0x8, scoped, tag = 'scoped memory for tpu_custom_call.1']
    #allocation5 [shape = 's32[2]{0}', space=sflag, size = 0x8, scoped, tag = 'scoped memory for tpu_custom_call.1']
    #allocation6 [shape = 'u8[73728]{0}', space=vmem, size = 0x12000, scoped, tag = 'input window, operand 1, single buffered']
    #allocation7 [shape = 's32[1]{0}', space=sflag, size = 0x4, scoped, tag = 'scoped memory for tpu_custom_call.1']
    #allocation8 [shape = 'u8[262144]{0}', space=vmem, size = 0x40000, scoped, tag = 'output window, operand 0']
    %7 = vsyncpa [#allocation4], 0
    %s8 = scalar_lea.sflag [#allocation4], 1
    %9 = vsyncpa %s8, 0
    %10 = vsyncpa [#allocation7], 0
    %11 = vsyncpa [#allocation5], 0
    %s12 = scalar_lea.sflag [#allocation5], 1
    %13 = vsyncpa %s12, 0
    loop: start=0, step=1, limit=4
    $region2: #{tpu_custom_call.1} parent=1 // loop_pre_header
      _
    $region3: #{tpu_custom_call.1} parent=1 // loop_header
      %s15 = sphi 0, %s19
      %p16 = scmp.ge.s32.totalorder %s15, 4
      %s22 = sphi 0, %s34
      %s23 = sphi 0, %s30
      %s24 = sphi 0, %s22
      %s25 = sphi 0, %s23
      %s26 = sphi 0, %s24
      %s27 = sphi 0, %s25
      %s37 = sphi 0, %s39
      %s40 = sphi 0, %s37
      %s41 = sphi 0, %s40
      %s57 = sphi 0, %s41
      %s63 = sphi 0, %s65
      %s66 = sphi 0, %s63
      %s67 = sphi 0, %s66
      %s83 = sphi 0, %s67
      %s91 = sphi 0, %s93
      %s94 = sphi 0, %s91
      %s95 = sphi 0, %s94
      %s111 = sphi 0, %s95
    $region4: #{tpu_custom_call.1} parent=1 // loop_header_branch
      %18 = sbr.rel (%p16) target = $region8
    $region5: #{tpu_custom_call.1} parent=1 // loop_body
      %s20 = ssub.s32 %s15, 1
      %s21 = ssub.s32 %s15, 2
      %s28 = sadd.s32 1, %s23
      %p29 = scmp.ge.s32.totalorder %s28, 1
      %s30 = scalar_select %p29, 0, %s28
      %s31 = sadd.s32 1, %s22
      %s32 = scalar_select %p29, %s31, %s22
      %p33 = scmp.ge.s32.totalorder %s32, 2
      %s34 = scalar_select %p33, 0, %s32
      %s35 = ssub.s32 %s22, %s34
      %p36 = scmp.eq.s32.totalorder %s35, 0
      %s38 = sadd.s32 %s37, 1
      %s39 = scalar_select %p36, %s37, %s38
      %p42 = pneg %p36
      %p43 = scmp.eq.s32.totalorder %s15, 1
      %p44 = por %p42, %p43
      %p45 = scmp.ne.s32.totalorder %s37, %s40
      %p46 = scmp.eq.s32.totalorder %s15, 0
      %p47 = por %p45, %p46
      %p48 = scmp.ne.s32.totalorder %s37, %s40
      %p49 = scmp.eq.s32.totalorder %s20, 1
      %p50 = por %p48, %p49
      %p51 = scmp.ne.s32.totalorder %s40, %s41
      %p52 = scmp.eq.s32.totalorder %s20, 0
      %p53 = por %p51, %p52
      %p54 = scmp.ne.s32.totalorder %s40, %s41
      %p55 = scmp.eq.s32.totalorder %s21, 1
      %p56 = por %p54, %p55
      %p58 = scmp.ne.s32.totalorder %s41, %s57
      %p59 = scmp.eq.s32.totalorder %s21, 0
      %p60 = por %p58, %p59
      %s61 = ssub.s32 %s23, %s30
      %p62 = scmp.eq.s32.totalorder %s61, 0
      %s64 = sadd.s32 %s63, 1
      %s65 = scalar_select %p62, %s63, %s64
      %p68 = pneg %p62
      %p69 = scmp.eq.s32.totalorder %s15, 1
      %p70 = por %p68, %p69
      %p71 = scmp.ne.s32.totalorder %s63, %s66
      %p72 = scmp.eq.s32.totalorder %s15, 0
      %p73 = por %p71, %p72
      %p74 = scmp.ne.s32.totalorder %s63, %s66
      %p75 = scmp.eq.s32.totalorder %s20, 1
      %p76 = por %p74, %p75
      %p77 = scmp.ne.s32.totalorder %s66, %s67
      %p78 = scmp.eq.s32.totalorder %s20, 0
      %p79 = por %p77, %p78
      %p80 = scmp.ne.s32.totalorder %s66, %s67
      %p81 = scmp.eq.s32.totalorder %s21, 1
      %p82 = por %p80, %p81
      %p84 = scmp.ne.s32.totalorder %s67, %s83
      %p85 = scmp.eq.s32.totalorder %s21, 0
      %p86 = por %p84, %p85
      %s87 = ssub.s32 %s22, %s34
      %s88 = ssub.s32 %s23, %s30
      %s89 = sor.u32 %s87, %s88
      %p90 = scmp.eq.s32.totalorder %s89, 0
      %s92 = sadd.s32 %s91, 1
      %s93 = scalar_select %p90, %s91, %s92
      %p96 = pneg %p90
      %p97 = scmp.eq.s32.totalorder %s15, 1
      %p98 = por %p96, %p97
      %p99 = scmp.ne.s32.totalorder %s91, %s94
      %p100 = scmp.eq.s32.totalorder %s15, 0
      %p101 = por %p99, %p100
      %p102 = scmp.ne.s32.totalorder %s91, %s94
      %p103 = scmp.eq.s32.totalorder %s20, 1
      %p104 = por %p102, %p103
      %p105 = scmp.ne.s32.totalorder %s94, %s95
      %p106 = scmp.eq.s32.totalorder %s20, 0
      %p107 = por %p105, %p106
      %p108 = scmp.ne.s32.totalorder %s94, %s95
      %p109 = scmp.eq.s32.totalorder %s21, 1
      %p110 = por %p108, %p109
      %p112 = scmp.ne.s32.totalorder %s95, %s111
      %p113 = scmp.eq.s32.totalorder %s21, 0
      %p114 = por %p112, %p113
      %p115 = scmp.le.s32.totalorder 1, %s15
      %p116 = scmp.lt.s32.totalorder %s15, 3
      %p117 = pnand %p115, %p116
      %p118 = pneg %p117
      // Predicated region
      $region9: #{tpu_custom_call.1} parent=5 // pred_check
        _
      $region10: #{tpu_custom_call.1} parent=5 // pred_check_branch
        %120 = sbr.rel (%p117) target = $region12
      $region11: #{tpu_custom_call.1} parent=5 // pred_region
        %s121 = ssub.s32 %s15, 1
        // Predicated region
        $region13: #{tpu_custom_call.1} parent=11 // pred_check
          %p122 = pneg %p79
        $region14: #{tpu_custom_call.1} parent=11 // pred_check_branch
          %124 = sbr.rel (%p122) target = $region16
        $region15: #{tpu_custom_call.1} parent=11 // pred_region
          %s126 = ssub.s32 2304, 2304
          %127 = vsyncadd [#allocation7], %s126
          %s128 = smul.addr %s25, 64
          %s129 = scalar_lea.hbm %s1, %s128
          %s130 = sshll.u32 [#allocation6], 4
          %s131 = int_to_ptr.vmem [resolvable:$true] %s130
          %136 = dma.hbm_to_vmem [thread:$0]  %s129, 2304, %s131, [#allocation7], 64, 64, 4
        $region16: #{tpu_custom_call.1} parent=11 // pred_fallthru
          _
      $region12: #{tpu_custom_call.1} parent=5 // pred_fallthru
        _
      %p137 = scmp.lt.s32.totalorder %s15, 2
      // Predicated region
      $region17: #{tpu_custom_call.1} parent=5 // pred_check
        %p138 = pneg %p137
      $region18: #{tpu_custom_call.1} parent=5 // pred_check_branch
        %140 = sbr.rel (%p138) target = $region20
      $region19: #{tpu_custom_call.1} parent=5 // pred_region
        // Predicated region
        $region21: #{tpu_custom_call.1} parent=19 // pred_check
          %p141 = pneg %p47
        $region22: #{tpu_custom_call.1} parent=19 // pred_check_branch
          %143 = sbr.rel (%p141) target = $region24
        $region23: #{tpu_custom_call.1} parent=19 // pred_region
          %s144 = sand.u32 %s37, 1
          %s145 = scalar_lea.sflag [#allocation4], %s144
          %s146 = sand.u32 %s37, 1
          %s147 = smul.addr %s146, 256
          %s148 = scalar_lea.vmem [#allocation3], %s147
          %s150 = ssub.s32 4096, 4096
          %151 = vsyncadd %s145, %s150
          %s152 = smul.addr %s22, 32
          %s153 = smul.addr %s152, 128
          %s154 = scalar_lea.hbm %s0, %s153
          %s155 = sshll.u32 %s148, 4
          %s156 = int_to_ptr.vmem [resolvable:$true] %s155
          %161 = dma.hbm_to_vmem [thread:$0]  %s154, 4096, %s156, %s145, 128, 128, 8
        $region24: #{tpu_custom_call.1} parent=19 // pred_fallthru
          _
      $region20: #{tpu_custom_call.1} parent=5 // pred_fallthru
        _
      %p162 = scmp.le.s32.totalorder 1, %s15
      %p163 = scmp.lt.s32.totalorder %s15, 3
      %p164 = pnand %p162, %p163
      %p165 = pneg %p164
      // Predicated region
      $region25: #{tpu_custom_call.1} parent=5 // pred_check
        _
      $region26: #{tpu_custom_call.1} parent=5 // pred_check_branch
        %167 = sbr.rel (%p164) target = $region28
      $region27: #{tpu_custom_call.1} parent=5 // pred_region
        %s168 = ssub.s32 %s15, 1
        %s169 = sand.u32 %s40, 1
        %s170 = scalar_lea.sflag [#allocation4], %s169
        %s171 = sand.u32 %s40, 1
        %s172 = smul.addr %s171, 256
        %s173 = scalar_lea.vmem [#allocation3], %s172
        // Predicated region
        $region29: #{tpu_custom_call.1} parent=27 // pred_check
          %p174 = pneg %p53
        $region30: #{tpu_custom_call.1} parent=27 // pred_check_branch
          %176 = sbr.rel (%p174) target = $region32
        $region31: #{tpu_custom_call.1} parent=27 // pred_region
          %177 = dma.done %s170, 4096
        $region32: #{tpu_custom_call.1} parent=27 // pred_fallthru
          _
        // Predicated region
        $region33: #{tpu_custom_call.1} parent=27 // pred_check
          %p178 = pneg %p79
        $region34: #{tpu_custom_call.1} parent=27 // pred_check_branch
          %180 = sbr.rel (%p178) target = $region36
        $region35: #{tpu_custom_call.1} parent=27 // pred_region
          %181 = dma.done [#allocation7], 2304
        $region36: #{tpu_custom_call.1} parent=27 // pred_fallthru
          _
        %s182 = sand.u32 %s40, 1
        %s183 = scalar_lea.sflag [#allocation4], %s182
        %s184 = sand.u32 %s40, 1
        %s185 = smul.addr %s184, 256
        %s186 = scalar_lea.vmem [#allocation3], %s185
        %p187 = pneg %p53
        %p188 = pneg %p50
        %p189 = pneg %p79
        %p190 = pneg %p76
        %p191 = pneg %p107
        %p192 = pneg %p104
        %s193 = sand.u32 %s94, 1
        %s194 = scalar_lea.sflag [#allocation5], %s193
        %s195 = sand.u32 %s94, 1
        %s196 = smul.addr %s195, 256
        %s197 = scalar_lea.vmem [#allocation8], %s196
        %vm199 = vcmask 257024
        %200 = vst.msk [vmem:[#allocation2] sm:$0xf] %vm199, 0
        %201 = vst.msk [vmem:[#allocation2 + $0x4] sm:$0xf] %vm199, 0
        %vm202 = vcmask 253952
        %203 = vst.msk [vmem:[#allocation2 + $0x8] sm:$0x1] %vm202, 0
        %204 = vst.msk [vmem:[#allocation2 + $0xc] sm:$0xf] %vm199, 0
        %205 = vst.msk [vmem:[#allocation2 + $0x10] sm:$0xf] %vm199, 0
        %206 = vst.msk [vmem:[#allocation2 + $0x14] sm:$0x1] %vm202, 0
        %207 = vst.msk [vmem:[#allocation2 + $0x18] sm:$0xf] %vm199, 0
        %208 = vst.msk [vmem:[#allocation2 + $0x1c] sm:$0xf] %vm199, 0
        %209 = vst.msk [vmem:[#allocation2 + $0x20] sm:$0x1] %vm202, 0
        %210 = vst.msk [vmem:[#allocation2 + $0x24] sm:$0xf] %vm199, 0
        %211 = vst.msk [vmem:[#allocation2 + $0x28] sm:$0xf] %vm199, 0
        %212 = vst.msk [vmem:[#allocation2 + $0x2c] sm:$0x1] %vm202, 0
        %213 = vst.msk [vmem:[#allocation2 + $0x30] sm:$0xf] %vm199, 0
        %214 = vst.msk [vmem:[#allocation2 + $0x34] sm:$0xf] %vm199, 0
        %215 = vst.msk [vmem:[#allocation2 + $0x38] sm:$0x1] %vm202, 0
        %216 = vst.msk [vmem:[#allocation2 + $0x3c] sm:$0xf] %vm199, 0
        %217 = vst.msk [vmem:[#allocation2 + $0x40] sm:$0xf] %vm199, 0
        %218 = vst.msk [vmem:[#allocation2 + $0x44] sm:$0x1] %vm202, 0
        %219 = vst.msk [vmem:[#allocation2 + $0x48] sm:$0xf] %vm199, 0
        %220 = vst.msk [vmem:[#allocation2 + $0x4c] sm:$0xf] %vm199, 0
        %221 = vst.msk [vmem:[#allocation2 + $0x50] sm:$0x1] %vm202, 0
        %222 = vst.msk [vmem:[#allocation2 + $0x54] sm:$0xf] %vm199, 0
        %223 = vst.msk [vmem:[#allocation2 + $0x58] sm:$0xf] %vm199, 0
        %224 = vst.msk [vmem:[#allocation2 + $0x5c] sm:$0x1] %vm202, 0
        %225 = vst.msk [vmem:[#allocation2 + $0x60] sm:$0xf] %vm199, 0
        %226 = vst.msk [vmem:[#allocation2 + $0x64] sm:$0xf] %vm199, 0
        %227 = vst.msk [vmem:[#allocation2 + $0x68] sm:$0x1] %vm202, 0
        %228 = vst.msk [vmem:[#allocation2 + $0x6c] sm:$0xf] %vm199, 0
        %229 = vst.msk [vmem:[#allocation2 + $0x70] sm:$0xf] %vm199, 0
        %230 = vst.msk [vmem:[#allocation2 + $0x74] sm:$0x1] %vm202, 0
        %231 = vst.msk [vmem:[#allocation2 + $0x78] sm:$0xf] %vm199, 0
        %232 = vst.msk [vmem:[#allocation2 + $0x7c] sm:$0xf] %vm199, 0
        %233 = vst.msk [vmem:[#allocation2 + $0x80] sm:$0x1] %vm202, 0
        %234 = vst.msk [vmem:[#allocation2 + $0x84] sm:$0xf] %vm199, 0
        %235 = vst.msk [vmem:[#allocation2 + $0x88] sm:$0xf] %vm199, 0
        %236 = vst.msk [vmem:[#allocation2 + $0x8c] sm:$0x1] %vm202, 0
        %237 = vst.msk [vmem:[#allocation2 + $0x90] sm:$0xf] %vm199, 0
        %238 = vst.msk [vmem:[#allocation2 + $0x94] sm:$0xf] %vm199, 0
        %239 = vst.msk [vmem:[#allocation2 + $0x98] sm:$0x1] %vm202, 0
        %240 = vst.msk [vmem:[#allocation2 + $0x9c] sm:$0xf] %vm199, 0
        %241 = vst.msk [vmem:[#allocation2 + $0xa0] sm:$0xf] %vm199, 0
        %242 = vst.msk [vmem:[#allocation2 + $0xa4] sm:$0x1] %vm202, 0
        %243 = vst.msk [vmem:[#allocation2 + $0xa8] sm:$0xf] %vm199, 0
        %244 = vst.msk [vmem:[#allocation2 + $0xac] sm:$0xf] %vm199, 0
        %245 = vst.msk [vmem:[#allocation2 + $0xb0] sm:$0x1] %vm202, 0
        %246 = vst.msk [vmem:[#allocation2 + $0xb4] sm:$0xf] %vm199, 0
        %247 = vst.msk [vmem:[#allocation2 + $0xb8] sm:$0xf] %vm199, 0
        %248 = vst.msk [vmem:[#allocation2 + $0xbc] sm:$0x1] %vm202, 0
        %249 = vst.msk [vmem:[#allocation2 + $0xc0] sm:$0xf] %vm199, 0
        %250 = vst.msk [vmem:[#allocation2 + $0xc4] sm:$0xf] %vm199, 0
        %251 = vst.msk [vmem:[#allocation2 + $0xc8] sm:$0x1] %vm202, 0
        %252 = vst.msk [vmem:[#allocation2 + $0xcc] sm:$0xf] %vm199, 0
        %253 = vst.msk [vmem:[#allocation2 + $0xd0] sm:$0xf] %vm199, 0
        %254 = vst.msk [vmem:[#allocation2 + $0xd4] sm:$0x1] %vm202, 0
        %v255 = vld [vmem:[%s173] sm:$0xff]
        %v256 = vld [vmem:[%s173 + $0x8] sm:$0xff]
        %v257 = vld [vmem:[%s173 + $0x10] sm:$0xff]
        %v258 = vld [vmem:[%s173 + $0x18] sm:$0xff]
        %v259 = vld [vmem:[%s173 + $0x20] sm:$0xff]
        %v260 = vld [vmem:[%s173 + $0x28] sm:$0xff]
        %v261 = vld [vmem:[%s173 + $0x30] sm:$0xff]
        %v262 = vld [vmem:[%s173 + $0x38] sm:$0xff]
        %v263 = vld [vmem:[%s173 + $0x40] sm:$0xff]
        %v264 = vld [vmem:[%s173 + $0x48] sm:$0xff]
        %v265 = vld [vmem:[%s173 + $0x50] sm:$0xff]
        %v266 = vld [vmem:[%s173 + $0x58] sm:$0xff]
        %v267 = vld [vmem:[%s173 + $0x60] sm:$0xff]
        %v268 = vld [vmem:[%s173 + $0x68] sm:$0xff]
        %v269 = vld [vmem:[%s173 + $0x70] sm:$0xff]
        %v270 = vld [vmem:[%s173 + $0x78] sm:$0xff]
        %v271 = vld [vmem:[%s173 + $0x80] sm:$0xff]
        %v272 = vld [vmem:[%s173 + $0x88] sm:$0xff]
        %v273 = vld [vmem:[%s173 + $0x90] sm:$0xff]
        %v274 = vld [vmem:[%s173 + $0x98] sm:$0xff]
        %v275 = vld [vmem:[%s173 + $0xa0] sm:$0xff]
        %v276 = vld [vmem:[%s173 + $0xa8] sm:$0xff]
        %v277 = vld [vmem:[%s173 + $0xb0] sm:$0xff]
        %v278 = vld [vmem:[%s173 + $0xb8] sm:$0xff]
        %v279 = vld [vmem:[%s173 + $0xc0] sm:$0xff]
        %v280 = vld [vmem:[%s173 + $0xc8] sm:$0xff]
        %v281 = vld [vmem:[%s173 + $0xd0] sm:$0xff]
        %v282 = vld [vmem:[%s173 + $0xd8] sm:$0xff]
        %v283 = vld [vmem:[%s173 + $0xe0] sm:$0xff]
        %v284 = vld [vmem:[%s173 + $0xe8] sm:$0xff]
        %v285 = vld [vmem:[%s173 + $0xf0] sm:$0xff]
        %v286 = vld [vmem:[%s173 + $0xf8] sm:$0xff]
        %v287 = vpack.c.bf16 %v256, %v255
        %v288 = vpack.c.bf16 %v258, %v257
        %v289 = vpack.c.bf16 %v260, %v259
        %v290 = vpack.c.bf16 %v262, %v261
        %v291 = vpack.c.bf16 %v264, %v263
        %v292 = vpack.c.bf16 %v266, %v265
        %v293 = vpack.c.bf16 %v268, %v267
        %v294 = vpack.c.bf16 %v270, %v269
        %v295 = vpack.c.bf16 %v272, %v271
        %v296 = vpack.c.bf16 %v274, %v273
        %v297 = vpack.c.bf16 %v276, %v275
        %v298 = vpack.c.bf16 %v278, %v277
        %v299 = vpack.c.bf16 %v280, %v279
        %v300 = vpack.c.bf16 %v282, %v281
        %v301 = vpack.c.bf16 %v284, %v283
        %v302 = vpack.c.bf16 %v286, %v285
        %v319 = vunpack.c.l.b16 %v287
        %v320 = vunpack.c.h.b16 %v287
        %v321 = vunpack.c.l.b16 %v288
        %v322 = vunpack.c.h.b16 %v288
        %v323 = vunpack.c.l.b16 %v289
        %v324 = vunpack.c.h.b16 %v289
        %v325 = vunpack.c.l.b16 %v290
        %v326 = vunpack.c.h.b16 %v290
        %v327 = vunpack.c.l.b16 %v291
        %v328 = vunpack.c.h.b16 %v291
        %v329 = vunpack.c.l.b16 %v292
        %v330 = vunpack.c.h.b16 %v292
        %v331 = vunpack.c.l.b16 %v293
        %v332 = vunpack.c.h.b16 %v293
        %v333 = vunpack.c.l.b16 %v294
        %v334 = vunpack.c.h.b16 %v294
        %v335 = vunpack.c.l.b16 %v295
        %v336 = vunpack.c.h.b16 %v295
        %v337 = vunpack.c.l.b16 %v296
        %v338 = vunpack.c.h.b16 %v296
        %v339 = vunpack.c.l.b16 %v297
        %v340 = vunpack.c.h.b16 %v297
        %v341 = vunpack.c.l.b16 %v298
        %v342 = vunpack.c.h.b16 %v298
        %v343 = vunpack.c.l.b16 %v299
        %v344 = vunpack.c.h.b16 %v299
        %v345 = vunpack.c.l.b16 %v300
        %v346 = vunpack.c.h.b16 %v300
        %v347 = vunpack.c.l.b16 %v301
        %v348 = vunpack.c.h.b16 %v301
        %v349 = vunpack.c.l.b16 %v302
        %v350 = vunpack.c.h.b16 %v302
        %v351 = vpack.c.b16 %v319, %v319
        %v352 = vpack.c.b16 %v320, %v320
        %v353 = vpack.c.b16 %v321, %v321
        %v354 = vpack.c.b16 %v322, %v322
        %v355 = vpack.c.b16 %v323, %v323
        %v356 = vpack.c.b16 %v324, %v324
        %v357 = vpack.c.b16 %v325, %v325
        %v358 = vpack.c.b16 %v326, %v326
        %v359 = vpack.c.b16 %v327, %v327
        %v360 = vpack.c.b16 %v328, %v328
        %v361 = vpack.c.b16 %v329, %v329
        %v362 = vpack.c.b16 %v330, %v330
        %v363 = vpack.c.b16 %v331, %v331
        %v364 = vpack.c.b16 %v332, %v332
        %v365 = vpack.c.b16 %v333, %v333
        %v366 = vpack.c.b16 %v334, %v334
        %v367 = vpack.c.b16 %v335, %v335
        %v368 = vpack.c.b16 %v336, %v336
        %v369 = vpack.c.b16 %v337, %v337
        %v370 = vpack.c.b16 %v338, %v338
        %v371 = vpack.c.b16 %v339, %v339
        %v372 = vpack.c.b16 %v340, %v340
        %v373 = vpack.c.b16 %v341, %v341
        %v374 = vpack.c.b16 %v342, %v342
        %v375 = vpack.c.b16 %v343, %v343
        %v376 = vpack.c.b16 %v344, %v344
        %v377 = vpack.c.b16 %v345, %v345
        %v378 = vpack.c.b16 %v346, %v346
        %v379 = vpack.c.b16 %v347, %v347
        %v380 = vpack.c.b16 %v348, %v348
        %v381 = vpack.c.b16 %v349, %v349
        %v382 = vpack.c.b16 %v350, %v350
        %vm383 = vsmask.f32 256
        %vm384 = vsmask.f32 4368
        %vm385 = vmor %vm383, %vm384
        %v387 = vshrl.u32 %v351, 16
        %v389 = vrot.slane %v387, 7
        %v390 = vshll.u32 %v351, 16
        %v392 = vor.u32 %v389, %v390
        %v393 = vrot.slane %v389, 4
        %v395 = vshrl.u32 %v352, 16
        %v397 = vrot.slane %v395, 7
        %v398 = vshll.u32 %v352, 16
        %v400 = vor.u32 %v397, %v398
        %v401 = vsel %vm385, %v393, %v400
        %v402 = vrot.slane %v397, 4
        %v404 = vshrl.u32 %v353, 16
        %v406 = vrot.slane %v404, 7
        %v407 = vshll.u32 %v353, 16
        %v409 = vor.u32 %v406, %v407
        %v410 = vrot.slane %v406, 4
        %v412 = vshrl.u32 %v354, 16
        %v414 = vrot.slane %v412, 7
        %v415 = vshll.u32 %v354, 16
        %v417 = vor.u32 %v414, %v415
        %v418 = vsel %vm385, %v410, %v417
        %v419 = vrot.slane %v414, 4
        %v421 = vshrl.u32 %v355, 16
        %v423 = vrot.slane %v421, 7
        %v424 = vshll.u32 %v355, 16
        %v426 = vor.u32 %v423, %v424
        %v427 = vrot.slane %v423, 4
        %v429 = vshrl.u32 %v356, 16
        %v431 = vrot.slane %v429, 7
        %v432 = vshll.u32 %v356, 16
        %v434 = vor.u32 %v431, %v432
        %v435 = vsel %vm385, %v427, %v434
        %v436 = vrot.slane %v431, 4
        %v438 = vshrl.u32 %v357, 16
        %v440 = vrot.slane %v438, 7
        %v441 = vshll.u32 %v357, 16
        %v443 = vor.u32 %v440, %v441
        %v444 = vrot.slane %v440, 4
        %v446 = vshrl.u32 %v358, 16
        %v448 = vrot.slane %v446, 7
        %v449 = vshll.u32 %v358, 16
        %v451 = vor.u32 %v448, %v449
        %v452 = vsel %vm385, %v444, %v451
        %v453 = vrot.slane %v448, 4
        %v455 = vshrl.u32 %v359, 16
        %v457 = vrot.slane %v455, 7
        %v458 = vshll.u32 %v359, 16
        %v460 = vor.u32 %v457, %v458
        %v461 = vrot.slane %v457, 4
        %v463 = vshrl.u32 %v360, 16
        %v465 = vrot.slane %v463, 7
        %v466 = vshll.u32 %v360, 16
        %v468 = vor.u32 %v465, %v466
        %v469 = vsel %vm385, %v461, %v468
        %v470 = vrot.slane %v465, 4
        %v472 = vshrl.u32 %v361, 16
        %v474 = vrot.slane %v472, 7
        %v475 = vshll.u32 %v361, 16
        %v477 = vor.u32 %v474, %v475
        %v478 = vrot.slane %v474, 4
        %v480 = vshrl.u32 %v362, 16
        %v482 = vrot.slane %v480, 7
        %v483 = vshll.u32 %v362, 16
        %v485 = vor.u32 %v482, %v483
        %v486 = vsel %vm385, %v478, %v485
        %v487 = vrot.slane %v482, 4
        %v489 = vshrl.u32 %v363, 16
        %v491 = vrot.slane %v489, 7
        %v492 = vshll.u32 %v363, 16
        %v494 = vor.u32 %v491, %v492
        %v495 = vrot.slane %v491, 4
        %v497 = vshrl.u32 %v364, 16
        %v499 = vrot.slane %v497, 7
        %v500 = vshll.u32 %v364, 16
        %v502 = vor.u32 %v499, %v500
        %v503 = vsel %vm385, %v495, %v502
        %v504 = vrot.slane %v499, 4
        %v506 = vshrl.u32 %v365, 16
        %v508 = vrot.slane %v506, 7
        %v509 = vshll.u32 %v365, 16
        %v511 = vor.u32 %v508, %v509
        %v512 = vrot.slane %v508, 4
        %v514 = vshrl.u32 %v366, 16
        %v516 = vrot.slane %v514, 7
        %v517 = vshll.u32 %v366, 16
        %v519 = vor.u32 %v516, %v517
        %v520 = vsel %vm385, %v512, %v519
        %v521 = vrot.slane %v516, 4
        %v523 = vshrl.u32 %v367, 16
        %v525 = vrot.slane %v523, 7
        %v526 = vshll.u32 %v367, 16
        %v528 = vor.u32 %v525, %v526
        %v529 = vrot.slane %v525, 4
        %v531 = vshrl.u32 %v368, 16
        %v533 = vrot.slane %v531, 7
        %v534 = vshll.u32 %v368, 16
        %v536 = vor.u32 %v533, %v534
        %v537 = vsel %vm385, %v529, %v536
        %v538 = vrot.slane %v533, 4
        %v540 = vshrl.u32 %v369, 16
        %v542 = vrot.slane %v540, 7
        %v543 = vshll.u32 %v369, 16
        %v545 = vor.u32 %v542, %v543
        %v546 = vrot.slane %v542, 4
        %v548 = vshrl.u32 %v370, 16
        %v550 = vrot.slane %v548, 7
        %v551 = vshll.u32 %v370, 16
        %v553 = vor.u32 %v550, %v551
        %v554 = vsel %vm385, %v546, %v553
        %v555 = vrot.slane %v550, 4
        %v557 = vshrl.u32 %v371, 16
        %v559 = vrot.slane %v557, 7
        %v560 = vshll.u32 %v371, 16
        %v562 = vor.u32 %v559, %v560
        %v563 = vrot.slane %v559, 4
        %v565 = vshrl.u32 %v372, 16
        %v567 = vrot.slane %v565, 7
        %v568 = vshll.u32 %v372, 16
        %v570 = vor.u32 %v567, %v568
        %v571 = vsel %vm385, %v563, %v570
        %v572 = vrot.slane %v567, 4
        %v574 = vshrl.u32 %v373, 16
        %v576 = vrot.slane %v574, 7
        %v577 = vshll.u32 %v373, 16
        %v579 = vor.u32 %v576, %v577
        %v580 = vrot.slane %v576, 4
        %v582 = vshrl.u32 %v374, 16
        %v584 = vrot.slane %v582, 7
        %v585 = vshll.u32 %v374, 16
        %v587 = vor.u32 %v584, %v585
        %v588 = vsel %vm385, %v580, %v587
        %v589 = vrot.slane %v584, 4
        %v591 = vshrl.u32 %v375, 16
        %v593 = vrot.slane %v591, 7
        %v594 = vshll.u32 %v375, 16
        %v596 = vor.u32 %v593, %v594
        %v597 = vrot.slane %v593, 4
        %v599 = vshrl.u32 %v376, 16
        %v601 = vrot.slane %v599, 7
        %v602 = vshll.u32 %v376, 16
        %v604 = vor.u32 %v601, %v602
        %v605 = vsel %vm385, %v597, %v604
        %v606 = vrot.slane %v601, 4
        %v608 = vshrl.u32 %v377, 16
        %v610 = vrot.slane %v608, 7
        %v611 = vshll.u32 %v377, 16
        %v613 = vor.u32 %v610, %v611
        %v614 = vrot.slane %v610, 4
        %v616 = vshrl.u32 %v378, 16
        %v618 = vrot.slane %v616, 7
        %v619 = vshll.u32 %v378, 16
        %v621 = vor.u32 %v618, %v619
        %v622 = vsel %vm385, %v614, %v621
        %v623 = vrot.slane %v618, 4
        %v625 = vshrl.u32 %v379, 16
        %v627 = vrot.slane %v625, 7
        %v628 = vshll.u32 %v379, 16
        %v630 = vor.u32 %v627, %v628
        %v631 = vrot.slane %v627, 4
        %v633 = vshrl.u32 %v380, 16
        %v635 = vrot.slane %v633, 7
        %v636 = vshll.u32 %v380, 16
        %v638 = vor.u32 %v635, %v636
        %v639 = vsel %vm385, %v631, %v638
        %v640 = vrot.slane %v635, 4
        %v642 = vshrl.u32 %v381, 16
        %v644 = vrot.slane %v642, 7
        %v645 = vshll.u32 %v381, 16
        %v647 = vor.u32 %v644, %v645
        %v648 = vrot.slane %v644, 4
        %v650 = vshrl.u32 %v382, 16
        %v652 = vrot.slane %v650, 7
        %v653 = vshll.u32 %v382, 16
        %v655 = vor.u32 %v652, %v653
        %v656 = vsel %vm385, %v648, %v655
        %v657 = vrot.slane %v652, 4
        %s706 = scalar_lea.vmem [#allocation2], 12
        %vm707 = vcmask 257024
        %vm708 = vsmask.f32 7938
        %vm709 = vmand %vm707, %vm708
        %v710 = vld [vmem:[%s706] sm:$0xf]
        %v711 = vsel %vm709, %v392, %v710
        %712 = vst [vmem:[%s706] sm:$0xf] %v711
        %713 = vst.msk [vmem:[%s706 + $0x4] sm:$0xf] %vm199, %v401
        %vm714 = vcmask 253952
        %vm715 = vmand %vm714, %vm383
        %v716 = vld [vmem:[%s706 + $0x8] sm:$0x1]
        %v717 = vsel %vm715, %v402, %v716
        %718 = vst [vmem:[%s706 + $0x8] sm:$0x1] %v717
        %v719 = vld [vmem:[%s706 + $0xc] sm:$0xf]
        %v720 = vsel %vm709, %v409, %v719
        %721 = vst [vmem:[%s706 + $0xc] sm:$0xf] %v720
        %722 = vst.msk [vmem:[%s706 + $0x10] sm:$0xf] %vm199, %v418
        %v723 = vld [vmem:[%s706 + $0x14] sm:$0x1]
        %v724 = vsel %vm715, %v419, %v723
        %725 = vst [vmem:[%s706 + $0x14] sm:$0x1] %v724
        %v726 = vld [vmem:[%s706 + $0x18] sm:$0xf]
        %v727 = vsel %vm709, %v426, %v726
        %728 = vst [vmem:[%s706 + $0x18] sm:$0xf] %v727
        %729 = vst.msk [vmem:[%s706 + $0x1c] sm:$0xf] %vm199, %v435
        %v730 = vld [vmem:[%s706 + $0x20] sm:$0x1]
        %v731 = vsel %vm715, %v436, %v730
        %732 = vst [vmem:[%s706 + $0x20] sm:$0x1] %v731
        %v733 = vld [vmem:[%s706 + $0x24] sm:$0xf]
        %v734 = vsel %vm709, %v443, %v733
        %735 = vst [vmem:[%s706 + $0x24] sm:$0xf] %v734
        %736 = vst.msk [vmem:[%s706 + $0x28] sm:$0xf] %vm199, %v452
        %v737 = vld [vmem:[%s706 + $0x2c] sm:$0x1]
        %v738 = vsel %vm715, %v453, %v737
        %739 = vst [vmem:[%s706 + $0x2c] sm:$0x1] %v738
        %v740 = vld [vmem:[%s706 + $0x30] sm:$0xf]
        %v741 = vsel %vm709, %v460, %v740
        %742 = vst [vmem:[%s706 + $0x30] sm:$0xf] %v741
        %743 = vst.msk [vmem:[%s706 + $0x34] sm:$0xf] %vm199, %v469
        %v744 = vld [vmem:[%s706 + $0x38] sm:$0x1]
        %v745 = vsel %vm715, %v470, %v744
        %746 = vst [vmem:[%s706 + $0x38] sm:$0x1] %v745
        %v747 = vld [vmem:[%s706 + $0x3c] sm:$0xf]
        %v748 = vsel %vm709, %v477, %v747
        %749 = vst [vmem:[%s706 + $0x3c] sm:$0xf] %v748
        %750 = vst.msk [vmem:[%s706 + $0x40] sm:$0xf] %vm199, %v486
        %v751 = vld [vmem:[%s706 + $0x44] sm:$0x1]
        %v752 = vsel %vm715, %v487, %v751
        %753 = vst [vmem:[%s706 + $0x44] sm:$0x1] %v752
        %v754 = vld [vmem:[%s706 + $0x48] sm:$0xf]
        %v755 = vsel %vm709, %v494, %v754
        %756 = vst [vmem:[%s706 + $0x48] sm:$0xf] %v755
        %757 = vst.msk [vmem:[%s706 + $0x4c] sm:$0xf] %vm199, %v503
        %v758 = vld [vmem:[%s706 + $0x50] sm:$0x1]
        %v759 = vsel %vm715, %v504, %v758
        %760 = vst [vmem:[%s706 + $0x50] sm:$0x1] %v759
        %v761 = vld [vmem:[%s706 + $0x54] sm:$0xf]
        %v762 = vsel %vm709, %v511, %v761
        %763 = vst [vmem:[%s706 + $0x54] sm:$0xf] %v762
        %764 = vst.msk [vmem:[%s706 + $0x58] sm:$0xf] %vm199, %v520
        %v765 = vld [vmem:[%s706 + $0x5c] sm:$0x1]
        %v766 = vsel %vm715, %v521, %v765
        %767 = vst [vmem:[%s706 + $0x5c] sm:$0x1] %v766
        %v768 = vld [vmem:[%s706 + $0x60] sm:$0xf]
        %v769 = vsel %vm709, %v528, %v768
        %770 = vst [vmem:[%s706 + $0x60] sm:$0xf] %v769
        %771 = vst.msk [vmem:[%s706 + $0x64] sm:$0xf] %vm199, %v537
        %v772 = vld [vmem:[%s706 + $0x68] sm:$0x1]
        %v773 = vsel %vm715, %v538, %v772
        %774 = vst [vmem:[%s706 + $0x68] sm:$0x1] %v773
        %v775 = vld [vmem:[%s706 + $0x6c] sm:$0xf]
        %v776 = vsel %vm709, %v545, %v775
        %777 = vst [vmem:[%s706 + $0x6c] sm:$0xf] %v776
        %778 = vst.msk [vmem:[%s706 + $0x70] sm:$0xf] %vm199, %v554
        %v779 = vld [vmem:[%s706 + $0x74] sm:$0x1]
        %v780 = vsel %vm715, %v555, %v779
        %781 = vst [vmem:[%s706 + $0x74] sm:$0x1] %v780
        %v782 = vld [vmem:[%s706 + $0x78] sm:$0xf]
        %v783 = vsel %vm709, %v562, %v782
        %784 = vst [vmem:[%s706 + $0x78] sm:$0xf] %v783
        %785 = vst.msk [vmem:[%s706 + $0x7c] sm:$0xf] %vm199, %v571
        %v786 = vld [vmem:[%s706 + $0x80] sm:$0x1]
        %v787 = vsel %vm715, %v572, %v786
        %788 = vst [vmem:[%s706 + $0x80] sm:$0x1] %v787
        %v789 = vld [vmem:[%s706 + $0x84] sm:$0xf]
        %v790 = vsel %vm709, %v579, %v789
        %791 = vst [vmem:[%s706 + $0x84] sm:$0xf] %v790
        %792 = vst.msk [vmem:[%s706 + $0x88] sm:$0xf] %vm199, %v588
        %v793 = vld [vmem:[%s706 + $0x8c] sm:$0x1]
        %v794 = vsel %vm715, %v589, %v793
        %795 = vst [vmem:[%s706 + $0x8c] sm:$0x1] %v794
        %v796 = vld [vmem:[%s706 + $0x90] sm:$0xf]
        %v797 = vsel %vm709, %v596, %v796
        %798 = vst [vmem:[%s706 + $0x90] sm:$0xf] %v797
        %799 = vst.msk [vmem:[%s706 + $0x94] sm:$0xf] %vm199, %v605
        %v800 = vld [vmem:[%s706 + $0x98] sm:$0x1]
        %v801 = vsel %vm715, %v606, %v800
        %802 = vst [vmem:[%s706 + $0x98] sm:$0x1] %v801
        %v803 = vld [vmem:[%s706 + $0x9c] sm:$0xf]
        %v804 = vsel %vm709, %v613, %v803
        %805 = vst [vmem:[%s706 + $0x9c] sm:$0xf] %v804
        %806 = vst.msk [vmem:[%s706 + $0xa0] sm:$0xf] %vm199, %v622
        %v807 = vld [vmem:[%s706 + $0xa4] sm:$0x1]
        %v808 = vsel %vm715, %v623, %v807
        %809 = vst [vmem:[%s706 + $0xa4] sm:$0x1] %v808
        %v810 = vld [vmem:[%s706 + $0xa8] sm:$0xf]
        %v811 = vsel %vm709, %v630, %v810
        %812 = vst [vmem:[%s706 + $0xa8] sm:$0xf] %v811
        %813 = vst.msk [vmem:[%s706 + $0xac] sm:$0xf] %vm199, %v639
        %v814 = vld [vmem:[%s706 + $0xb0] sm:$0x1]
        %v815 = vsel %vm715, %v640, %v814
        %816 = vst [vmem:[%s706 + $0xb0] sm:$0x1] %v815
        %v817 = vld [vmem:[%s706 + $0xb4] sm:$0xf]
        %v818 = vsel %vm709, %v647, %v817
        %819 = vst [vmem:[%s706 + $0xb4] sm:$0xf] %v818
        %820 = vst.msk [vmem:[%s706 + $0xb8] sm:$0xf] %vm199, %v656
        %v821 = vld [vmem:[%s706 + $0xbc] sm:$0x1]
        %v822 = vsel %vm715, %v657, %v821
        %823 = vst [vmem:[%s706 + $0xbc] sm:$0x1] %v822
        %s824 = smul.u32 0, 3
        %s825 = smul.addr %s824, 4
        %s826 = scalar_lea.vmem [#allocation2], %s825
        %v827 = vld [vmem:[%s826] sm:$0xf]
        %v828 = vld [vmem:[%s826 + $0x4] sm:$0xf]
        %v829 = vld [vmem:[%s826 + $0xc] sm:$0xf]
        %v830 = vld [vmem:[%s826 + $0x10] sm:$0xf]
        %v831 = vld [vmem:[%s826 + $0x18] sm:$0xf]
        %v832 = vld [vmem:[%s826 + $0x1c] sm:$0xf]
        %v833 = vld [vmem:[%s826 + $0x24] sm:$0xf]
        %v834 = vld [vmem:[%s826 + $0x28] sm:$0xf]
        %v835 = vld [vmem:[%s826 + $0x30] sm:$0xf]
        %v836 = vld [vmem:[%s826 + $0x34] sm:$0xf]
        %v837 = vld [vmem:[%s826 + $0x3c] sm:$0xf]
        %v838 = vld [vmem:[%s826 + $0x40] sm:$0xf]
        %v839 = vld [vmem:[%s826 + $0x48] sm:$0xf]
        %v840 = vld [vmem:[%s826 + $0x4c] sm:$0xf]
        %v841 = vld [vmem:[%s826 + $0x54] sm:$0xf]
        %v842 = vld [vmem:[%s826 + $0x58] sm:$0xf]
        %v843 = vld [vmem:[#allocation6] sm:$0xf]
        %v844 = vld [vmem:[#allocation6 + $0x4] sm:$0xf]
        %v845 = vld [vmem:[#allocation6 + $0x8] sm:$0xf]
        %v846 = vld [vmem:[#allocation6 + $0xc] sm:$0xf]
        %v847 = vld [vmem:[%s826 + $0x8] sm:$0x1]
        %v848 = vld [vmem:[%s826 + $0x14] sm:$0x1]
        %v849 = vld [vmem:[%s826 + $0x20] sm:$0x1]
        %v850 = vld [vmem:[%s826 + $0x2c] sm:$0x1]
        %v851 = vld [vmem:[%s826 + $0x38] sm:$0x1]
        %v852 = vld [vmem:[%s826 + $0x44] sm:$0x1]
        %v853 = vld [vmem:[%s826 + $0x50] sm:$0x1]
        %v854 = vld [vmem:[%s826 + $0x5c] sm:$0x1]
        %vm855 = vsmask.f32 3328
        %vm856 = vsmask.f32 7440
        %vm857 = vmor %vm855, %vm856
        %v859 = vshrl.u32 %v827, 16
        %v861 = vrot.slane %v859, 4
        %v862 = vshll.u32 %v827, 16
        %v864 = vrot.slane %v862, 5
        %v865 = vor.u32 %v861, %v864
        %v866 = vrot.slane %v865, 4
        %v868 = vshll.u32 %v828, 16
        %v870 = vrot.slane %v868, 5
        %v871 = vsel %vm857, %v866, %v870
        %v872 = vshrl.u32 %v828, 16
        %v874 = vrot.slane %v872, 4
        %v875 = vor.u32 %v874, %v870
        %v876 = vrot.slane %v875, 4
        %v878 = vshll.u32 %v847, 16
        %v880 = vrot.slane %v878, 5
        %v881 = vsel %vm857, %v876, %v880
        %v883 = vshrl.u32 %v829, 16
        %v885 = vrot.slane %v883, 4
        %v886 = vshll.u32 %v829, 16
        %v888 = vrot.slane %v886, 5
        %v889 = vor.u32 %v885, %v888
        %v890 = vrot.slane %v889, 4
        %v892 = vshll.u32 %v830, 16
        %v894 = vrot.slane %v892, 5
        %v895 = vsel %vm857, %v890, %v894
        %v896 = vshrl.u32 %v830, 16
        %v898 = vrot.slane %v896, 4
        %v899 = vor.u32 %v898, %v894
        %v900 = vrot.slane %v899, 4
        %v902 = vshll.u32 %v848, 16
        %v904 = vrot.slane %v902, 5
        %v905 = vsel %vm857, %v900, %v904
        %v907 = vshrl.u32 %v831, 16
        %v909 = vrot.slane %v907, 4
        %v910 = vshll.u32 %v831, 16
        %v912 = vrot.slane %v910, 5
        %v913 = vor.u32 %v909, %v912
        %v914 = vrot.slane %v913, 4
        %v916 = vshll.u32 %v832, 16
        %v918 = vrot.slane %v916, 5
        %v919 = vsel %vm857, %v914, %v918
        %v920 = vshrl.u32 %v832, 16
        %v922 = vrot.slane %v920, 4
        %v923 = vor.u32 %v922, %v918
        %v924 = vrot.slane %v923, 4
        %v926 = vshll.u32 %v849, 16
        %v928 = vrot.slane %v926, 5
        %v929 = vsel %vm857, %v924, %v928
        %v931 = vshrl.u32 %v833, 16
        %v933 = vrot.slane %v931, 4
        %v934 = vshll.u32 %v833, 16
        %v936 = vrot.slane %v934, 5
        %v937 = vor.u32 %v933, %v936
        %v938 = vrot.slane %v937, 4
        %v940 = vshll.u32 %v834, 16
        %v942 = vrot.slane %v940, 5
        %v943 = vsel %vm857, %v938, %v942
        %v944 = vshrl.u32 %v834, 16
        %v946 = vrot.slane %v944, 4
        %v947 = vor.u32 %v946, %v942
        %v948 = vrot.slane %v947, 4
        %v950 = vshll.u32 %v850, 16
        %v952 = vrot.slane %v950, 5
        %v953 = vsel %vm857, %v948, %v952
        %v955 = vshrl.u32 %v835, 16
        %v957 = vrot.slane %v955, 4
        %v958 = vshll.u32 %v835, 16
        %v960 = vrot.slane %v958, 5
        %v961 = vor.u32 %v957, %v960
        %v962 = vrot.slane %v961, 4
        %v964 = vshll.u32 %v836, 16
        %v966 = vrot.slane %v964, 5
        %v967 = vsel %vm857, %v962, %v966
        %v968 = vshrl.u32 %v836, 16
        %v970 = vrot.slane %v968, 4
        %v971 = vor.u32 %v970, %v966
        %v972 = vrot.slane %v971, 4
        %v974 = vshll.u32 %v851, 16
        %v976 = vrot.slane %v974, 5
        %v977 = vsel %vm857, %v972, %v976
        %v979 = vshrl.u32 %v837, 16
        %v981 = vrot.slane %v979, 4
        %v982 = vshll.u32 %v837, 16
        %v984 = vrot.slane %v982, 5
        %v985 = vor.u32 %v981, %v984
        %v986 = vrot.slane %v985, 4
        %v988 = vshll.u32 %v838, 16
        %v990 = vrot.slane %v988, 5
        %v991 = vsel %vm857, %v986, %v990
        %v992 = vshrl.u32 %v838, 16
        %v994 = vrot.slane %v992, 4
        %v995 = vor.u32 %v994, %v990
        %v996 = vrot.slane %v995, 4
        %v998 = vshll.u32 %v852, 16
        %v1000 = vrot.slane %v998, 5
        %v1001 = vsel %vm857, %v996, %v1000
        %v1003 = vshrl.u32 %v839, 16
        %v1005 = vrot.slane %v1003, 4
        %v1006 = vshll.u32 %v839, 16
        %v1008 = vrot.slane %v1006, 5
        %v1009 = vor.u32 %v1005, %v1008
        %v1010 = vrot.slane %v1009, 4
        %v1012 = vshll.u32 %v840, 16
        %v1014 = vrot.slane %v1012, 5
        %v1015 = vsel %vm857, %v1010, %v1014
        %v1016 = vshrl.u32 %v840, 16
        %v1018 = vrot.slane %v1016, 4
        %v1019 = vor.u32 %v1018, %v1014
        %v1020 = vrot.slane %v1019, 4
        %v1022 = vshll.u32 %v853, 16
        %v1024 = vrot.slane %v1022, 5
        %v1025 = vsel %vm857, %v1020, %v1024
        %v1027 = vshrl.u32 %v841, 16
        %v1029 = vrot.slane %v1027, 4
        %v1030 = vshll.u32 %v841, 16
        %v1032 = vrot.slane %v1030, 5
        %v1033 = vor.u32 %v1029, %v1032
        %v1034 = vrot.slane %v1033, 4
        %v1036 = vshll.u32 %v842, 16
        %v1038 = vrot.slane %v1036, 5
        %v1039 = vsel %vm857, %v1034, %v1038
        %v1040 = vshrl.u32 %v842, 16
        %v1042 = vrot.slane %v1040, 4
        %v1043 = vor.u32 %v1042, %v1038
        %v1044 = vrot.slane %v1043, 4
        %v1046 = vshll.u32 %v854, 16
        %v1048 = vrot.slane %v1046, 5
        %v1049 = vsel %vm857, %v1044, %v1048
        %s1050 = scalar_lea.vmem [#allocation6], 16
        %v1051 = vld [vmem:[%s1050] sm:$0xf]
        %v1052 = vld [vmem:[%s1050 + $0x4] sm:$0xf]
        %v1053 = vld [vmem:[%s1050 + $0x8] sm:$0xf]
        %v1054 = vld [vmem:[%s1050 + $0xc] sm:$0xf]
        %v1055 = vunpack.c.l.b16 %v871
        %v1056 = vunpack.c.l.b16 %v881
        %v1057 = vunpack.c.l.b16 %v895
        %v1058 = vunpack.c.l.b16 %v905
        %v1059 = vunpack.c.l.b16 %v919
        %v1060 = vunpack.c.l.b16 %v929
        %v1061 = vunpack.c.l.b16 %v943
        %v1062 = vunpack.c.l.b16 %v953
        %v1063 = vunpack.c.l.b16 %v967
        %v1064 = vunpack.c.l.b16 %v977
        %v1065 = vunpack.c.l.b16 %v991
        %v1066 = vunpack.c.l.b16 %v1001
        %v1067 = vunpack.c.l.b16 %v1015
        %v1068 = vunpack.c.l.b16 %v1025
        %v1069 = vunpack.c.l.b16 %v1039
        %v1070 = vunpack.c.l.b16 %v1049
        %v1071 = vpack.c.b16 %v1056, %v1055
        %v1072 = vpack.c.b16 %v1058, %v1057
        %v1073 = vpack.c.b16 %v1060, %v1059
        %v1074 = vpack.c.b16 %v1062, %v1061
        %v1075 = vpack.c.b16 %v1064, %v1063
        %v1076 = vpack.c.b16 %v1066, %v1065
        %v1077 = vpack.c.b16 %v1068, %v1067
        %v1078 = vpack.c.b16 %v1070, %v1069
        %v1083 = vunpack.c.l.b16 %v1051
        %v1084 = vunpack.c.l.b16 %v1052
        %v1085 = vunpack.c.l.b16 %v1053
        %v1086 = vunpack.c.l.b16 %v1054
        %v1087 = vpack.c.b16 %v1084, %v1083
        %v1088 = vpack.c.b16 %v1086, %v1085
        %vm1091 = vcmask 261120
        %v1093 = vsel %vm1091, %v1071, 0
        %v1096 = vsel %vm1091, %v1072, 0
        %v1099 = vsel %vm1091, %v1073, 0
        %v1102 = vsel %vm1091, %v1074, 0
        %v1105 = vsel %vm1091, %v1075, 0
        %v1108 = vsel %vm1091, %v1076, 0
        %v1111 = vsel %vm1091, %v1077, 0
        %v1114 = vsel %vm1091, %v1078, 0
        %1116 = vmatprep.subr.bf16.mxu0 0
        %1117 = vmatpush1.bf16.msra.mxu0 %v1087
        %1118 = vmatprep.subr.bf16.mxu0 0
        %1119 = vmatpush1.bf16.msra.mxu0 %v1088
        %1120 = vmatprep.subr.bf16.mxu0 0
        %1121 = vmatpush1.bf16.msra.mxu0 0
        %1122 = vmatprep.subr.bf16.mxu0 0
        %1123 = vmatpush1.bf16.msra.mxu0 0
        %1124 = vmatprep.subr.bf16.mxu0 0
        %1125 = vmatpush1.bf16.msra.mxu0 0
        %1126 = vmatprep.subr.bf16.mxu0 0
        %1127 = vmatpush1.bf16.msra.mxu0 0
        %1128 = vmatprep.subr.bf16.mxu0 0
        %1129 = vmatpush1.bf16.msra.mxu0 0
        %1130 = vmatprep.subr.bf16.mxu0 0
        %1131 = vmatpush1.bf16.msra.mxu0 0
        %1132 = vmatprep.subr.bf16.mxu0 0
        %1133 = vmatpush1.bf16.msra.mxu0 0
        %1134 = vmatprep.subr.bf16.mxu0 0
        %1135 = vmatpush1.bf16.msra.mxu0 0
        %1136 = vmatprep.subr.bf16.mxu0 0
        %1137 = vmatpush1.bf16.msra.mxu0 0
        %1138 = vmatprep.subr.bf16.mxu0 0
        %1139 = vmatpush1.bf16.msra.mxu0 0
        %1140 = vmatprep.subr.bf16.mxu0 0
        %1141 = vmatpush1.bf16.msra.mxu0 0
        %1142 = vmatprep.subr.bf16.mxu0 0
        %1143 = vmatpush1.bf16.msra.mxu0 0
        %1144 = vmatprep.subr.bf16.mxu0 0
        %1145 = vmatpush1.bf16.msra.mxu0 0
        %1146 = vmatprep.subr.bf16.mxu0 0
        %1147 = vmatpush1.bf16.msra.mxu0 0
        %1148 = vmatprep.mubr.bf16.mxu0 0
        %1149 = vmatmul.mubr.bf16.gmra.mrb[0].mxu0 %v1093
        %v1150 = vpop.f32.mrb[0].mxu0
        %v1151 = vadd.f32 0.0, %v1150
        %v1152 = vpop.f32.mrb[0].mxu0
        %v1153 = vpop.f32.mrb[0].mxu0
        %v1154 = vadd.f32 0.0, %v1153
        %v1155 = vpop.f32.mrb[0].mxu0
        %1156 = vmatprep.mubr.bf16.mxu0 0
        %1157 = vmatmul.mubr.bf16.gmra.mrb[0].mxu0 %v1096
        %v1158 = vpop.f32.mrb[0].mxu0
        %v1159 = vadd.f32 0.0, %v1158
        %v1160 = vpop.f32.mrb[0].mxu0
        %v1161 = vpop.f32.mrb[0].mxu0
        %v1162 = vadd.f32 0.0, %v1161
        %v1163 = vpop.f32.mrb[0].mxu0
        %1164 = vmatprep.mubr.bf16.mxu0 0
        %1165 = vmatmul.mubr.bf16.gmra.mrb[0].mxu0 %v1099
        %v1166 = vpop.f32.mrb[0].mxu0
        %v1167 = vadd.f32 0.0, %v1166
        %v1168 = vpop.f32.mrb[0].mxu0
        %v1169 = vpop.f32.mrb[0].mxu0
        %v1170 = vadd.f32 0.0, %v1169
        %v1171 = vpop.f32.mrb[0].mxu0
        %1172 = vmatprep.mubr.bf16.mxu0 0
        %1173 = vmatmul.mubr.bf16.gmra.mrb[0].mxu0 %v1102
        %v1174 = vpop.f32.mrb[0].mxu0
        %v1175 = vadd.f32 0.0, %v1174
        %v1176 = vpop.f32.mrb[0].mxu0
        %v1177 = vpop.f32.mrb[0].mxu0
        %v1178 = vadd.f32 0.0, %v1177
        %v1179 = vpop.f32.mrb[0].mxu0
        %1180 = vmatprep.mubr.bf16.mxu0 0
        %1181 = vmatmul.mubr.bf16.gmra.mrb[0].mxu0 %v1105
        %v1182 = vpop.f32.mrb[0].mxu0
        %v1183 = vadd.f32 0.0, %v1182
        %v1184 = vpop.f32.mrb[0].mxu0
        %v1185 = vpop.f32.mrb[0].mxu0
        %v1186 = vadd.f32 0.0, %v1185
        %v1187 = vpop.f32.mrb[0].mxu0
        %1188 = vmatprep.mubr.bf16.mxu0 0
        %1189 = vmatmul.mubr.bf16.gmra.mrb[0].mxu0 %v1108
        %v1190 = vpop.f32.mrb[0].mxu0
        %v1191 = vadd.f32 0.0, %v1190
        %v1192 = vpop.f32.mrb[0].mxu0
        %v1193 = vpop.f32.mrb[0].mxu0
        %v1194 = vadd.f32 0.0, %v1193
        %v1195 = vpop.f32.mrb[0].mxu0
        %1196 = vmatprep.mubr.bf16.mxu0 0
        %1197 = vmatmul.mubr.bf16.gmra.mrb[0].mxu0 %v1111
        %v1198 = vpop.f32.mrb[0].mxu0
        %v1199 = vadd.f32 0.0, %v1198
        %v1200 = vpop.f32.mrb[0].mxu0
        %v1201 = vpop.f32.mrb[0].mxu0
        %v1202 = vadd.f32 0.0, %v1201
        %v1203 = vpop.f32.mrb[0].mxu0
        %1204 = vmatprep.mubr.bf16.mxu0 0
        %1205 = vmatmul.mubr.bf16.gmra.mrb[0].mxu0 %v1114
        %v1206 = vpop.f32.mrb[0].mxu0
        %v1207 = vadd.f32 0.0, %v1206
        %v1208 = vpop.f32.mrb[0].mxu0
        %v1209 = vpop.f32.mrb[0].mxu0
        %v1210 = vadd.f32 0.0, %v1209
        %v1211 = vpop.f32.mrb[0].mxu0
        %1212 = vdwg.mxu0
        %v1229 = vunpack.c.l.b16 %v827
        %v1230 = vunpack.c.l.b16 %v828
        %v1231 = vunpack.c.l.b16 %v829
        %v1232 = vunpack.c.l.b16 %v830
        %v1233 = vunpack.c.l.b16 %v831
        %v1234 = vunpack.c.l.b16 %v832
        %v1235 = vunpack.c.l.b16 %v833
        %v1236 = vunpack.c.l.b16 %v834
        %v1237 = vunpack.c.l.b16 %v835
        %v1238 = vunpack.c.l.b16 %v836
        %v1239 = vunpack.c.l.b16 %v837
        %v1240 = vunpack.c.l.b16 %v838
        %v1241 = vunpack.c.l.b16 %v839
        %v1242 = vunpack.c.l.b16 %v840
        %v1243 = vunpack.c.l.b16 %v841
        %v1244 = vunpack.c.l.b16 %v842
        %v1245 = vpack.c.b16 %v1230, %v1229
        %v1246 = vpack.c.b16 %v1232, %v1231
        %v1247 = vpack.c.b16 %v1234, %v1233
        %v1248 = vpack.c.b16 %v1236, %v1235
        %v1249 = vpack.c.b16 %v1238, %v1237
        %v1250 = vpack.c.b16 %v1240, %v1239
        %v1251 = vpack.c.b16 %v1242, %v1241
        %v1252 = vpack.c.b16 %v1244, %v1243
        %v1257 = vunpack.c.l.b16 %v843
        %v1258 = vunpack.c.l.b16 %v844
        %v1259 = vunpack.c.l.b16 %v845
        %v1260 = vunpack.c.l.b16 %v846
        %v1261 = vpack.c.b16 %v1258, %v1257
        %v1262 = vpack.c.b16 %v1260, %v1259
        %v1266 = vsel %vm1091, %v1245, 0
        %v1269 = vsel %vm1091, %v1246, 0
        %v1272 = vsel %vm1091, %v1247, 0
        %v1275 = vsel %vm1091, %v1248, 0
        %v1278 = vsel %vm1091, %v1249, 0
        %v1281 = vsel %vm1091, %v1250, 0
        %v1284 = vsel %vm1091, %v1251, 0
        %v1287 = vsel %vm1091, %v1252, 0
        %1289 = vmatprep.subr.bf16.mxu0 0
        %1290 = vmatpush1.bf16.msra.mxu0 %v1261
        %1291 = vmatprep.subr.bf16.mxu0 0
        %1292 = vmatpush1.bf16.msra.mxu0 %v1262
        %1293 = vmatprep.subr.bf16.mxu0 0
        %1294 = vmatpush1.bf16.msra.mxu0 0
        %1295 = vmatprep.subr.bf16.mxu0 0
        %1296 = vmatpush1.bf16.msra.mxu0 0
        %1297 = vmatprep.subr.bf16.mxu0 0
        %1298 = vmatpush1.bf16.msra.mxu0 0
        %1299 = vmatprep.subr.bf16.mxu0 0
        %1300 = vmatpush1.bf16.msra.mxu0 0
        %1301 = vmatprep.subr.bf16.mxu0 0
        %1302 = vmatpush1.bf16.msra.mxu0 0
        %1303 = vmatprep.subr.bf16.mxu0 0
        %1304 = vmatpush1.bf16.msra.mxu0 0
        %1305 = vmatprep.subr.bf16.mxu0 0
        %1306 = vmatpush1.bf16.msra.mxu0 0
        %1307 = vmatprep.subr.bf16.mxu0 0
        %1308 = vmatpush1.bf16.msra.mxu0 0
        %1309 = vmatprep.subr.bf16.mxu0 0
        %1310 = vmatpush1.bf16.msra.mxu0 0
        %1311 = vmatprep.subr.bf16.mxu0 0
        %1312 = vmatpush1.bf16.msra.mxu0 0
        %1313 = vmatprep.subr.bf16.mxu0 0
        %1314 = vmatpush1.bf16.msra.mxu0 0
        %1315 = vmatprep.subr.bf16.mxu0 0
        %1316 = vmatpush1.bf16.msra.mxu0 0
        %1317 = vmatprep.subr.bf16.mxu0 0
        %1318 = vmatpush1.bf16.msra.mxu0 0
        %1319 = vmatprep.subr.bf16.mxu0 0
        %1320 = vmatpush1.bf16.msra.mxu0 0
        %1321 = vmatprep.mubr.bf16.mxu0 0
        %1322 = vmatmul.mubr.bf16.gmra.mrb[0].mxu0 %v1266
        %v1323 = vpop.f32.mrb[0].mxu0
        %v1324 = vadd.f32 %v1151, %v1323
        %v1325 = vpop.f32.mrb[0].mxu0
        %v1326 = vpop.f32.mrb[0].mxu0
        %v1327 = vadd.f32 %v1154, %v1326
        %v1328 = vpop.f32.mrb[0].mxu0
        %1329 = vmatprep.mubr.bf16.mxu0 0
        %1330 = vmatmul.mubr.bf16.gmra.mrb[0].mxu0 %v1269
        %v1331 = vpop.f32.mrb[0].mxu0
        %v1332 = vadd.f32 %v1159, %v1331
        %v1333 = vpop.f32.mrb[0].mxu0
        %v1334 = vpop.f32.mrb[0].mxu0
        %v1335 = vadd.f32 %v1162, %v1334
        %v1336 = vpop.f32.mrb[0].mxu0
        %1337 = vmatprep.mubr.bf16.mxu0 0
        %1338 = vmatmul.mubr.bf16.gmra.mrb[0].mxu0 %v1272
        %v1339 = vpop.f32.mrb[0].mxu0
        %v1340 = vadd.f32 %v1167, %v1339
        %v1341 = vpop.f32.mrb[0].mxu0
        %v1342 = vpop.f32.mrb[0].mxu0
        %v1343 = vadd.f32 %v1170, %v1342
        %v1344 = vpop.f32.mrb[0].mxu0
        %1345 = vmatprep.mubr.bf16.mxu0 0
        %1346 = vmatmul.mubr.bf16.gmra.mrb[0].mxu0 %v1275
        %v1347 = vpop.f32.mrb[0].mxu0
        %v1348 = vadd.f32 %v1175, %v1347
        %v1349 = vpop.f32.mrb[0].mxu0
        %v1350 = vpop.f32.mrb[0].mxu0
        %v1351 = vadd.f32 %v1178, %v1350
        %v1352 = vpop.f32.mrb[0].mxu0
        %1353 = vmatprep.mubr.bf16.mxu0 0
        %1354 = vmatmul.mubr.bf16.gmra.mrb[0].mxu0 %v1278
        %v1355 = vpop.f32.mrb[0].mxu0
        %v1356 = vadd.f32 %v1183, %v1355
        %v1357 = vpop.f32.mrb[0].mxu0
        %v1358 = vpop.f32.mrb[0].mxu0
        %v1359 = vadd.f32 %v1186, %v1358
        %v1360 = vpop.f32.mrb[0].mxu0
        %1361 = vmatprep.mubr.bf16.mxu0 0
        %1362 = vmatmul.mubr.bf16.gmra.mrb[0].mxu0 %v1281
        %v1363 = vpop.f32.mrb[0].mxu0
        %v1364 = vadd.f32 %v1191, %v1363
        %v1365 = vpop.f32.mrb[0].mxu0
        %v1366 = vpop.f32.mrb[0].mxu0
        %v1367 = vadd.f32 %v1194, %v1366
        %v1368 = vpop.f32.mrb[0].mxu0
        %1369 = vmatprep.mubr.bf16.mxu0 0
        %1370 = vmatmul.mubr.bf16.gmra.mrb[0].mxu0 %v1284
        %v1371 = vpop.f32.mrb[0].mxu0
        %v1372 = vadd.f32 %v1199, %v1371
        %v1373 = vpop.f32.mrb[0].mxu0
        %v1374 = vpop.f32.mrb[0].mxu0
        %v1375 = vadd.f32 %v1202, %v1374
        %v1376 = vpop.f32.mrb[0].mxu0
        %1377 = vmatprep.mubr.bf16.mxu0 0
        %1378 = vmatmul.mubr.bf16.gmra.mrb[0].mxu0 %v1287
        %v1379 = vpop.f32.mrb[0].mxu0
        %v1380 = vadd.f32 %v1207, %v1379
        %v1381 = vpop.f32.mrb[0].mxu0
        %v1382 = vpop.f32.mrb[0].mxu0
        %v1383 = vadd.f32 %v1210, %v1382
        %v1384 = vpop.f32.mrb[0].mxu0
        %1385 = vdwg.mxu0
        %v1386 = vld [vmem:[%s826] sm:$0xe]
        %v1387 = vld [vmem:[%s826 + $0xc] sm:$0xe]
        %v1388 = vld [vmem:[%s826 + $0x18] sm:$0xe]
        %v1389 = vld [vmem:[%s826 + $0x24] sm:$0xe]
        %v1390 = vld [vmem:[%s826 + $0x30] sm:$0xe]
        %v1391 = vld [vmem:[%s826 + $0x3c] sm:$0xe]
        %v1392 = vld [vmem:[%s826 + $0x48] sm:$0xe]
        %v1393 = vld [vmem:[%s826 + $0x54] sm:$0xe]
        %vm1410 = vcmask 1042432
        %vm1411 = vcmask 1046532
        %vm1412 = vmor %vm1410, %vm1411
        %v1413 = vrot.slane %v1386, 5
        %v1414 = vrot.slane %v1413, 4
        %v1415 = vrot.slane %v828, 5
        %v1416 = vsel %vm1412, %v1414, %v1415
        %v1417 = vrot.slane %v1415, 4
        %v1418 = vrot.slane %v847, 5
        %v1419 = vsel %vm1412, %v1417, %v1418
        %v1420 = vrot.slane %v1387, 5
        %v1421 = vrot.slane %v1420, 4
        %v1422 = vrot.slane %v830, 5
        %v1423 = vsel %vm1412, %v1421, %v1422
        %v1424 = vrot.slane %v1422, 4
        %v1425 = vrot.slane %v848, 5
        %v1426 = vsel %vm1412, %v1424, %v1425
        %v1427 = vrot.slane %v1388, 5
        %v1428 = vrot.slane %v1427, 4
        %v1429 = vrot.slane %v832, 5
        %v1430 = vsel %vm1412, %v1428, %v1429
        %v1431 = vrot.slane %v1429, 4
        %v1432 = vrot.slane %v849, 5
        %v1433 = vsel %vm1412, %v1431, %v1432
        %v1434 = vrot.slane %v1389, 5
        %v1435 = vrot.slane %v1434, 4
        %v1436 = vrot.slane %v834, 5
        %v1437 = vsel %vm1412, %v1435, %v1436
        %v1438 = vrot.slane %v1436, 4
        %v1439 = vrot.slane %v850, 5
        %v1440 = vsel %vm1412, %v1438, %v1439
        %v1441 = vrot.slane %v1390, 5
        %v1442 = vrot.slane %v1441, 4
        %v1443 = vrot.slane %v836, 5
        %v1444 = vsel %vm1412, %v1442, %v1443
        %v1445 = vrot.slane %v1443, 4
        %v1446 = vrot.slane %v851, 5
        %v1447 = vsel %vm1412, %v1445, %v1446
        %v1448 = vrot.slane %v1391, 5
        %v1449 = vrot.slane %v1448, 4
        %v1450 = vrot.slane %v838, 5
        %v1451 = vsel %vm1412, %v1449, %v1450
        %v1452 = vrot.slane %v1450, 4
        %v1453 = vrot.slane %v852, 5
        %v1454 = vsel %vm1412, %v1452, %v1453
        %v1455 = vrot.slane %v1392, 5
        %v1456 = vrot.slane %v1455, 4
        %v1457 = vrot.slane %v840, 5
        %v1458 = vsel %vm1412, %v1456, %v1457
        %v1459 = vrot.slane %v1457, 4
        %v1460 = vrot.slane %v853, 5
        %v1461 = vsel %vm1412, %v1459, %v1460
        %v1462 = vrot.slane %v1393, 5
        %v1463 = vrot.slane %v1462, 4
        %v1464 = vrot.slane %v842, 5
        %v1465 = vsel %vm1412, %v1463, %v1464
        %v1466 = vrot.slane %v1464, 4
        %v1467 = vrot.slane %v854, 5
        %v1468 = vsel %vm1412, %v1466, %v1467
        %s1469 = scalar_lea.vmem [#allocation6], 32
        %v1470 = vld [vmem:[%s1469] sm:$0xf]
        %v1471 = vld [vmem:[%s1469 + $0x4] sm:$0xf]
        %v1472 = vld [vmem:[%s1469 + $0x8] sm:$0xf]
        %v1473 = vld [vmem:[%s1469 + $0xc] sm:$0xf]
        %v1474 = vunpack.c.l.b16 %v1416
        %v1475 = vunpack.c.l.b16 %v1419
        %v1476 = vunpack.c.l.b16 %v1423
        %v1477 = vunpack.c.l.b16 %v1426
        %v1478 = vunpack.c.l.b16 %v1430
        %v1479 = vunpack.c.l.b16 %v1433
        %v1480 = vunpack.c.l.b16 %v1437
        %v1481 = vunpack.c.l.b16 %v1440
        %v1482 = vunpack.c.l.b16 %v1444
        %v1483 = vunpack.c.l.b16 %v1447
        %v1484 = vunpack.c.l.b16 %v1451
        %v1485 = vunpack.c.l.b16 %v1454
        %v1486 = vunpack.c.l.b16 %v1458
        %v1487 = vunpack.c.l.b16 %v1461
        %v1488 = vunpack.c.l.b16 %v1465
        %v1489 = vunpack.c.l.b16 %v1468
        %v1490 = vpack.c.b16 %v1475, %v1474
        %v1491 = vpack.c.b16 %v1477, %v1476
        %v1492 = vpack.c.b16 %v1479, %v1478
        %v1493 = vpack.c.b16 %v1481, %v1480
        %v1494 = vpack.c.b16 %v1483, %v1482
        %v1495 = vpack.c.b16 %v1485, %v1484
        %v1496 = vpack.c.b16 %v1487, %v1486
        %v1497 = vpack.c.b16 %v1489, %v1488
        %v1502 = vunpack.c.l.b16 %v1470
        %v1503 = vunpack.c.l.b16 %v1471
        %v1504 = vunpack.c.l.b16 %v1472
        %v1505 = vunpack.c.l.b16 %v1473
        %v1506 = vpack.c.b16 %v1503, %v1502
        %v1507 = vpack.c.b16 %v1505, %v1504
        %v1511 = vsel %vm1091, %v1490, 0
        %v1514 = vsel %vm1091, %v1491, 0
        %v1517 = vsel %vm1091, %v1492, 0
        %v1520 = vsel %vm1091, %v1493, 0
        %v1523 = vsel %vm1091, %v1494, 0
        %v1526 = vsel %vm1091, %v1495, 0
        %v1529 = vsel %vm1091, %v1496, 0
        %v1532 = vsel %vm1091, %v1497, 0
        %1534 = vmatprep.subr.bf16.mxu0 0
        %1535 = vmatpush1.bf16.msra.mxu0 %v1506
        %1536 = vmatprep.subr.bf16.mxu0 0
        %1537 = vmatpush1.bf16.msra.mxu0 %v1507
        %1538 = vmatprep.subr.bf16.mxu0 0
        %1539 = vmatpush1.bf16.msra.mxu0 0
        %1540 = vmatprep.subr.bf16.mxu0 0
        %1541 = vmatpush1.bf16.msra.mxu0 0
        %1542 = vmatprep.subr.bf16.mxu0 0
        %1543 = vmatpush1.bf16.msra.mxu0 0
        %1544 = vmatprep.subr.bf16.mxu0 0
        %1545 = vmatpush1.bf16.msra.mxu0 0
        %1546 = vmatprep.subr.bf16.mxu0 0
        %1547 = vmatpush1.bf16.msra.mxu0 0
        %1548 = vmatprep.subr.bf16.mxu0 0
        %1549 = vmatpush1.bf16.msra.mxu0 0
        %1550 = vmatprep.subr.bf16.mxu0 0
        %1551 = vmatpush1.bf16.msra.mxu0 0
        %1552 = vmatprep.subr.bf16.mxu0 0
        %1553 = vmatpush1.bf16.msra.mxu0 0
        %1554 = vmatprep.subr.bf16.mxu0 0
        %1555 = vmatpush1.bf16.msra.mxu0 0
        %1556 = vmatprep.subr.bf16.mxu0 0
        %1557 = vmatpush1.bf16.msra.mxu0 0
        %1558 = vmatprep.subr.bf16.mxu0 0
        %1559 = vmatpush1.bf16.msra.mxu0 0
        %1560 = vmatprep.subr.bf16.mxu0 0
        %1561 = vmatpush1.bf16.msra.mxu0 0
        %1562 = vmatprep.subr.bf16.mxu0 0
        %1563 = vmatpush1.bf16.msra.mxu0 0
        %1564 = vmatprep.subr.bf16.mxu0 0
        %1565 = vmatpush1.bf16.msra.mxu0 0
        %1566 = vmatprep.mubr.bf16.mxu0 0
        %1567 = vmatmul.mubr.bf16.gmra.mrb[0].mxu0 %v1511
        %v1568 = vpop.f32.mrb[0].mxu0
        %v1569 = vadd.f32 0.0, %v1568
        %v1570 = vpop.f32.mrb[0].mxu0
        %v1571 = vpop.f32.mrb[0].mxu0
        %v1572 = vadd.f32 0.0, %v1571
        %v1573 = vpop.f32.mrb[0].mxu0
        %1574 = vmatprep.mubr.bf16.mxu0 0
        %1575 = vmatmul.mubr.bf16.gmra.mrb[0].mxu0 %v1514
        %v1576 = vpop.f32.mrb[0].mxu0
        %v1577 = vadd.f32 0.0, %v1576
        %v1578 = vpop.f32.mrb[0].mxu0
        %v1579 = vpop.f32.mrb[0].mxu0
        %v1580 = vadd.f32 0.0, %v1579
        %v1581 = vpop.f32.mrb[0].mxu0
        %1582 = vmatprep.mubr.bf16.mxu0 0
        %1583 = vmatmul.mubr.bf16.gmra.mrb[0].mxu0 %v1517
        %v1584 = vpop.f32.mrb[0].mxu0
        %v1585 = vadd.f32 0.0, %v1584
        %v1586 = vpop.f32.mrb[0].mxu0
        %v1587 = vpop.f32.mrb[0].mxu0
        %v1588 = vadd.f32 0.0, %v1587
        %v1589 = vpop.f32.mrb[0].mxu0
        %1590 = vmatprep.mubr.bf16.mxu0 0
        %1591 = vmatmul.mubr.bf16.gmra.mrb[0].mxu0 %v1520
        %v1592 = vpop.f32.mrb[0].mxu0
        %v1593 = vadd.f32 0.0, %v1592
        %v1594 = vpop.f32.mrb[0].mxu0
        %v1595 = vpop.f32.mrb[0].mxu0
        %v1596 = vadd.f32 0.0, %v1595
        %v1597 = vpop.f32.mrb[0].mxu0
        %1598 = vmatprep.mubr.bf16.mxu0 0
        %1599 = vmatmul.mubr.bf16.gmra.mrb[0].mxu0 %v1523
        %v1600 = vpop.f32.mrb[0].mxu0
        %v1601 = vadd.f32 0.0, %v1600
        %v1602 = vpop.f32.mrb[0].mxu0
        %v1603 = vpop.f32.mrb[0].mxu0
        %v1604 = vadd.f32 0.0, %v1603
        %v1605 = vpop.f32.mrb[0].mxu0
        %1606 = vmatprep.mubr.bf16.mxu0 0
        %1607 = vmatmul.mubr.bf16.gmra.mrb[0].mxu0 %v1526
        %v1608 = vpop.f32.mrb[0].mxu0
        %v1609 = vadd.f32 0.0, %v1608
        %v1610 = vpop.f32.mrb[0].mxu0
        %v1611 = vpop.f32.mrb[0].mxu0
        %v1612 = vadd.f32 0.0, %v1611
        %v1613 = vpop.f32.mrb[0].mxu0
        %1614 = vmatprep.mubr.bf16.mxu0 0
        %1615 = vmatmul.mubr.bf16.gmra.mrb[0].mxu0 %v1529
        %v1616 = vpop.f32.mrb[0].mxu0
        %v1617 = vadd.f32 0.0, %v1616
        %v1618 = vpop.f32.mrb[0].mxu0
        %v1619 = vpop.f32.mrb[0].mxu0
        %v1620 = vadd.f32 0.0, %v1619
        %v1621 = vpop.f32.mrb[0].mxu0
        %1622 = vmatprep.mubr.bf16.mxu0 0
        %1623 = vmatmul.mubr.bf16.gmra.mrb[0].mxu0 %v1532
        %v1624 = vpop.f32.mrb[0].mxu0
        %v1625 = vadd.f32 0.0, %v1624
        %v1626 = vpop.f32.mrb[0].mxu0
        %v1627 = vpop.f32.mrb[0].mxu0
        %v1628 = vadd.f32 0.0, %v1627
        %v1629 = vpop.f32.mrb[0].mxu0
        %1630 = vdwg.mxu0
        %v1631 = vadd.f32 %v1324, %v1569
        %v1632 = vadd.f32 %v1327, %v1572
        %v1633 = vadd.f32 %v1332, %v1577
        %v1634 = vadd.f32 %v1335, %v1580
        %v1635 = vadd.f32 %v1340, %v1585
        %v1636 = vadd.f32 %v1343, %v1588
        %v1637 = vadd.f32 %v1348, %v1593
        %v1638 = vadd.f32 %v1351, %v1596
        %v1639 = vadd.f32 %v1356, %v1601
        %v1640 = vadd.f32 %v1359, %v1604
        %v1641 = vadd.f32 %v1364, %v1609
        %v1642 = vadd.f32 %v1367, %v1612
        %v1643 = vadd.f32 %v1372, %v1617
        %v1644 = vadd.f32 %v1375, %v1620
        %v1645 = vadd.f32 %v1380, %v1625
        %v1646 = vadd.f32 %v1383, %v1628
        %s1647 = sadd.s32 0, 1
        %s1648 = smul.u32 %s1647, 3
        %s1649 = smul.addr %s1648, 4
        %s1650 = scalar_lea.vmem [#allocation2], %s1649
        %v1651 = vld [vmem:[%s1650] sm:$0xf]
        %v1652 = vld [vmem:[%s1650 + $0x4] sm:$0xf]
        %v1653 = vld [vmem:[%s1650 + $0xc] sm:$0xf]
        %v1654 = vld [vmem:[%s1650 + $0x10] sm:$0xf]
        %v1655 = vld [vmem:[%s1650 + $0x18] sm:$0xf]
        %v1656 = vld [vmem:[%s1650 + $0x1c] sm:$0xf]
        %v1657 = vld [vmem:[%s1650 + $0x24] sm:$0xf]
        %v1658 = vld [vmem:[%s1650 + $0x28] sm:$0xf]
        %v1659 = vld [vmem:[%s1650 + $0x30] sm:$0xf]
        %v1660 = vld [vmem:[%s1650 + $0x34] sm:$0xf]
        %v1661 = vld [vmem:[%s1650 + $0x3c] sm:$0xf]
        %v1662 = vld [vmem:[%s1650 + $0x40] sm:$0xf]
        %v1663 = vld [vmem:[%s1650 + $0x48] sm:$0xf]
        %v1664 = vld [vmem:[%s1650 + $0x4c] sm:$0xf]
        %v1665 = vld [vmem:[%s1650 + $0x54] sm:$0xf]
        %v1666 = vld [vmem:[%s1650 + $0x58] sm:$0xf]
        %s1667 = scalar_lea.vmem [#allocation6], 48
        %v1668 = vld [vmem:[%s1667] sm:$0xf]
        %v1669 = vld [vmem:[%s1667 + $0x4] sm:$0xf]
        %v1670 = vld [vmem:[%s1667 + $0x8] sm:$0xf]
        %v1671 = vld [vmem:[%s1667 + $0xc] sm:$0xf]
        %v1688 = vunpack.c.l.b16 %v1651
        %v1689 = vunpack.c.l.b16 %v1652
        %v1690 = vunpack.c.l.b16 %v1653
        %v1691 = vunpack.c.l.b16 %v1654
        %v1692 = vunpack.c.l.b16 %v1655
        %v1693 = vunpack.c.l.b16 %v1656
        %v1694 = vunpack.c.l.b16 %v1657
        %v1695 = vunpack.c.l.b16 %v1658
        %v1696 = vunpack.c.l.b16 %v1659
        %v1697 = vunpack.c.l.b16 %v1660
        %v1698 = vunpack.c.l.b16 %v1661
        %v1699 = vunpack.c.l.b16 %v1662
        %v1700 = vunpack.c.l.b16 %v1663
        %v1701 = vunpack.c.l.b16 %v1664
        %v1702 = vunpack.c.l.b16 %v1665
        %v1703 = vunpack.c.l.b16 %v1666
        %v1704 = vpack.c.b16 %v1689, %v1688
        %v1705 = vpack.c.b16 %v1691, %v1690
        %v1706 = vpack.c.b16 %v1693, %v1692
        %v1707 = vpack.c.b16 %v1695, %v1694
        %v1708 = vpack.c.b16 %v1697, %v1696
        %v1709 = vpack.c.b16 %v1699, %v1698
        %v1710 = vpack.c.b16 %v1701, %v1700
        %v1711 = vpack.c.b16 %v1703, %v1702
        %v1716 = vunpack.c.l.b16 %v1668
        %v1717 = vunpack.c.l.b16 %v1669
        %v1718 = vunpack.c.l.b16 %v1670
        %v1719 = vunpack.c.l.b16 %v1671
        %v1720 = vpack.c.b16 %v1717, %v1716
        %v1721 = vpack.c.b16 %v1719, %v1718
        %v1725 = vsel %vm1091, %v1704, 0
        %v1728 = vsel %vm1091, %v1705, 0
        %v1731 = vsel %vm1091, %v1706, 0
        %v1734 = vsel %vm1091, %v1707, 0
        %v1737 = vsel %vm1091, %v1708, 0
        %v1740 = vsel %vm1091, %v1709, 0
        %v1743 = vsel %vm1091, %v1710, 0
        %v1746 = vsel %vm1091, %v1711, 0
        %1748 = vmatprep.subr.bf16.mxu0 0
        %1749 = vmatpush1.bf16.msra.mxu0 %v1720
        %1750 = vmatprep.subr.bf16.mxu0 0
        %1751 = vmatpush1.bf16.msra.mxu0 %v1721
        %1752 = vmatprep.subr.bf16.mxu0 0
        %1753 = vmatpush1.bf16.msra.mxu0 0
        %1754 = vmatprep.subr.bf16.mxu0 0
        %1755 = vmatpush1.bf16.msra.mxu0 0
        %1756 = vmatprep.subr.bf16.mxu0 0
        %1757 = vmatpush1.bf16.msra.mxu0 0
        %1758 = vmatprep.subr.bf16.mxu0 0
        %1759 = vmatpush1.bf16.msra.mxu0 0
        %1760 = vmatprep.subr.bf16.mxu0 0
        %1761 = vmatpush1.bf16.msra.mxu0 0
        %1762 = vmatprep.subr.bf16.mxu0 0
        %1763 = vmatpush1.bf16.msra.mxu0 0
        %1764 = vmatprep.subr.bf16.mxu0 0
        %1765 = vmatpush1.bf16.msra.mxu0 0
        %1766 = vmatprep.subr.bf16.mxu0 0
        %1767 = vmatpush1.bf16.msra.mxu0 0
        %1768 = vmatprep.subr.bf16.mxu0 0
        %1769 = vmatpush1.bf16.msra.mxu0 0
        %1770 = vmatprep.subr.bf16.mxu0 0
        %1771 = vmatpush1.bf16.msra.mxu0 0
        %1772 = vmatprep.subr.bf16.mxu0 0
        %1773 = vmatpush1.bf16.msra.mxu0 0
        %1774 = vmatprep.subr.bf16.mxu0 0
        %1775 = vmatpush1.bf16.msra.mxu0 0
        %1776 = vmatprep.subr.bf16.mxu0 0
        %1777 = vmatpush1.bf16.msra.mxu0 0
        %1778 = vmatprep.subr.bf16.mxu0 0
        %1779 = vmatpush1.bf16.msra.mxu0 0
        %1780 = vmatprep.mubr.bf16.mxu0 0
        %1781 = vmatmul.mubr.bf16.gmra.mrb[0].mxu0 %v1725
        %v1782 = vpop.f32.mrb[0].mxu0
        %v1783 = vadd.f32 0.0, %v1782
        %v1784 = vpop.f32.mrb[0].mxu0
        %v1785 = vpop.f32.mrb[0].mxu0
        %v1786 = vadd.f32 0.0, %v1785
        %v1787 = vpop.f32.mrb[0].mxu0
        %1788 = vmatprep.mubr.bf16.mxu0 0
        %1789 = vmatmul.mubr.bf16.gmra.mrb[0].mxu0 %v1728
        %v1790 = vpop.f32.mrb[0].mxu0
        %v1791 = vadd.f32 0.0, %v1790
        %v1792 = vpop.f32.mrb[0].mxu0
        %v1793 = vpop.f32.mrb[0].mxu0
        %v1794 = vadd.f32 0.0, %v1793
        %v1795 = vpop.f32.mrb[0].mxu0
        %1796 = vmatprep.mubr.bf16.mxu0 0
        %1797 = vmatmul.mubr.bf16.gmra.mrb[0].mxu0 %v1731
        %v1798 = vpop.f32.mrb[0].mxu0
        %v1799 = vadd.f32 0.0, %v1798
        %v1800 = vpop.f32.mrb[0].mxu0
        %v1801 = vpop.f32.mrb[0].mxu0
        %v1802 = vadd.f32 0.0, %v1801
        %v1803 = vpop.f32.mrb[0].mxu0
        %1804 = vmatprep.mubr.bf16.mxu0 0
        %1805 = vmatmul.mubr.bf16.gmra.mrb[0].mxu0 %v1734
        %v1806 = vpop.f32.mrb[0].mxu0
        %v1807 = vadd.f32 0.0, %v1806
        %v1808 = vpop.f32.mrb[0].mxu0
        %v1809 = vpop.f32.mrb[0].mxu0
        %v1810 = vadd.f32 0.0, %v1809
        %v1811 = vpop.f32.mrb[0].mxu0
        %1812 = vmatprep.mubr.bf16.mxu0 0
        %1813 = vmatmul.mubr.bf16.gmra.mrb[0].mxu0 %v1737
        %v1814 = vpop.f32.mrb[0].mxu0
        %v1815 = vadd.f32 0.0, %v1814
        %v1816 = vpop.f32.mrb[0].mxu0
        %v1817 = vpop.f32.mrb[0].mxu0
        %v1818 = vadd.f32 0.0, %v1817
        %v1819 = vpop.f32.mrb[0].mxu0
        %1820 = vmatprep.mubr.bf16.mxu0 0
        %1821 = vmatmul.mubr.bf16.gmra.mrb[0].mxu0 %v1740
        %v1822 = vpop.f32.mrb[0].mxu0
        %v1823 = vadd.f32 0.0, %v1822
        %v1824 = vpop.f32.mrb[0].mxu0
        %v1825 = vpop.f32.mrb[0].mxu0
        %v1826 = vadd.f32 0.0, %v1825
        %v1827 = vpop.f32.mrb[0].mxu0
        %1828 = vmatprep.mubr.bf16.mxu0 0
        %1829 = vmatmul.mubr.bf16.gmra.mrb[0].mxu0 %v1743
        %v1830 = vpop.f32.mrb[0].mxu0
        %v1831 = vadd.f32 0.0, %v1830
        %v1832 = vpop.f32.mrb[0].mxu0
        %v1833 = vpop.f32.mrb[0].mxu0
        %v1834 = vadd.f32 0.0, %v1833
        %v1835 = vpop.f32.mrb[0].mxu0
        %1836 = vmatprep.mubr.bf16.mxu0 0
        %1837 = vmatmul.mubr.bf16.gmra.mrb[0].mxu0 %v1746
        %v1838 = vpop.f32.mrb[0].mxu0
        %v1839 = vadd.f32 0.0, %v1838
        %v1840 = vpop.f32.mrb[0].mxu0
        %v1841 = vpop.f32.mrb[0].mxu0
        %v1842 = vadd.f32 0.0, %v1841
        %v1843 = vpop.f32.mrb[0].mxu0
        %1844 = vdwg.mxu0
        %v1845 = vadd.f32 %v1631, %v1783
        %v1846 = vadd.f32 %v1632, %v1786
        %v1847 = vadd.f32 %v1633, %v1791
        %v1848 = vadd.f32 %v1634, %v1794
        %v1849 = vadd.f32 %v1635, %v1799
        %v1850 = vadd.f32 %v1636, %v1802
        %v1851 = vadd.f32 %v1637, %v1807
        %v1852 = vadd.f32 %v1638, %v1810
        %v1853 = vadd.f32 %v1639, %v1815
        %v1854 = vadd.f32 %v1640, %v1818
        %v1855 = vadd.f32 %v1641, %v1823
        %v1856 = vadd.f32 %v1642, %v1826
        %v1857 = vadd.f32 %v1643, %v1831
        %v1858 = vadd.f32 %v1644, %v1834
        %v1859 = vadd.f32 %v1645, %v1839
        %v1860 = vadd.f32 %v1646, %v1842
        %v1861 = vld [vmem:[%s1650] sm:$0xf]
        %v1862 = vld [vmem:[%s1650 + $0x4] sm:$0xf]
        %v1863 = vld [vmem:[%s1650 + $0x8] sm:$0x1]
        %v1864 = vld [vmem:[%s1650 + $0xc] sm:$0xf]
        %v1865 = vld [vmem:[%s1650 + $0x10] sm:$0xf]
        %v1866 = vld [vmem:[%s1650 + $0x14] sm:$0x1]
        %v1867 = vld [vmem:[%s1650 + $0x18] sm:$0xf]
        %v1868 = vld [vmem:[%s1650 + $0x1c] sm:$0xf]
        %v1869 = vld [vmem:[%s1650 + $0x20] sm:$0x1]
        %v1870 = vld [vmem:[%s1650 + $0x24] sm:$0xf]
        %v1871 = vld [vmem:[%s1650 + $0x28] sm:$0xf]
        %v1872 = vld [vmem:[%s1650 + $0x2c] sm:$0x1]
        %v1873 = vld [vmem:[%s1650 + $0x30] sm:$0xf]
        %v1874 = vld [vmem:[%s1650 + $0x34] sm:$0xf]
        %v1875 = vld [vmem:[%s1650 + $0x38] sm:$0x1]
        %v1876 = vld [vmem:[%s1650 + $0x3c] sm:$0xf]
        %v1877 = vld [vmem:[%s1650 + $0x40] sm:$0xf]
        %v1878 = vld [vmem:[%s1650 + $0x44] sm:$0x1]
        %v1879 = vld [vmem:[%s1650 + $0x48] sm:$0xf]
        %v1880 = vld [vmem:[%s1650 + $0x4c] sm:$0xf]
        %v1881 = vld [vmem:[%s1650 + $0x50] sm:$0x1]
        %v1882 = vld [vmem:[%s1650 + $0x54] sm:$0xf]
        %v1883 = vld [vmem:[%s1650 + $0x58] sm:$0xf]
        %v1884 = vld [vmem:[%s1650 + $0x5c] sm:$0x1]
        %v1886 = vshrl.u32 %v1861, 16
        %v1888 = vrot.slane %v1886, 4
        %v1889 = vshll.u32 %v1861, 16
        %v1891 = vrot.slane %v1889, 5
        %v1892 = vor.u32 %v1888, %v1891
        %v1893 = vrot.slane %v1892, 4
        %v1895 = vshll.u32 %v1862, 16
        %v1897 = vrot.slane %v1895, 5
        %v1898 = vsel %vm857, %v1893, %v1897
        %v1899 = vshrl.u32 %v1862, 16
        %v1901 = vrot.slane %v1899, 4
        %v1902 = vor.u32 %v1901, %v1897
        %v1903 = vrot.slane %v1902, 4
        %v1905 = vshll.u32 %v1863, 16
        %v1907 = vrot.slane %v1905, 5
        %v1908 = vsel %vm857, %v1903, %v1907
        %v1910 = vshrl.u32 %v1864, 16
        %v1912 = vrot.slane %v1910, 4
        %v1913 = vshll.u32 %v1864, 16
        %v1915 = vrot.slane %v1913, 5
        %v1916 = vor.u32 %v1912, %v1915
        %v1917 = vrot.slane %v1916, 4
        %v1919 = vshll.u32 %v1865, 16
        %v1921 = vrot.slane %v1919, 5
        %v1922 = vsel %vm857, %v1917, %v1921
        %v1923 = vshrl.u32 %v1865, 16
        %v1925 = vrot.slane %v1923, 4
        %v1926 = vor.u32 %v1925, %v1921
        %v1927 = vrot.slane %v1926, 4
        %v1929 = vshll.u32 %v1866, 16
        %v1931 = vrot.slane %v1929, 5
        %v1932 = vsel %vm857, %v1927, %v1931
        %v1934 = vshrl.u32 %v1867, 16
        %v1936 = vrot.slane %v1934, 4
        %v1937 = vshll.u32 %v1867, 16
        %v1939 = vrot.slane %v1937, 5
        %v1940 = vor.u32 %v1936, %v1939
        %v1941 = vrot.slane %v1940, 4
        %v1943 = vshll.u32 %v1868, 16
        %v1945 = vrot.slane %v1943, 5
        %v1946 = vsel %vm857, %v1941, %v1945
        %v1947 = vshrl.u32 %v1868, 16
        %v1949 = vrot.slane %v1947, 4
        %v1950 = vor.u32 %v1949, %v1945
        %v1951 = vrot.slane %v1950, 4
        %v1953 = vshll.u32 %v1869, 16
        %v1955 = vrot.slane %v1953, 5
        %v1956 = vsel %vm857, %v1951, %v1955
        %v1958 = vshrl.u32 %v1870, 16
        %v1960 = vrot.slane %v1958, 4
        %v1961 = vshll.u32 %v1870, 16
        %v1963 = vrot.slane %v1961, 5
        %v1964 = vor.u32 %v1960, %v1963
        %v1965 = vrot.slane %v1964, 4
        %v1967 = vshll.u32 %v1871, 16
        %v1969 = vrot.slane %v1967, 5
        %v1970 = vsel %vm857, %v1965, %v1969
        %v1971 = vshrl.u32 %v1871, 16
        %v1973 = vrot.slane %v1971, 4
        %v1974 = vor.u32 %v1973, %v1969
        %v1975 = vrot.slane %v1974, 4
        %v1977 = vshll.u32 %v1872, 16
        %v1979 = vrot.slane %v1977, 5
        %v1980 = vsel %vm857, %v1975, %v1979
        %v1982 = vshrl.u32 %v1873, 16
        %v1984 = vrot.slane %v1982, 4
        %v1985 = vshll.u32 %v1873, 16
        %v1987 = vrot.slane %v1985, 5
        %v1988 = vor.u32 %v1984, %v1987
        %v1989 = vrot.slane %v1988, 4
        %v1991 = vshll.u32 %v1874, 16
        %v1993 = vrot.slane %v1991, 5
        %v1994 = vsel %vm857, %v1989, %v1993
        %v1995 = vshrl.u32 %v1874, 16
        %v1997 = vrot.slane %v1995, 4
        %v1998 = vor.u32 %v1997, %v1993
        %v1999 = vrot.slane %v1998, 4
        %v2001 = vshll.u32 %v1875, 16
        %v2003 = vrot.slane %v2001, 5
        %v2004 = vsel %vm857, %v1999, %v2003
        %v2006 = vshrl.u32 %v1876, 16
        %v2008 = vrot.slane %v2006, 4
        %v2009 = vshll.u32 %v1876, 16
        %v2011 = vrot.slane %v2009, 5
        %v2012 = vor.u32 %v2008, %v2011
        %v2013 = vrot.slane %v2012, 4
        %v2015 = vshll.u32 %v1877, 16
        %v2017 = vrot.slane %v2015, 5
        %v2018 = vsel %vm857, %v2013, %v2017
        %v2019 = vshrl.u32 %v1877, 16
        %v2021 = vrot.slane %v2019, 4
        %v2022 = vor.u32 %v2021, %v2017
        %v2023 = vrot.slane %v2022, 4
        %v2025 = vshll.u32 %v1878, 16
        %v2027 = vrot.slane %v2025, 5
        %v2028 = vsel %vm857, %v2023, %v2027
        %v2030 = vshrl.u32 %v1879, 16
        %v2032 = vrot.slane %v2030, 4
        %v2033 = vshll.u32 %v1879, 16
        %v2035 = vrot.slane %v2033, 5
        %v2036 = vor.u32 %v2032, %v2035
        %v2037 = vrot.slane %v2036, 4
        %v2039 = vshll.u32 %v1880, 16
        %v2041 = vrot.slane %v2039, 5
        %v2042 = vsel %vm857, %v2037, %v2041
        %v2043 = vshrl.u32 %v1880, 16
        %v2045 = vrot.slane %v2043, 4
        %v2046 = vor.u32 %v2045, %v2041
        %v2047 = vrot.slane %v2046, 4
        %v2049 = vshll.u32 %v1881, 16
        %v2051 = vrot.slane %v2049, 5
        %v2052 = vsel %vm857, %v2047, %v2051
        %v2054 = vshrl.u32 %v1882, 16
        %v2056 = vrot.slane %v2054, 4
        %v2057 = vshll.u32 %v1882, 16
        %v2059 = vrot.slane %v2057, 5
        %v2060 = vor.u32 %v2056, %v2059
        %v2061 = vrot.slane %v2060, 4
        %v2063 = vshll.u32 %v1883, 16
        %v2065 = vrot.slane %v2063, 5
        %v2066 = vsel %vm857, %v2061, %v2065
        %v2067 = vshrl.u32 %v1883, 16
        %v2069 = vrot.slane %v2067, 4
        %v2070 = vor.u32 %v2069, %v2065
        %v2071 = vrot.slane %v2070, 4
        %v2073 = vshll.u32 %v1884, 16
        %v2075 = vrot.slane %v2073, 5
        %v2076 = vsel %vm857, %v2071, %v2075
        %s2077 = scalar_lea.vmem [#allocation6], 64
        %v2078 = vld [vmem:[%s2077] sm:$0xf]
        %v2079 = vld [vmem:[%s2077 + $0x4] sm:$0xf]
        %v2080 = vld [vmem:[%s2077 + $0x8] sm:$0xf]
        %v2081 = vld [vmem:[%s2077 + $0xc] sm:$0xf]
        %v2082 = vunpack.c.l.b16 %v1898
        %v2083 = vunpack.c.l.b16 %v1908
        %v2084 = vunpack.c.l.b16 %v1922
        %v2085 = vunpack.c.l.b16 %v1932
        %v2086 = vunpack.c.l.b16 %v1946
        %v2087 = vunpack.c.l.b16 %v1956
        %v2088 = vunpack.c.l.b16 %v1970
        %v2089 = vunpack.c.l.b16 %v1980
        %v2090 = vunpack.c.l.b16 %v1994
        %v2091 = vunpack.c.l.b16 %v2004
        %v2092 = vunpack.c.l.b16 %v2018
        %v2093 = vunpack.c.l.b16 %v2028
        %v2094 = vunpack.c.l.b16 %v2042
        %v2095 = vunpack.c.l.b16 %v2052
        %v2096 = vunpack.c.l.b16 %v2066
        %v2097 = vunpack.c.l.b16 %v2076
        %v2098 = vpack.c.b16 %v2083, %v2082
        %v2099 = vpack.c.b16 %v2085, %v2084
        %v2100 = vpack.c.b16 %v2087, %v2086
        %v2101 = vpack.c.b16 %v2089, %v2088
        %v2102 = vpack.c.b16 %v2091, %v2090
        %v2103 = vpack.c.b16 %v2093, %v2092
        %v2104 = vpack.c.b16 %v2095, %v2094
        %v2105 = vpack.c.b16 %v2097, %v2096
        %v2110 = vunpack.c.l.b16 %v2078
        %v2111 = vunpack.c.l.b16 %v2079
        %v2112 = vunpack.c.l.b16 %v2080
        %v2113 = vunpack.c.l.b16 %v2081
        %v2114 = vpack.c.b16 %v2111, %v2110
        %v2115 = vpack.c.b16 %v2113, %v2112
        %v2119 = vsel %vm1091, %v2098, 0
        %v2122 = vsel %vm1091, %v2099, 0
        %v2125 = vsel %vm1091, %v2100, 0
        %v2128 = vsel %vm1091, %v2101, 0
        %v2131 = vsel %vm1091, %v2102, 0
        %v2134 = vsel %vm1091, %v2103, 0
        %v2137 = vsel %vm1091, %v2104, 0
        %v2140 = vsel %vm1091, %v2105, 0
        %2142 = vmatprep.subr.bf16.mxu0 0
        %2143 = vmatpush1.bf16.msra.mxu0 %v2114
        %2144 = vmatprep.subr.bf16.mxu0 0
        %2145 = vmatpush1.bf16.msra.mxu0 %v2115
        %2146 = vmatprep.subr.bf16.mxu0 0
        %2147 = vmatpush1.bf16.msra.mxu0 0
        %2148 = vmatprep.subr.bf16.mxu0 0
        %2149 = vmatpush1.bf16.msra.mxu0 0
        %2150 = vmatprep.subr.bf16.mxu0 0
        %2151 = vmatpush1.bf16.msra.mxu0 0
        %2152 = vmatprep.subr.bf16.mxu0 0
        %2153 = vmatpush1.bf16.msra.mxu0 0
        %2154 = vmatprep.subr.bf16.mxu0 0
        %2155 = vmatpush1.bf16.msra.mxu0 0
        %2156 = vmatprep.subr.bf16.mxu0 0
        %2157 = vmatpush1.bf16.msra.mxu0 0
        %2158 = vmatprep.subr.bf16.mxu0 0
        %2159 = vmatpush1.bf16.msra.mxu0 0
        %2160 = vmatprep.subr.bf16.mxu0 0
        %2161 = vmatpush1.bf16.msra.mxu0 0
        %2162 = vmatprep.subr.bf16.mxu0 0
        %2163 = vmatpush1.bf16.msra.mxu0 0
        %2164 = vmatprep.subr.bf16.mxu0 0
        %2165 = vmatpush1.bf16.msra.mxu0 0
        %2166 = vmatprep.subr.bf16.mxu0 0
        %2167 = vmatpush1.bf16.msra.mxu0 0
        %2168 = vmatprep.subr.bf16.mxu0 0
        %2169 = vmatpush1.bf16.msra.mxu0 0
        %2170 = vmatprep.subr.bf16.mxu0 0
        %2171 = vmatpush1.bf16.msra.mxu0 0
        %2172 = vmatprep.subr.bf16.mxu0 0
        %2173 = vmatpush1.bf16.msra.mxu0 0
        %2174 = vmatprep.mubr.bf16.mxu0 0
        %2175 = vmatmul.mubr.bf16.gmra.mrb[0].mxu0 %v2119
        %v2176 = vpop.f32.mrb[0].mxu0
        %v2177 = vadd.f32 0.0, %v2176
        %v2178 = vpop.f32.mrb[0].mxu0
        %v2179 = vpop.f32.mrb[0].mxu0
        %v2180 = vadd.f32 0.0, %v2179
        %v2181 = vpop.f32.mrb[0].mxu0
        %2182 = vmatprep.mubr.bf16.mxu0 0
        %2183 = vmatmul.mubr.bf16.gmra.mrb[0].mxu0 %v2122
        %v2184 = vpop.f32.mrb[0].mxu0
        %v2185 = vadd.f32 0.0, %v2184
        %v2186 = vpop.f32.mrb[0].mxu0
        %v2187 = vpop.f32.mrb[0].mxu0
        %v2188 = vadd.f32 0.0, %v2187
        %v2189 = vpop.f32.mrb[0].mxu0
        %2190 = vmatprep.mubr.bf16.mxu0 0
        %2191 = vmatmul.mubr.bf16.gmra.mrb[0].mxu0 %v2125
        %v2192 = vpop.f32.mrb[0].mxu0
        %v2193 = vadd.f32 0.0, %v2192
        %v2194 = vpop.f32.mrb[0].mxu0
        %v2195 = vpop.f32.mrb[0].mxu0
        %v2196 = vadd.f32 0.0, %v2195
        %v2197 = vpop.f32.mrb[0].mxu0
        %2198 = vmatprep.mubr.bf16.mxu0 0
        %2199 = vmatmul.mubr.bf16.gmra.mrb[0].mxu0 %v2128
        %v2200 = vpop.f32.mrb[0].mxu0
        %v2201 = vadd.f32 0.0, %v2200
        %v2202 = vpop.f32.mrb[0].mxu0
        %v2203 = vpop.f32.mrb[0].mxu0
        %v2204 = vadd.f32 0.0, %v2203
        %v2205 = vpop.f32.mrb[0].mxu0
        %2206 = vmatprep.mubr.bf16.mxu0 0
        %2207 = vmatmul.mubr.bf16.gmra.mrb[0].mxu0 %v2131
        %v2208 = vpop.f32.mrb[0].mxu0
        %v2209 = vadd.f32 0.0, %v2208
        %v2210 = vpop.f32.mrb[0].mxu0
        %v2211 = vpop.f32.mrb[0].mxu0
        %v2212 = vadd.f32 0.0, %v2211
        %v2213 = vpop.f32.mrb[0].mxu0
        %2214 = vmatprep.mubr.bf16.mxu0 0
        %2215 = vmatmul.mubr.bf16.gmra.mrb[0].mxu0 %v2134
        %v2216 = vpop.f32.mrb[0].mxu0
        %v2217 = vadd.f32 0.0, %v2216
        %v2218 = vpop.f32.mrb[0].mxu0
        %v2219 = vpop.f32.mrb[0].mxu0
        %v2220 = vadd.f32 0.0, %v2219
        %v2221 = vpop.f32.mrb[0].mxu0
        %2222 = vmatprep.mubr.bf16.mxu0 0
        %2223 = vmatmul.mubr.bf16.gmra.mrb[0].mxu0 %v2137
        %v2224 = vpop.f32.mrb[0].mxu0
        %v2225 = vadd.f32 0.0, %v2224
        %v2226 = vpop.f32.mrb[0].mxu0
        %v2227 = vpop.f32.mrb[0].mxu0
        %v2228 = vadd.f32 0.0, %v2227
        %v2229 = vpop.f32.mrb[0].mxu0
        %2230 = vmatprep.mubr.bf16.mxu0 0
        %2231 = vmatmul.mubr.bf16.gmra.mrb[0].mxu0 %v2140
        %v2232 = vpop.f32.mrb[0].mxu0
        %v2233 = vadd.f32 0.0, %v2232
        %v2234 = vpop.f32.mrb[0].mxu0
        %v2235 = vpop.f32.mrb[0].mxu0
        %v2236 = vadd.f32 0.0, %v2235
        %v2237 = vpop.f32.mrb[0].mxu0
        %2238 = vdwg.mxu0
        %v2239 = vadd.f32 %v1845, %v2177
        %v2240 = vadd.f32 %v1846, %v2180
        %v2241 = vadd.f32 %v1847, %v2185
        %v2242 = vadd.f32 %v1848, %v2188
        %v2243 = vadd.f32 %v1849, %v2193
        %v2244 = vadd.f32 %v1850, %v2196
        %v2245 = vadd.f32 %v1851, %v2201
        %v2246 = vadd.f32 %v1852, %v2204
        %v2247 = vadd.f32 %v1853, %v2209
        %v2248 = vadd.f32 %v1854, %v2212
        %v2249 = vadd.f32 %v1855, %v2217
        %v2250 = vadd.f32 %v1856, %v2220
        %v2251 = vadd.f32 %v1857, %v2225
        %v2252 = vadd.f32 %v1858, %v2228
        %v2253 = vadd.f32 %v1859, %v2233
        %v2254 = vadd.f32 %v1860, %v2236
        %v2255 = vld [vmem:[%s1650] sm:$0xe]
        %v2256 = vld [vmem:[%s1650 + $0xc] sm:$0xe]
        %v2257 = vld [vmem:[%s1650 + $0x18] sm:$0xe]
        %v2258 = vld [vmem:[%s1650 + $0x24] sm:$0xe]
        %v2259 = vld [vmem:[%s1650 + $0x30] sm:$0xe]
        %v2260 = vld [vmem:[%s1650 + $0x3c] sm:$0xe]
        %v2261 = vld [vmem:[%s1650 + $0x48] sm:$0xe]
        %v2262 = vld [vmem:[%s1650 + $0x54] sm:$0xe]
        %v2287 = vrot.slane %v2255, 5
        %v2288 = vrot.slane %v2287, 4
        %v2289 = vrot.slane %v1862, 5
        %v2290 = vsel %vm1412, %v2288, %v2289
        %v2291 = vrot.slane %v2289, 4
        %v2292 = vrot.slane %v1863, 5
        %v2293 = vsel %vm1412, %v2291, %v2292
        %v2294 = vrot.slane %v2256, 5
        %v2295 = vrot.slane %v2294, 4
        %v2296 = vrot.slane %v1865, 5
        %v2297 = vsel %vm1412, %v2295, %v2296
        %v2298 = vrot.slane %v2296, 4
        %v2299 = vrot.slane %v1866, 5
        %v2300 = vsel %vm1412, %v2298, %v2299
        %v2301 = vrot.slane %v2257, 5
        %v2302 = vrot.slane %v2301, 4
        %v2303 = vrot.slane %v1868, 5
        %v2304 = vsel %vm1412, %v2302, %v2303
        %v2305 = vrot.slane %v2303, 4
        %v2306 = vrot.slane %v1869, 5
        %v2307 = vsel %vm1412, %v2305, %v2306
        %v2308 = vrot.slane %v2258, 5
        %v2309 = vrot.slane %v2308, 4
        %v2310 = vrot.slane %v1871, 5
        %v2311 = vsel %vm1412, %v2309, %v2310
        %v2312 = vrot.slane %v2310, 4
        %v2313 = vrot.slane %v1872, 5
        %v2314 = vsel %vm1412, %v2312, %v2313
        %v2315 = vrot.slane %v2259, 5
        %v2316 = vrot.slane %v2315, 4
        %v2317 = vrot.slane %v1874, 5
        %v2318 = vsel %vm1412, %v2316, %v2317
        %v2319 = vrot.slane %v2317, 4
        %v2320 = vrot.slane %v1875, 5
        %v2321 = vsel %vm1412, %v2319, %v2320
        %v2322 = vrot.slane %v2260, 5
        %v2323 = vrot.slane %v2322, 4
        %v2324 = vrot.slane %v1877, 5
        %v2325 = vsel %vm1412, %v2323, %v2324
        %v2326 = vrot.slane %v2324, 4
        %v2327 = vrot.slane %v1878, 5
        %v2328 = vsel %vm1412, %v2326, %v2327
        %v2329 = vrot.slane %v2261, 5
        %v2330 = vrot.slane %v2329, 4
        %v2331 = vrot.slane %v1880, 5
        %v2332 = vsel %vm1412, %v2330, %v2331
        %v2333 = vrot.slane %v2331, 4
        %v2334 = vrot.slane %v1881, 5
        %v2335 = vsel %vm1412, %v2333, %v2334
        %v2336 = vrot.slane %v2262, 5
        %v2337 = vrot.slane %v2336, 4
        %v2338 = vrot.slane %v1883, 5
        %v2339 = vsel %vm1412, %v2337, %v2338
        %v2340 = vrot.slane %v2338, 4
        %v2341 = vrot.slane %v1884, 5
        %v2342 = vsel %vm1412, %v2340, %v2341
        %s2343 = scalar_lea.vmem [#allocation6], 80
        %v2344 = vld [vmem:[%s2343] sm:$0xf]
        %v2345 = vld [vmem:[%s2343 + $0x4] sm:$0xf]
        %v2346 = vld [vmem:[%s2343 + $0x8] sm:$0xf]
        %v2347 = vld [vmem:[%s2343 + $0xc] sm:$0xf]
        %v2348 = vunpack.c.l.b16 %v2290
        %v2349 = vunpack.c.l.b16 %v2293
        %v2350 = vunpack.c.l.b16 %v2297
        %v2351 = vunpack.c.l.b16 %v2300
        %v2352 = vunpack.c.l.b16 %v2304
        %v2353 = vunpack.c.l.b16 %v2307
        %v2354 = vunpack.c.l.b16 %v2311
        %v2355 = vunpack.c.l.b16 %v2314
        %v2356 = vunpack.c.l.b16 %v2318
        %v2357 = vunpack.c.l.b16 %v2321
        %v2358 = vunpack.c.l.b16 %v2325
        %v2359 = vunpack.c.l.b16 %v2328
        %v2360 = vunpack.c.l.b16 %v2332
        %v2361 = vunpack.c.l.b16 %v2335
        %v2362 = vunpack.c.l.b16 %v2339
        %v2363 = vunpack.c.l.b16 %v2342
        %v2364 = vpack.c.b16 %v2349, %v2348
        %v2365 = vpack.c.b16 %v2351, %v2350
        %v2366 = vpack.c.b16 %v2353, %v2352
        %v2367 = vpack.c.b16 %v2355, %v2354
        %v2368 = vpack.c.b16 %v2357, %v2356
        %v2369 = vpack.c.b16 %v2359, %v2358
        %v2370 = vpack.c.b16 %v2361, %v2360
        %v2371 = vpack.c.b16 %v2363, %v2362
        %v2376 = vunpack.c.l.b16 %v2344
        %v2377 = vunpack.c.l.b16 %v2345
        %v2378 = vunpack.c.l.b16 %v2346
        %v2379 = vunpack.c.l.b16 %v2347
        %v2380 = vpack.c.b16 %v2377, %v2376
        %v2381 = vpack.c.b16 %v2379, %v2378
        %v2385 = vsel %vm1091, %v2364, 0
        %v2388 = vsel %vm1091, %v2365, 0
        %v2391 = vsel %vm1091, %v2366, 0
        %v2394 = vsel %vm1091, %v2367, 0
        %v2397 = vsel %vm1091, %v2368, 0
        %v2400 = vsel %vm1091, %v2369, 0
        %v2403 = vsel %vm1091, %v2370, 0
        %v2406 = vsel %vm1091, %v2371, 0
        %2408 = vmatprep.subr.bf16.mxu0 0
        %2409 = vmatpush1.bf16.msra.mxu0 %v2380
        %2410 = vmatprep.subr.bf16.mxu0 0
        %2411 = vmatpush1.bf16.msra.mxu0 %v2381
        %2412 = vmatprep.subr.bf16.mxu0 0
        %2413 = vmatpush1.bf16.msra.mxu0 0
        %2414 = vmatprep.subr.bf16.mxu0 0
        %2415 = vmatpush1.bf16.msra.mxu0 0
        %2416 = vmatprep.subr.bf16.mxu0 0
        %2417 = vmatpush1.bf16.msra.mxu0 0
        %2418 = vmatprep.subr.bf16.mxu0 0
        %2419 = vmatpush1.bf16.msra.mxu0 0
        %2420 = vmatprep.subr.bf16.mxu0 0
        %2421 = vmatpush1.bf16.msra.mxu0 0
        %2422 = vmatprep.subr.bf16.mxu0 0
        %2423 = vmatpush1.bf16.msra.mxu0 0
        %2424 = vmatprep.subr.bf16.mxu0 0
        %2425 = vmatpush1.bf16.msra.mxu0 0
        %2426 = vmatprep.subr.bf16.mxu0 0
        %2427 = vmatpush1.bf16.msra.mxu0 0
        %2428 = vmatprep.subr.bf16.mxu0 0
        %2429 = vmatpush1.bf16.msra.mxu0 0
        %2430 = vmatprep.subr.bf16.mxu0 0
        %2431 = vmatpush1.bf16.msra.mxu0 0
        %2432 = vmatprep.subr.bf16.mxu0 0
        %2433 = vmatpush1.bf16.msra.mxu0 0
        %2434 = vmatprep.subr.bf16.mxu0 0
        %2435 = vmatpush1.bf16.msra.mxu0 0
        %2436 = vmatprep.subr.bf16.mxu0 0
        %2437 = vmatpush1.bf16.msra.mxu0 0
        %2438 = vmatprep.subr.bf16.mxu0 0
        %2439 = vmatpush1.bf16.msra.mxu0 0
        %2440 = vmatprep.mubr.bf16.mxu0 0
        %2441 = vmatmul.mubr.bf16.gmra.mrb[0].mxu0 %v2385
        %v2442 = vpop.f32.mrb[0].mxu0
        %v2443 = vadd.f32 0.0, %v2442
        %v2444 = vpop.f32.mrb[0].mxu0
        %v2445 = vpop.f32.mrb[0].mxu0
        %v2446 = vadd.f32 0.0, %v2445
        %v2447 = vpop.f32.mrb[0].mxu0
        %2448 = vmatprep.mubr.bf16.mxu0 0
        %2449 = vmatmul.mubr.bf16.gmra.mrb[0].mxu0 %v2388
        %v2450 = vpop.f32.mrb[0].mxu0
        %v2451 = vadd.f32 0.0, %v2450
        %v2452 = vpop.f32.mrb[0].mxu0
        %v2453 = vpop.f32.mrb[0].mxu0
        %v2454 = vadd.f32 0.0, %v2453
        %v2455 = vpop.f32.mrb[0].mxu0
        %2456 = vmatprep.mubr.bf16.mxu0 0
        %2457 = vmatmul.mubr.bf16.gmra.mrb[0].mxu0 %v2391
        %v2458 = vpop.f32.mrb[0].mxu0
        %v2459 = vadd.f32 0.0, %v2458
        %v2460 = vpop.f32.mrb[0].mxu0
        %v2461 = vpop.f32.mrb[0].mxu0
        %v2462 = vadd.f32 0.0, %v2461
        %v2463 = vpop.f32.mrb[0].mxu0
        %2464 = vmatprep.mubr.bf16.mxu0 0
        %2465 = vmatmul.mubr.bf16.gmra.mrb[0].mxu0 %v2394
        %v2466 = vpop.f32.mrb[0].mxu0
        %v2467 = vadd.f32 0.0, %v2466
        %v2468 = vpop.f32.mrb[0].mxu0
        %v2469 = vpop.f32.mrb[0].mxu0
        %v2470 = vadd.f32 0.0, %v2469
        %v2471 = vpop.f32.mrb[0].mxu0
        %2472 = vmatprep.mubr.bf16.mxu0 0
        %2473 = vmatmul.mubr.bf16.gmra.mrb[0].mxu0 %v2397
        %v2474 = vpop.f32.mrb[0].mxu0
        %v2475 = vadd.f32 0.0, %v2474
        %v2476 = vpop.f32.mrb[0].mxu0
        %v2477 = vpop.f32.mrb[0].mxu0
        %v2478 = vadd.f32 0.0, %v2477
        %v2479 = vpop.f32.mrb[0].mxu0
        %2480 = vmatprep.mubr.bf16.mxu0 0
        %2481 = vmatmul.mubr.bf16.gmra.mrb[0].mxu0 %v2400
        %v2482 = vpop.f32.mrb[0].mxu0
        %v2483 = vadd.f32 0.0, %v2482
        %v2484 = vpop.f32.mrb[0].mxu0
        %v2485 = vpop.f32.mrb[0].mxu0
        %v2486 = vadd.f32 0.0, %v2485
        %v2487 = vpop.f32.mrb[0].mxu0
        %2488 = vmatprep.mubr.bf16.mxu0 0
        %2489 = vmatmul.mubr.bf16.gmra.mrb[0].mxu0 %v2403
        %v2490 = vpop.f32.mrb[0].mxu0
        %v2491 = vadd.f32 0.0, %v2490
        %v2492 = vpop.f32.mrb[0].mxu0
        %v2493 = vpop.f32.mrb[0].mxu0
        %v2494 = vadd.f32 0.0, %v2493
        %v2495 = vpop.f32.mrb[0].mxu0
        %2496 = vmatprep.mubr.bf16.mxu0 0
        %2497 = vmatmul.mubr.bf16.gmra.mrb[0].mxu0 %v2406
        %v2498 = vpop.f32.mrb[0].mxu0
        %v2499 = vadd.f32 0.0, %v2498
        %v2500 = vpop.f32.mrb[0].mxu0
        %v2501 = vpop.f32.mrb[0].mxu0
        %v2502 = vadd.f32 0.0, %v2501
        %v2503 = vpop.f32.mrb[0].mxu0
        %2504 = vdwg.mxu0
        %v2505 = vadd.f32 %v2239, %v2443
        %v2506 = vadd.f32 %v2240, %v2446
        %v2507 = vadd.f32 %v2241, %v2451
        %v2508 = vadd.f32 %v2242, %v2454
        %v2509 = vadd.f32 %v2243, %v2459
        %v2510 = vadd.f32 %v2244, %v2462
        %v2511 = vadd.f32 %v2245, %v2467
        %v2512 = vadd.f32 %v2246, %v2470
        %v2513 = vadd.f32 %v2247, %v2475
        %v2514 = vadd.f32 %v2248, %v2478
        %v2515 = vadd.f32 %v2249, %v2483
        %v2516 = vadd.f32 %v2250, %v2486
        %v2517 = vadd.f32 %v2251, %v2491
        %v2518 = vadd.f32 %v2252, %v2494
        %v2519 = vadd.f32 %v2253, %v2499
        %v2520 = vadd.f32 %v2254, %v2502
        %s2521 = sadd.s32 0, 2
        %s2522 = smul.u32 %s2521, 3
        %s2523 = smul.addr %s2522, 4
        %s2524 = scalar_lea.vmem [#allocation2], %s2523
        %v2525 = vld [vmem:[%s2524] sm:$0xf]
        %v2526 = vld [vmem:[%s2524 + $0x4] sm:$0xf]
        %v2527 = vld [vmem:[%s2524 + $0xc] sm:$0xf]
        %v2528 = vld [vmem:[%s2524 + $0x10] sm:$0xf]
        %v2529 = vld [vmem:[%s2524 + $0x18] sm:$0xf]
        %v2530 = vld [vmem:[%s2524 + $0x1c] sm:$0xf]
        %v2531 = vld [vmem:[%s2524 + $0x24] sm:$0xf]
        %v2532 = vld [vmem:[%s2524 + $0x28] sm:$0xf]
        %v2533 = vld [vmem:[%s2524 + $0x30] sm:$0xf]
        %v2534 = vld [vmem:[%s2524 + $0x34] sm:$0xf]
        %v2535 = vld [vmem:[%s2524 + $0x3c] sm:$0xf]
        %v2536 = vld [vmem:[%s2524 + $0x40] sm:$0xf]
        %v2537 = vld [vmem:[%s2524 + $0x48] sm:$0xf]
        %v2538 = vld [vmem:[%s2524 + $0x4c] sm:$0xf]
        %v2539 = vld [vmem:[%s2524 + $0x54] sm:$0xf]
        %v2540 = vld [vmem:[%s2524 + $0x58] sm:$0xf]
        %s2541 = scalar_lea.vmem [#allocation6], 96
        %v2542 = vld [vmem:[%s2541] sm:$0xf]
        %v2543 = vld [vmem:[%s2541 + $0x4] sm:$0xf]
        %v2544 = vld [vmem:[%s2541 + $0x8] sm:$0xf]
        %v2545 = vld [vmem:[%s2541 + $0xc] sm:$0xf]
        %v2562 = vunpack.c.l.b16 %v2525
        %v2563 = vunpack.c.l.b16 %v2526
        %v2564 = vunpack.c.l.b16 %v2527
        %v2565 = vunpack.c.l.b16 %v2528
        %v2566 = vunpack.c.l.b16 %v2529
        %v2567 = vunpack.c.l.b16 %v2530
        %v2568 = vunpack.c.l.b16 %v2531
        %v2569 = vunpack.c.l.b16 %v2532
        %v2570 = vunpack.c.l.b16 %v2533
        %v2571 = vunpack.c.l.b16 %v2534
        %v2572 = vunpack.c.l.b16 %v2535
        %v2573 = vunpack.c.l.b16 %v2536
        %v2574 = vunpack.c.l.b16 %v2537
        %v2575 = vunpack.c.l.b16 %v2538
        %v2576 = vunpack.c.l.b16 %v2539
        %v2577 = vunpack.c.l.b16 %v2540
        %v2578 = vpack.c.b16 %v2563, %v2562
        %v2579 = vpack.c.b16 %v2565, %v2564
        %v2580 = vpack.c.b16 %v2567, %v2566
        %v2581 = vpack.c.b16 %v2569, %v2568
        %v2582 = vpack.c.b16 %v2571, %v2570
        %v2583 = vpack.c.b16 %v2573, %v2572
        %v2584 = vpack.c.b16 %v2575, %v2574
        %v2585 = vpack.c.b16 %v2577, %v2576
        %v2590 = vunpack.c.l.b16 %v2542
        %v2591 = vunpack.c.l.b16 %v2543
        %v2592 = vunpack.c.l.b16 %v2544
        %v2593 = vunpack.c.l.b16 %v2545
        %v2594 = vpack.c.b16 %v2591, %v2590
        %v2595 = vpack.c.b16 %v2593, %v2592
        %v2599 = vsel %vm1091, %v2578, 0
        %v2602 = vsel %vm1091, %v2579, 0
        %v2605 = vsel %vm1091, %v2580, 0
        %v2608 = vsel %vm1091, %v2581, 0
        %v2611 = vsel %vm1091, %v2582, 0
        %v2614 = vsel %vm1091, %v2583, 0
        %v2617 = vsel %vm1091, %v2584, 0
        %v2620 = vsel %vm1091, %v2585, 0
        %2622 = vmatprep.subr.bf16.mxu0 0
        %2623 = vmatpush1.bf16.msra.mxu0 %v2594
        %2624 = vmatprep.subr.bf16.mxu0 0
        %2625 = vmatpush1.bf16.msra.mxu0 %v2595
        %2626 = vmatprep.subr.bf16.mxu0 0
        %2627 = vmatpush1.bf16.msra.mxu0 0
        %2628 = vmatprep.subr.bf16.mxu0 0
        %2629 = vmatpush1.bf16.msra.mxu0 0
        %2630 = vmatprep.subr.bf16.mxu0 0
        %2631 = vmatpush1.bf16.msra.mxu0 0
        %2632 = vmatprep.subr.bf16.mxu0 0
        %2633 = vmatpush1.bf16.msra.mxu0 0
        %2634 = vmatprep.subr.bf16.mxu0 0
        %2635 = vmatpush1.bf16.msra.mxu0 0
        %2636 = vmatprep.subr.bf16.mxu0 0
        %2637 = vmatpush1.bf16.msra.mxu0 0
        %2638 = vmatprep.subr.bf16.mxu0 0
        %2639 = vmatpush1.bf16.msra.mxu0 0
        %2640 = vmatprep.subr.bf16.mxu0 0
        %2641 = vmatpush1.bf16.msra.mxu0 0
        %2642 = vmatprep.subr.bf16.mxu0 0
        %2643 = vmatpush1.bf16.msra.mxu0 0
        %2644 = vmatprep.subr.bf16.mxu0 0
        %2645 = vmatpush1.bf16.msra.mxu0 0
        %2646 = vmatprep.subr.bf16.mxu0 0
        %2647 = vmatpush1.bf16.msra.mxu0 0
        %2648 = vmatprep.subr.bf16.mxu0 0
        %2649 = vmatpush1.bf16.msra.mxu0 0
        %2650 = vmatprep.subr.bf16.mxu0 0
        %2651 = vmatpush1.bf16.msra.mxu0 0
        %2652 = vmatprep.subr.bf16.mxu0 0
        %2653 = vmatpush1.bf16.msra.mxu0 0
        %2654 = vmatprep.mubr.bf16.mxu0 0
        %2655 = vmatmul.mubr.bf16.gmra.mrb[0].mxu0 %v2599
        %v2656 = vpop.f32.mrb[0].mxu0
        %v2657 = vadd.f32 0.0, %v2656
        %v2658 = vpop.f32.mrb[0].mxu0
        %v2659 = vpop.f32.mrb[0].mxu0
        %v2660 = vadd.f32 0.0, %v2659
        %v2661 = vpop.f32.mrb[0].mxu0
        %2662 = vmatprep.mubr.bf16.mxu0 0
        %2663 = vmatmul.mubr.bf16.gmra.mrb[0].mxu0 %v2602
        %v2664 = vpop.f32.mrb[0].mxu0
        %v2665 = vadd.f32 0.0, %v2664
        %v2666 = vpop.f32.mrb[0].mxu0
        %v2667 = vpop.f32.mrb[0].mxu0
        %v2668 = vadd.f32 0.0, %v2667
        %v2669 = vpop.f32.mrb[0].mxu0
        %2670 = vmatprep.mubr.bf16.mxu0 0
        %2671 = vmatmul.mubr.bf16.gmra.mrb[0].mxu0 %v2605
        %v2672 = vpop.f32.mrb[0].mxu0
        %v2673 = vadd.f32 0.0, %v2672
        %v2674 = vpop.f32.mrb[0].mxu0
        %v2675 = vpop.f32.mrb[0].mxu0
        %v2676 = vadd.f32 0.0, %v2675
        %v2677 = vpop.f32.mrb[0].mxu0
        %2678 = vmatprep.mubr.bf16.mxu0 0
        %2679 = vmatmul.mubr.bf16.gmra.mrb[0].mxu0 %v2608
        %v2680 = vpop.f32.mrb[0].mxu0
        %v2681 = vadd.f32 0.0, %v2680
        %v2682 = vpop.f32.mrb[0].mxu0
        %v2683 = vpop.f32.mrb[0].mxu0
        %v2684 = vadd.f32 0.0, %v2683
        %v2685 = vpop.f32.mrb[0].mxu0
        %2686 = vmatprep.mubr.bf16.mxu0 0
        %2687 = vmatmul.mubr.bf16.gmra.mrb[0].mxu0 %v2611
        %v2688 = vpop.f32.mrb[0].mxu0
        %v2689 = vadd.f32 0.0, %v2688
        %v2690 = vpop.f32.mrb[0].mxu0
        %v2691 = vpop.f32.mrb[0].mxu0
        %v2692 = vadd.f32 0.0, %v2691
        %v2693 = vpop.f32.mrb[0].mxu0
        %2694 = vmatprep.mubr.bf16.mxu0 0
        %2695 = vmatmul.mubr.bf16.gmra.mrb[0].mxu0 %v2614
        %v2696 = vpop.f32.mrb[0].mxu0
        %v2697 = vadd.f32 0.0, %v2696
        %v2698 = vpop.f32.mrb[0].mxu0
        %v2699 = vpop.f32.mrb[0].mxu0
        %v2700 = vadd.f32 0.0, %v2699
        %v2701 = vpop.f32.mrb[0].mxu0
        %2702 = vmatprep.mubr.bf16.mxu0 0
        %2703 = vmatmul.mubr.bf16.gmra.mrb[0].mxu0 %v2617
        %v2704 = vpop.f32.mrb[0].mxu0
        %v2705 = vadd.f32 0.0, %v2704
        %v2706 = vpop.f32.mrb[0].mxu0
        %v2707 = vpop.f32.mrb[0].mxu0
        %v2708 = vadd.f32 0.0, %v2707
        %v2709 = vpop.f32.mrb[0].mxu0
        %2710 = vmatprep.mubr.bf16.mxu0 0
        %2711 = vmatmul.mubr.bf16.gmra.mrb[0].mxu0 %v2620
        %v2712 = vpop.f32.mrb[0].mxu0
        %v2713 = vadd.f32 0.0, %v2712
        %v2714 = vpop.f32.mrb[0].mxu0
        %v2715 = vpop.f32.mrb[0].mxu0
        %v2716 = vadd.f32 0.0, %v2715
        %v2717 = vpop.f32.mrb[0].mxu0
        %2718 = vdwg.mxu0
        %v2719 = vadd.f32 %v2505, %v2657
        %v2720 = vadd.f32 %v2506, %v2660
        %v2721 = vadd.f32 %v2507, %v2665
        %v2722 = vadd.f32 %v2508, %v2668
        %v2723 = vadd.f32 %v2509, %v2673
        %v2724 = vadd.f32 %v2510, %v2676
        %v2725 = vadd.f32 %v2511, %v2681
        %v2726 = vadd.f32 %v2512, %v2684
        %v2727 = vadd.f32 %v2513, %v2689
        %v2728 = vadd.f32 %v2514, %v2692
        %v2729 = vadd.f32 %v2515, %v2697
        %v2730 = vadd.f32 %v2516, %v2700
        %v2731 = vadd.f32 %v2517, %v2705
        %v2732 = vadd.f32 %v2518, %v2708
        %v2733 = vadd.f32 %v2519, %v2713
        %v2734 = vadd.f32 %v2520, %v2716
        %v2735 = vld [vmem:[%s2524] sm:$0xf]
        %v2736 = vld [vmem:[%s2524 + $0x4] sm:$0xf]
        %v2737 = vld [vmem:[%s2524 + $0x8] sm:$0x1]
        %v2738 = vld [vmem:[%s2524 + $0xc] sm:$0xf]
        %v2739 = vld [vmem:[%s2524 + $0x10] sm:$0xf]
        %v2740 = vld [vmem:[%s2524 + $0x14] sm:$0x1]
        %v2741 = vld [vmem:[%s2524 + $0x18] sm:$0xf]
        %v2742 = vld [vmem:[%s2524 + $0x1c] sm:$0xf]
        %v2743 = vld [vmem:[%s2524 + $0x20] sm:$0x1]
        %v2744 = vld [vmem:[%s2524 + $0x24] sm:$0xf]
        %v2745 = vld [vmem:[%s2524 + $0x28] sm:$0xf]
        %v2746 = vld [vmem:[%s2524 + $0x2c] sm:$0x1]
        %v2747 = vld [vmem:[%s2524 + $0x30] sm:$0xf]
        %v2748 = vld [vmem:[%s2524 + $0x34] sm:$0xf]
        %v2749 = vld [vmem:[%s2524 + $0x38] sm:$0x1]
        %v2750 = vld [vmem:[%s2524 + $0x3c] sm:$0xf]
        %v2751 = vld [vmem:[%s2524 + $0x40] sm:$0xf]
        %v2752 = vld [vmem:[%s2524 + $0x44] sm:$0x1]
        %v2753 = vld [vmem:[%s2524 + $0x48] sm:$0xf]
        %v2754 = vld [vmem:[%s2524 + $0x4c] sm:$0xf]
        %v2755 = vld [vmem:[%s2524 + $0x50] sm:$0x1]
        %v2756 = vld [vmem:[%s2524 + $0x54] sm:$0xf]
        %v2757 = vld [vmem:[%s2524 + $0x58] sm:$0xf]
        %v2758 = vld [vmem:[%s2524 + $0x5c] sm:$0x1]
        %v2760 = vshrl.u32 %v2735, 16
        %v2762 = vrot.slane %v2760, 4
        %v2763 = vshll.u32 %v2735, 16
        %v2765 = vrot.slane %v2763, 5
        %v2766 = vor.u32 %v2762, %v2765
        %v2767 = vrot.slane %v2766, 4
        %v2769 = vshll.u32 %v2736, 16
        %v2771 = vrot.slane %v2769, 5
        %v2772 = vsel %vm857, %v2767, %v2771
        %v2773 = vshrl.u32 %v2736, 16
        %v2775 = vrot.slane %v2773, 4
        %v2776 = vor.u32 %v2775, %v2771
        %v2777 = vrot.slane %v2776, 4
        %v2779 = vshll.u32 %v2737, 16
        %v2781 = vrot.slane %v2779, 5
        %v2782 = vsel %vm857, %v2777, %v2781
        %v2784 = vshrl.u32 %v2738, 16
        %v2786 = vrot.slane %v2784, 4
        %v2787 = vshll.u32 %v2738, 16
        %v2789 = vrot.slane %v2787, 5
        %v2790 = vor.u32 %v2786, %v2789
        %v2791 = vrot.slane %v2790, 4
        %v2793 = vshll.u32 %v2739, 16
        %v2795 = vrot.slane %v2793, 5
        %v2796 = vsel %vm857, %v2791, %v2795
        %v2797 = vshrl.u32 %v2739, 16
        %v2799 = vrot.slane %v2797, 4
        %v2800 = vor.u32 %v2799, %v2795
        %v2801 = vrot.slane %v2800, 4
        %v2803 = vshll.u32 %v2740, 16
        %v2805 = vrot.slane %v2803, 5
        %v2806 = vsel %vm857, %v2801, %v2805
        %v2808 = vshrl.u32 %v2741, 16
        %v2810 = vrot.slane %v2808, 4
        %v2811 = vshll.u32 %v2741, 16
        %v2813 = vrot.slane %v2811, 5
        %v2814 = vor.u32 %v2810, %v2813
        %v2815 = vrot.slane %v2814, 4
        %v2817 = vshll.u32 %v2742, 16
        %v2819 = vrot.slane %v2817, 5
        %v2820 = vsel %vm857, %v2815, %v2819
        %v2821 = vshrl.u32 %v2742, 16
        %v2823 = vrot.slane %v2821, 4
        %v2824 = vor.u32 %v2823, %v2819
        %v2825 = vrot.slane %v2824, 4
        %v2827 = vshll.u32 %v2743, 16
        %v2829 = vrot.slane %v2827, 5
        %v2830 = vsel %vm857, %v2825, %v2829
        %v2832 = vshrl.u32 %v2744, 16
        %v2834 = vrot.slane %v2832, 4
        %v2835 = vshll.u32 %v2744, 16
        %v2837 = vrot.slane %v2835, 5
        %v2838 = vor.u32 %v2834, %v2837
        %v2839 = vrot.slane %v2838, 4
        %v2841 = vshll.u32 %v2745, 16
        %v2843 = vrot.slane %v2841, 5
        %v2844 = vsel %vm857, %v2839, %v2843
        %v2845 = vshrl.u32 %v2745, 16
        %v2847 = vrot.slane %v2845, 4
        %v2848 = vor.u32 %v2847, %v2843
        %v2849 = vrot.slane %v2848, 4
        %v2851 = vshll.u32 %v2746, 16
        %v2853 = vrot.slane %v2851, 5
        %v2854 = vsel %vm857, %v2849, %v2853
        %v2856 = vshrl.u32 %v2747, 16
        %v2858 = vrot.slane %v2856, 4
        %v2859 = vshll.u32 %v2747, 16
        %v2861 = vrot.slane %v2859, 5
        %v2862 = vor.u32 %v2858, %v2861
        %v2863 = vrot.slane %v2862, 4
        %v2865 = vshll.u32 %v2748, 16
        %v2867 = vrot.slane %v2865, 5
        %v2868 = vsel %vm857, %v2863, %v2867
        %v2869 = vshrl.u32 %v2748, 16
        %v2871 = vrot.slane %v2869, 4
        %v2872 = vor.u32 %v2871, %v2867
        %v2873 = vrot.slane %v2872, 4
        %v2875 = vshll.u32 %v2749, 16
        %v2877 = vrot.slane %v2875, 5
        %v2878 = vsel %vm857, %v2873, %v2877
        %v2880 = vshrl.u32 %v2750, 16
        %v2882 = vrot.slane %v2880, 4
        %v2883 = vshll.u32 %v2750, 16
        %v2885 = vrot.slane %v2883, 5
        %v2886 = vor.u32 %v2882, %v2885
        %v2887 = vrot.slane %v2886, 4
        %v2889 = vshll.u32 %v2751, 16
        %v2891 = vrot.slane %v2889, 5
        %v2892 = vsel %vm857, %v2887, %v2891
        %v2893 = vshrl.u32 %v2751, 16
        %v2895 = vrot.slane %v2893, 4
        %v2896 = vor.u32 %v2895, %v2891
        %v2897 = vrot.slane %v2896, 4
        %v2899 = vshll.u32 %v2752, 16
        %v2901 = vrot.slane %v2899, 5
        %v2902 = vsel %vm857, %v2897, %v2901
        %v2904 = vshrl.u32 %v2753, 16
        %v2906 = vrot.slane %v2904, 4
        %v2907 = vshll.u32 %v2753, 16
        %v2909 = vrot.slane %v2907, 5
        %v2910 = vor.u32 %v2906, %v2909
        %v2911 = vrot.slane %v2910, 4
        %v2913 = vshll.u32 %v2754, 16
        %v2915 = vrot.slane %v2913, 5
        %v2916 = vsel %vm857, %v2911, %v2915
        %v2917 = vshrl.u32 %v2754, 16
        %v2919 = vrot.slane %v2917, 4
        %v2920 = vor.u32 %v2919, %v2915
        %v2921 = vrot.slane %v2920, 4
        %v2923 = vshll.u32 %v2755, 16
        %v2925 = vrot.slane %v2923, 5
        %v2926 = vsel %vm857, %v2921, %v2925
        %v2928 = vshrl.u32 %v2756, 16
        %v2930 = vrot.slane %v2928, 4
        %v2931 = vshll.u32 %v2756, 16
        %v2933 = vrot.slane %v2931, 5
        %v2934 = vor.u32 %v2930, %v2933
        %v2935 = vrot.slane %v2934, 4
        %v2937 = vshll.u32 %v2757, 16
        %v2939 = vrot.slane %v2937, 5
        %v2940 = vsel %vm857, %v2935, %v2939
        %v2941 = vshrl.u32 %v2757, 16
        %v2943 = vrot.slane %v2941, 4
        %v2944 = vor.u32 %v2943, %v2939
        %v2945 = vrot.slane %v2944, 4
        %v2947 = vshll.u32 %v2758, 16
        %v2949 = vrot.slane %v2947, 5
        %v2950 = vsel %vm857, %v2945, %v2949
        %s2951 = scalar_lea.vmem [#allocation6], 112
        %v2952 = vld [vmem:[%s2951] sm:$0xf]
        %v2953 = vld [vmem:[%s2951 + $0x4] sm:$0xf]
        %v2954 = vld [vmem:[%s2951 + $0x8] sm:$0xf]
        %v2955 = vld [vmem:[%s2951 + $0xc] sm:$0xf]
        %v2956 = vunpack.c.l.b16 %v2772
        %v2957 = vunpack.c.l.b16 %v2782
        %v2958 = vunpack.c.l.b16 %v2796
        %v2959 = vunpack.c.l.b16 %v2806
        %v2960 = vunpack.c.l.b16 %v2820
        %v2961 = vunpack.c.l.b16 %v2830
        %v2962 = vunpack.c.l.b16 %v2844
        %v2963 = vunpack.c.l.b16 %v2854
        %v2964 = vunpack.c.l.b16 %v2868
        %v2965 = vunpack.c.l.b16 %v2878
        %v2966 = vunpack.c.l.b16 %v2892
        %v2967 = vunpack.c.l.b16 %v2902
        %v2968 = vunpack.c.l.b16 %v2916
        %v2969 = vunpack.c.l.b16 %v2926
        %v2970 = vunpack.c.l.b16 %v2940
        %v2971 = vunpack.c.l.b16 %v2950
        %v2972 = vpack.c.b16 %v2957, %v2956
        %v2973 = vpack.c.b16 %v2959, %v2958
        %v2974 = vpack.c.b16 %v2961, %v2960
        %v2975 = vpack.c.b16 %v2963, %v2962
        %v2976 = vpack.c.b16 %v2965, %v2964
        %v2977 = vpack.c.b16 %v2967, %v2966
        %v2978 = vpack.c.b16 %v2969, %v2968
        %v2979 = vpack.c.b16 %v2971, %v2970
        %v2984 = vunpack.c.l.b16 %v2952
        %v2985 = vunpack.c.l.b16 %v2953
        %v2986 = vunpack.c.l.b16 %v2954
        %v2987 = vunpack.c.l.b16 %v2955
        %v2988 = vpack.c.b16 %v2985, %v2984
        %v2989 = vpack.c.b16 %v2987, %v2986
        %v2993 = vsel %vm1091, %v2972, 0
        %v2996 = vsel %vm1091, %v2973, 0
        %v2999 = vsel %vm1091, %v2974, 0
        %v3002 = vsel %vm1091, %v2975, 0
        %v3005 = vsel %vm1091, %v2976, 0
        %v3008 = vsel %vm1091, %v2977, 0
        %v3011 = vsel %vm1091, %v2978, 0
        %v3014 = vsel %vm1091, %v2979, 0
        %3016 = vmatprep.subr.bf16.mxu0 0
        %3017 = vmatpush1.bf16.msra.mxu0 %v2988
        %3018 = vmatprep.subr.bf16.mxu0 0
        %3019 = vmatpush1.bf16.msra.mxu0 %v2989
        %3020 = vmatprep.subr.bf16.mxu0 0
        %3021 = vmatpush1.bf16.msra.mxu0 0
        %3022 = vmatprep.subr.bf16.mxu0 0
        %3023 = vmatpush1.bf16.msra.mxu0 0
        %3024 = vmatprep.subr.bf16.mxu0 0
        %3025 = vmatpush1.bf16.msra.mxu0 0
        %3026 = vmatprep.subr.bf16.mxu0 0
        %3027 = vmatpush1.bf16.msra.mxu0 0
        %3028 = vmatprep.subr.bf16.mxu0 0
        %3029 = vmatpush1.bf16.msra.mxu0 0
        %3030 = vmatprep.subr.bf16.mxu0 0
        %3031 = vmatpush1.bf16.msra.mxu0 0
        %3032 = vmatprep.subr.bf16.mxu0 0
        %3033 = vmatpush1.bf16.msra.mxu0 0
        %3034 = vmatprep.subr.bf16.mxu0 0
        %3035 = vmatpush1.bf16.msra.mxu0 0
        %3036 = vmatprep.subr.bf16.mxu0 0
        %3037 = vmatpush1.bf16.msra.mxu0 0
        %3038 = vmatprep.subr.bf16.mxu0 0
        %3039 = vmatpush1.bf16.msra.mxu0 0
        %3040 = vmatprep.subr.bf16.mxu0 0
        %3041 = vmatpush1.bf16.msra.mxu0 0
        %3042 = vmatprep.subr.bf16.mxu0 0
        %3043 = vmatpush1.bf16.msra.mxu0 0
        %3044 = vmatprep.subr.bf16.mxu0 0
        %3045 = vmatpush1.bf16.msra.mxu0 0
        %3046 = vmatprep.subr.bf16.mxu0 0
        %3047 = vmatpush1.bf16.msra.mxu0 0
        %3048 = vmatprep.mubr.bf16.mxu0 0
        %3049 = vmatmul.mubr.bf16.gmra.mrb[0].mxu0 %v2993
        %v3050 = vpop.f32.mrb[0].mxu0
        %v3051 = vadd.f32 0.0, %v3050
        %v3052 = vpop.f32.mrb[0].mxu0
        %v3053 = vpop.f32.mrb[0].mxu0
        %v3054 = vadd.f32 0.0, %v3053
        %v3055 = vpop.f32.mrb[0].mxu0
        %3056 = vmatprep.mubr.bf16.mxu0 0
        %3057 = vmatmul.mubr.bf16.gmra.mrb[0].mxu0 %v2996
        %v3058 = vpop.f32.mrb[0].mxu0
        %v3059 = vadd.f32 0.0, %v3058
        %v3060 = vpop.f32.mrb[0].mxu0
        %v3061 = vpop.f32.mrb[0].mxu0
        %v3062 = vadd.f32 0.0, %v3061
        %v3063 = vpop.f32.mrb[0].mxu0
        %3064 = vmatprep.mubr.bf16.mxu0 0
        %3065 = vmatmul.mubr.bf16.gmra.mrb[0].mxu0 %v2999
        %v3066 = vpop.f32.mrb[0].mxu0
        %v3067 = vadd.f32 0.0, %v3066
        %v3068 = vpop.f32.mrb[0].mxu0
        %v3069 = vpop.f32.mrb[0].mxu0
        %v3070 = vadd.f32 0.0, %v3069
        %v3071 = vpop.f32.mrb[0].mxu0
        %3072 = vmatprep.mubr.bf16.mxu0 0
        %3073 = vmatmul.mubr.bf16.gmra.mrb[0].mxu0 %v3002
        %v3074 = vpop.f32.mrb[0].mxu0
        %v3075 = vadd.f32 0.0, %v3074
        %v3076 = vpop.f32.mrb[0].mxu0
        %v3077 = vpop.f32.mrb[0].mxu0
        %v3078 = vadd.f32 0.0, %v3077
        %v3079 = vpop.f32.mrb[0].mxu0
        %3080 = vmatprep.mubr.bf16.mxu0 0
        %3081 = vmatmul.mubr.bf16.gmra.mrb[0].mxu0 %v3005
        %v3082 = vpop.f32.mrb[0].mxu0
        %v3083 = vadd.f32 0.0, %v3082
        %v3084 = vpop.f32.mrb[0].mxu0
        %v3085 = vpop.f32.mrb[0].mxu0
        %v3086 = vadd.f32 0.0, %v3085
        %v3087 = vpop.f32.mrb[0].mxu0
        %3088 = vmatprep.mubr.bf16.mxu0 0
        %3089 = vmatmul.mubr.bf16.gmra.mrb[0].mxu0 %v3008
        %v3090 = vpop.f32.mrb[0].mxu0
        %v3091 = vadd.f32 0.0, %v3090
        %v3092 = vpop.f32.mrb[0].mxu0
        %v3093 = vpop.f32.mrb[0].mxu0
        %v3094 = vadd.f32 0.0, %v3093
        %v3095 = vpop.f32.mrb[0].mxu0
        %3096 = vmatprep.mubr.bf16.mxu0 0
        %3097 = vmatmul.mubr.bf16.gmra.mrb[0].mxu0 %v3011
        %v3098 = vpop.f32.mrb[0].mxu0
        %v3099 = vadd.f32 0.0, %v3098
        %v3100 = vpop.f32.mrb[0].mxu0
        %v3101 = vpop.f32.mrb[0].mxu0
        %v3102 = vadd.f32 0.0, %v3101
        %v3103 = vpop.f32.mrb[0].mxu0
        %3104 = vmatprep.mubr.bf16.mxu0 0
        %3105 = vmatmul.mubr.bf16.gmra.mrb[0].mxu0 %v3014
        %v3106 = vpop.f32.mrb[0].mxu0
        %v3107 = vadd.f32 0.0, %v3106
        %v3108 = vpop.f32.mrb[0].mxu0
        %v3109 = vpop.f32.mrb[0].mxu0
        %v3110 = vadd.f32 0.0, %v3109
        %v3111 = vpop.f32.mrb[0].mxu0
        %3112 = vdwg.mxu0
        %v3113 = vadd.f32 %v2719, %v3051
        %v3114 = vadd.f32 %v2720, %v3054
        %v3115 = vadd.f32 %v2721, %v3059
        %v3116 = vadd.f32 %v2722, %v3062
        %v3117 = vadd.f32 %v2723, %v3067
        %v3118 = vadd.f32 %v2724, %v3070
        %v3119 = vadd.f32 %v2725, %v3075
        %v3120 = vadd.f32 %v2726, %v3078
        %v3121 = vadd.f32 %v2727, %v3083
        %v3122 = vadd.f32 %v2728, %v3086
        %v3123 = vadd.f32 %v2729, %v3091
        %v3124 = vadd.f32 %v2730, %v3094
        %v3125 = vadd.f32 %v2731, %v3099
        %v3126 = vadd.f32 %v2732, %v3102
        %v3127 = vadd.f32 %v2733, %v3107
        %v3128 = vadd.f32 %v2734, %v3110
        %v3129 = vld [vmem:[%s2524] sm:$0xe]
        %v3130 = vld [vmem:[%s2524 + $0xc] sm:$0xe]
        %v3131 = vld [vmem:[%s2524 + $0x18] sm:$0xe]
        %v3132 = vld [vmem:[%s2524 + $0x24] sm:$0xe]
        %v3133 = vld [vmem:[%s2524 + $0x30] sm:$0xe]
        %v3134 = vld [vmem:[%s2524 + $0x3c] sm:$0xe]
        %v3135 = vld [vmem:[%s2524 + $0x48] sm:$0xe]
        %v3136 = vld [vmem:[%s2524 + $0x54] sm:$0xe]
        %v3161 = vrot.slane %v3129, 5
        %v3162 = vrot.slane %v3161, 4
        %v3163 = vrot.slane %v2736, 5
        %v3164 = vsel %vm1412, %v3162, %v3163
        %v3165 = vrot.slane %v3163, 4
        %v3166 = vrot.slane %v2737, 5
        %v3167 = vsel %vm1412, %v3165, %v3166
        %v3168 = vrot.slane %v3130, 5
        %v3169 = vrot.slane %v3168, 4
        %v3170 = vrot.slane %v2739, 5
        %v3171 = vsel %vm1412, %v3169, %v3170
        %v3172 = vrot.slane %v3170, 4
        %v3173 = vrot.slane %v2740, 5
        %v3174 = vsel %vm1412, %v3172, %v3173
        %v3175 = vrot.slane %v3131, 5
        %v3176 = vrot.slane %v3175, 4
        %v3177 = vrot.slane %v2742, 5
        %v3178 = vsel %vm1412, %v3176, %v3177
        %v3179 = vrot.slane %v3177, 4
        %v3180 = vrot.slane %v2743, 5
        %v3181 = vsel %vm1412, %v3179, %v3180
        %v3182 = vrot.slane %v3132, 5
        %v3183 = vrot.slane %v3182, 4
        %v3184 = vrot.slane %v2745, 5
        %v3185 = vsel %vm1412, %v3183, %v3184
        %v3186 = vrot.slane %v3184, 4
        %v3187 = vrot.slane %v2746, 5
        %v3188 = vsel %vm1412, %v3186, %v3187
        %v3189 = vrot.slane %v3133, 5
        %v3190 = vrot.slane %v3189, 4
        %v3191 = vrot.slane %v2748, 5
        %v3192 = vsel %vm1412, %v3190, %v3191
        %v3193 = vrot.slane %v3191, 4
        %v3194 = vrot.slane %v2749, 5
        %v3195 = vsel %vm1412, %v3193, %v3194
        %v3196 = vrot.slane %v3134, 5
        %v3197 = vrot.slane %v3196, 4
        %v3198 = vrot.slane %v2751, 5
        %v3199 = vsel %vm1412, %v3197, %v3198
        %v3200 = vrot.slane %v3198, 4
        %v3201 = vrot.slane %v2752, 5
        %v3202 = vsel %vm1412, %v3200, %v3201
        %v3203 = vrot.slane %v3135, 5
        %v3204 = vrot.slane %v3203, 4
        %v3205 = vrot.slane %v2754, 5
        %v3206 = vsel %vm1412, %v3204, %v3205
        %v3207 = vrot.slane %v3205, 4
        %v3208 = vrot.slane %v2755, 5
        %v3209 = vsel %vm1412, %v3207, %v3208
        %v3210 = vrot.slane %v3136, 5
        %v3211 = vrot.slane %v3210, 4
        %v3212 = vrot.slane %v2757, 5
        %v3213 = vsel %vm1412, %v3211, %v3212
        %v3214 = vrot.slane %v3212, 4
        %v3215 = vrot.slane %v2758, 5
        %v3216 = vsel %vm1412, %v3214, %v3215
        %s3217 = scalar_lea.vmem [#allocation6], 128
        %v3218 = vld [vmem:[%s3217] sm:$0xf]
        %v3219 = vld [vmem:[%s3217 + $0x4] sm:$0xf]
        %v3220 = vld [vmem:[%s3217 + $0x8] sm:$0xf]
        %v3221 = vld [vmem:[%s3217 + $0xc] sm:$0xf]
        %v3222 = vunpack.c.l.b16 %v3164
        %v3223 = vunpack.c.l.b16 %v3167
        %v3224 = vunpack.c.l.b16 %v3171
        %v3225 = vunpack.c.l.b16 %v3174
        %v3226 = vunpack.c.l.b16 %v3178
        %v3227 = vunpack.c.l.b16 %v3181
        %v3228 = vunpack.c.l.b16 %v3185
        %v3229 = vunpack.c.l.b16 %v3188
        %v3230 = vunpack.c.l.b16 %v3192
        %v3231 = vunpack.c.l.b16 %v3195
        %v3232 = vunpack.c.l.b16 %v3199
        %v3233 = vunpack.c.l.b16 %v3202
        %v3234 = vunpack.c.l.b16 %v3206
        %v3235 = vunpack.c.l.b16 %v3209
        %v3236 = vunpack.c.l.b16 %v3213
        %v3237 = vunpack.c.l.b16 %v3216
        %v3238 = vpack.c.b16 %v3223, %v3222
        %v3239 = vpack.c.b16 %v3225, %v3224
        %v3240 = vpack.c.b16 %v3227, %v3226
        %v3241 = vpack.c.b16 %v3229, %v3228
        %v3242 = vpack.c.b16 %v3231, %v3230
        %v3243 = vpack.c.b16 %v3233, %v3232
        %v3244 = vpack.c.b16 %v3235, %v3234
        %v3245 = vpack.c.b16 %v3237, %v3236
        %v3250 = vunpack.c.l.b16 %v3218
        %v3251 = vunpack.c.l.b16 %v3219
        %v3252 = vunpack.c.l.b16 %v3220
        %v3253 = vunpack.c.l.b16 %v3221
        %v3254 = vpack.c.b16 %v3251, %v3250
        %v3255 = vpack.c.b16 %v3253, %v3252
        %v3259 = vsel %vm1091, %v3238, 0
        %v3262 = vsel %vm1091, %v3239, 0
        %v3265 = vsel %vm1091, %v3240, 0
        %v3268 = vsel %vm1091, %v3241, 0
        %v3271 = vsel %vm1091, %v3242, 0
        %v3274 = vsel %vm1091, %v3243, 0
        %v3277 = vsel %vm1091, %v3244, 0
        %v3280 = vsel %vm1091, %v3245, 0
        %3282 = vmatprep.subr.bf16.mxu0 0
        %3283 = vmatpush1.bf16.msra.mxu0 %v3254
        %3284 = vmatprep.subr.bf16.mxu0 0
        %3285 = vmatpush1.bf16.msra.mxu0 %v3255
        %3286 = vmatprep.subr.bf16.mxu0 0
        %3287 = vmatpush1.bf16.msra.mxu0 0
        %3288 = vmatprep.subr.bf16.mxu0 0
        %3289 = vmatpush1.bf16.msra.mxu0 0
        %3290 = vmatprep.subr.bf16.mxu0 0
        %3291 = vmatpush1.bf16.msra.mxu0 0
        %3292 = vmatprep.subr.bf16.mxu0 0
        %3293 = vmatpush1.bf16.msra.mxu0 0
        %3294 = vmatprep.subr.bf16.mxu0 0
        %3295 = vmatpush1.bf16.msra.mxu0 0
        %3296 = vmatprep.subr.bf16.mxu0 0
        %3297 = vmatpush1.bf16.msra.mxu0 0
        %3298 = vmatprep.subr.bf16.mxu0 0
        %3299 = vmatpush1.bf16.msra.mxu0 0
        %3300 = vmatprep.subr.bf16.mxu0 0
        %3301 = vmatpush1.bf16.msra.mxu0 0
        %3302 = vmatprep.subr.bf16.mxu0 0
        %3303 = vmatpush1.bf16.msra.mxu0 0
        %3304 = vmatprep.subr.bf16.mxu0 0
        %3305 = vmatpush1.bf16.msra.mxu0 0
        %3306 = vmatprep.subr.bf16.mxu0 0
        %3307 = vmatpush1.bf16.msra.mxu0 0
        %3308 = vmatprep.subr.bf16.mxu0 0
        %3309 = vmatpush1.bf16.msra.mxu0 0
        %3310 = vmatprep.subr.bf16.mxu0 0
        %3311 = vmatpush1.bf16.msra.mxu0 0
        %3312 = vmatprep.subr.bf16.mxu0 0
        %3313 = vmatpush1.bf16.msra.mxu0 0
        %3314 = vmatprep.mubr.bf16.mxu0 0
        %3315 = vmatmul.mubr.bf16.gmra.mrb[0].mxu0 %v3259
        %v3316 = vpop.f32.mrb[0].mxu0
        %v3317 = vadd.f32 0.0, %v3316
        %v3318 = vpop.f32.mrb[0].mxu0
        %v3319 = vpop.f32.mrb[0].mxu0
        %v3320 = vadd.f32 0.0, %v3319
        %v3321 = vpop.f32.mrb[0].mxu0
        %3322 = vmatprep.mubr.bf16.mxu0 0
        %3323 = vmatmul.mubr.bf16.gmra.mrb[0].mxu0 %v3262
        %v3324 = vpop.f32.mrb[0].mxu0
        %v3325 = vadd.f32 0.0, %v3324
        %v3326 = vpop.f32.mrb[0].mxu0
        %v3327 = vpop.f32.mrb[0].mxu0
        %v3328 = vadd.f32 0.0, %v3327
        %v3329 = vpop.f32.mrb[0].mxu0
        %3330 = vmatprep.mubr.bf16.mxu0 0
        %3331 = vmatmul.mubr.bf16.gmra.mrb[0].mxu0 %v3265
        %v3332 = vpop.f32.mrb[0].mxu0
        %v3333 = vadd.f32 0.0, %v3332
        %v3334 = vpop.f32.mrb[0].mxu0
        %v3335 = vpop.f32.mrb[0].mxu0
        %v3336 = vadd.f32 0.0, %v3335
        %v3337 = vpop.f32.mrb[0].mxu0
        %3338 = vmatprep.mubr.bf16.mxu0 0
        %3339 = vmatmul.mubr.bf16.gmra.mrb[0].mxu0 %v3268
        %v3340 = vpop.f32.mrb[0].mxu0
        %v3341 = vadd.f32 0.0, %v3340
        %v3342 = vpop.f32.mrb[0].mxu0
        %v3343 = vpop.f32.mrb[0].mxu0
        %v3344 = vadd.f32 0.0, %v3343
        %v3345 = vpop.f32.mrb[0].mxu0
        %3346 = vmatprep.mubr.bf16.mxu0 0
        %3347 = vmatmul.mubr.bf16.gmra.mrb[0].mxu0 %v3271
        %v3348 = vpop.f32.mrb[0].mxu0
        %v3349 = vadd.f32 0.0, %v3348
        %v3350 = vpop.f32.mrb[0].mxu0
        %v3351 = vpop.f32.mrb[0].mxu0
        %v3352 = vadd.f32 0.0, %v3351
        %v3353 = vpop.f32.mrb[0].mxu0
        %3354 = vmatprep.mubr.bf16.mxu0 0
        %3355 = vmatmul.mubr.bf16.gmra.mrb[0].mxu0 %v3274
        %v3356 = vpop.f32.mrb[0].mxu0
        %v3357 = vadd.f32 0.0, %v3356
        %v3358 = vpop.f32.mrb[0].mxu0
        %v3359 = vpop.f32.mrb[0].mxu0
        %v3360 = vadd.f32 0.0, %v3359
        %v3361 = vpop.f32.mrb[0].mxu0
        %3362 = vmatprep.mubr.bf16.mxu0 0
        %3363 = vmatmul.mubr.bf16.gmra.mrb[0].mxu0 %v3277
        %v3364 = vpop.f32.mrb[0].mxu0
        %v3365 = vadd.f32 0.0, %v3364
        %v3366 = vpop.f32.mrb[0].mxu0
        %v3367 = vpop.f32.mrb[0].mxu0
        %v3368 = vadd.f32 0.0, %v3367
        %v3369 = vpop.f32.mrb[0].mxu0
        %3370 = vmatprep.mubr.bf16.mxu0 0
        %3371 = vmatmul.mubr.bf16.gmra.mrb[0].mxu0 %v3280
        %v3372 = vpop.f32.mrb[0].mxu0
        %v3373 = vadd.f32 0.0, %v3372
        %v3374 = vpop.f32.mrb[0].mxu0
        %v3375 = vpop.f32.mrb[0].mxu0
        %v3376 = vadd.f32 0.0, %v3375
        %v3377 = vpop.f32.mrb[0].mxu0
        %3378 = vdwg.mxu0
        %v3379 = vadd.f32 %v3113, %v3317
        %v3380 = vadd.f32 %v3114, %v3320
        %v3381 = vadd.f32 %v3115, %v3325
        %v3382 = vadd.f32 %v3116, %v3328
        %v3383 = vadd.f32 %v3117, %v3333
        %v3384 = vadd.f32 %v3118, %v3336
        %v3385 = vadd.f32 %v3119, %v3341
        %v3386 = vadd.f32 %v3120, %v3344
        %v3387 = vadd.f32 %v3121, %v3349
        %v3388 = vadd.f32 %v3122, %v3352
        %v3389 = vadd.f32 %v3123, %v3357
        %v3390 = vadd.f32 %v3124, %v3360
        %v3391 = vadd.f32 %v3125, %v3365
        %v3392 = vadd.f32 %v3126, %v3368
        %v3393 = vadd.f32 %v3127, %v3373
        %v3394 = vadd.f32 %v3128, %v3376
        %s3395 = smul.u32 0, 16
        %s3396 = scalar_lea.vmem %s197, %s3395 [#allocation8]
        %3397 = vst [vmem:[%s3396] sm:$0xff] %v3379
        %3398 = vst [vmem:[%s3396 + $0x8] sm:$0xff] %v3380
        %3399 = vst [vmem:[%s3396 + $0x10] sm:$0xff] %v3381
        %3400 = vst [vmem:[%s3396 + $0x18] sm:$0xff] %v3382
        %3401 = vst [vmem:[%s3396 + $0x20] sm:$0xff] %v3383
        %3402 = vst [vmem:[%s3396 + $0x28] sm:$0xff] %v3384
        %3403 = vst [vmem:[%s3396 + $0x30] sm:$0xff] %v3385
        %3404 = vst [vmem:[%s3396 + $0x38] sm:$0xff] %v3386
        %3405 = vst [vmem:[%s3396 + $0x40] sm:$0xff] %v3387
        %3406 = vst [vmem:[%s3396 + $0x48] sm:$0xff] %v3388
        %3407 = vst [vmem:[%s3396 + $0x50] sm:$0xff] %v3389
        %3408 = vst [vmem:[%s3396 + $0x58] sm:$0xff] %v3390
        %3409 = vst [vmem:[%s3396 + $0x60] sm:$0xff] %v3391
        %3410 = vst [vmem:[%s3396 + $0x68] sm:$0xff] %v3392
        %3411 = vst [vmem:[%s3396 + $0x70] sm:$0xff] %v3393
        %3412 = vst [vmem:[%s3396 + $0x78] sm:$0xff] %v3394
        %s3413 = smul.u32 8, 3
        %s3414 = smul.addr %s3413, 4
        %s3415 = scalar_lea.vmem [#allocation2], %s3414
        %v3416 = vld [vmem:[%s3415] sm:$0xf]
        %v3417 = vld [vmem:[%s3415 + $0x4] sm:$0xf]
        %v3418 = vld [vmem:[%s3415 + $0xc] sm:$0xf]
        %v3419 = vld [vmem:[%s3415 + $0x10] sm:$0xf]
        %v3420 = vld [vmem:[%s3415 + $0x18] sm:$0xf]
        %v3421 = vld [vmem:[%s3415 + $0x1c] sm:$0xf]
        %v3422 = vld [vmem:[%s3415 + $0x24] sm:$0xf]
        %v3423 = vld [vmem:[%s3415 + $0x28] sm:$0xf]
        %v3424 = vld [vmem:[%s3415 + $0x30] sm:$0xf]
        %v3425 = vld [vmem:[%s3415 + $0x34] sm:$0xf]
        %v3426 = vld [vmem:[%s3415 + $0x3c] sm:$0xf]
        %v3427 = vld [vmem:[%s3415 + $0x40] sm:$0xf]
        %v3428 = vld [vmem:[%s3415 + $0x48] sm:$0xf]
        %v3429 = vld [vmem:[%s3415 + $0x4c] sm:$0xf]
        %v3430 = vld [vmem:[%s3415 + $0x54] sm:$0xf]
        %v3431 = vld [vmem:[%s3415 + $0x58] sm:$0xf]
        %v3432 = vld [vmem:[#allocation6] sm:$0xf]
        %v3433 = vld [vmem:[#allocation6 + $0x4] sm:$0xf]
        %v3434 = vld [vmem:[#allocation6 + $0x8] sm:$0xf]
        %v3435 = vld [vmem:[#allocation6 + $0xc] sm:$0xf]
        %v3436 = vld [vmem:[%s3415 + $0x8] sm:$0x1]
        %v3437 = vld [vmem:[%s3415 + $0x14] sm:$0x1]
        %v3438 = vld [vmem:[%s3415 + $0x20] sm:$0x1]
        %v3439 = vld [vmem:[%s3415 + $0x2c] sm:$0x1]
        %v3440 = vld [vmem:[%s3415 + $0x38] sm:$0x1]
        %v3441 = vld [vmem:[%s3415 + $0x44] sm:$0x1]
        %v3442 = vld [vmem:[%s3415 + $0x50] sm:$0x1]
        %v3443 = vld [vmem:[%s3415 + $0x5c] sm:$0x1]
        %v3445 = vshrl.u32 %v3416, 16
        %v3447 = vrot.slane %v3445, 4
        %v3448 = vshll.u32 %v3416, 16
        %v3450 = vrot.slane %v3448, 5
        %v3451 = vor.u32 %v3447, %v3450
        %v3452 = vrot.slane %v3451, 4
        %v3454 = vshll.u32 %v3417, 16
        %v3456 = vrot.slane %v3454, 5
        %v3457 = vsel %vm857, %v3452, %v3456
        %v3458 = vshrl.u32 %v3417, 16
        %v3460 = vrot.slane %v3458, 4
        %v3461 = vor.u32 %v3460, %v3456
        %v3462 = vrot.slane %v3461, 4
        %v3464 = vshll.u32 %v3436, 16
        %v3466 = vrot.slane %v3464, 5
        %v3467 = vsel %vm857, %v3462, %v3466
        %v3469 = vshrl.u32 %v3418, 16
        %v3471 = vrot.slane %v3469, 4
        %v3472 = vshll.u32 %v3418, 16
        %v3474 = vrot.slane %v3472, 5
        %v3475 = vor.u32 %v3471, %v3474
        %v3476 = vrot.slane %v3475, 4
        %v3478 = vshll.u32 %v3419, 16
        %v3480 = vrot.slane %v3478, 5
        %v3481 = vsel %vm857, %v3476, %v3480
        %v3482 = vshrl.u32 %v3419, 16
        %v3484 = vrot.slane %v3482, 4
        %v3485 = vor.u32 %v3484, %v3480
        %v3486 = vrot.slane %v3485, 4
        %v3488 = vshll.u32 %v3437, 16
        %v3490 = vrot.slane %v3488, 5
        %v3491 = vsel %vm857, %v3486, %v3490
        %v3493 = vshrl.u32 %v3420, 16
        %v3495 = vrot.slane %v3493, 4
        %v3496 = vshll.u32 %v3420, 16
        %v3498 = vrot.slane %v3496, 5
        %v3499 = vor.u32 %v3495, %v3498
        %v3500 = vrot.slane %v3499, 4
        %v3502 = vshll.u32 %v3421, 16
        %v3504 = vrot.slane %v3502, 5
        %v3505 = vsel %vm857, %v3500, %v3504
        %v3506 = vshrl.u32 %v3421, 16
        %v3508 = vrot.slane %v3506, 4
        %v3509 = vor.u32 %v3508, %v3504
        %v3510 = vrot.slane %v3509, 4
        %v3512 = vshll.u32 %v3438, 16
        %v3514 = vrot.slane %v3512, 5
        %v3515 = vsel %vm857, %v3510, %v3514
        %v3517 = vshrl.u32 %v3422, 16
        %v3519 = vrot.slane %v3517, 4
        %v3520 = vshll.u32 %v3422, 16
        %v3522 = vrot.slane %v3520, 5
        %v3523 = vor.u32 %v3519, %v3522
        %v3524 = vrot.slane %v3523, 4
        %v3526 = vshll.u32 %v3423, 16
        %v3528 = vrot.slane %v3526, 5
        %v3529 = vsel %vm857, %v3524, %v3528
        %v3530 = vshrl.u32 %v3423, 16
        %v3532 = vrot.slane %v3530, 4
        %v3533 = vor.u32 %v3532, %v3528
        %v3534 = vrot.slane %v3533, 4
        %v3536 = vshll.u32 %v3439, 16
        %v3538 = vrot.slane %v3536, 5
        %v3539 = vsel %vm857, %v3534, %v3538
        %v3541 = vshrl.u32 %v3424, 16
        %v3543 = vrot.slane %v3541, 4
        %v3544 = vshll.u32 %v3424, 16
        %v3546 = vrot.slane %v3544, 5
        %v3547 = vor.u32 %v3543, %v3546
        %v3548 = vrot.slane %v3547, 4
        %v3550 = vshll.u32 %v3425, 16
        %v3552 = vrot.slane %v3550, 5
        %v3553 = vsel %vm857, %v3548, %v3552
        %v3554 = vshrl.u32 %v3425, 16
        %v3556 = vrot.slane %v3554, 4
        %v3557 = vor.u32 %v3556, %v3552
        %v3558 = vrot.slane %v3557, 4
        %v3560 = vshll.u32 %v3440, 16
        %v3562 = vrot.slane %v3560, 5
        %v3563 = vsel %vm857, %v3558, %v3562
        %v3565 = vshrl.u32 %v3426, 16
        %v3567 = vrot.slane %v3565, 4
        %v3568 = vshll.u32 %v3426, 16
        %v3570 = vrot.slane %v3568, 5
        %v3571 = vor.u32 %v3567, %v3570
        %v3572 = vrot.slane %v3571, 4
        %v3574 = vshll.u32 %v3427, 16
        %v3576 = vrot.slane %v3574, 5
        %v3577 = vsel %vm857, %v3572, %v3576
        %v3578 = vshrl.u32 %v3427, 16
        %v3580 = vrot.slane %v3578, 4
        %v3581 = vor.u32 %v3580, %v3576
        %v3582 = vrot.slane %v3581, 4
        %v3584 = vshll.u32 %v3441, 16
        %v3586 = vrot.slane %v3584, 5
        %v3587 = vsel %vm857, %v3582, %v3586
        %v3589 = vshrl.u32 %v3428, 16
        %v3591 = vrot.slane %v3589, 4
        %v3592 = vshll.u32 %v3428, 16
        %v3594 = vrot.slane %v3592, 5
        %v3595 = vor.u32 %v3591, %v3594
        %v3596 = vrot.slane %v3595, 4
        %v3598 = vshll.u32 %v3429, 16
        %v3600 = vrot.slane %v3598, 5
        %v3601 = vsel %vm857, %v3596, %v3600
        %v3602 = vshrl.u32 %v3429, 16
        %v3604 = vrot.slane %v3602, 4
        %v3605 = vor.u32 %v3604, %v3600
        %v3606 = vrot.slane %v3605, 4
        %v3608 = vshll.u32 %v3442, 16
        %v3610 = vrot.slane %v3608, 5
        %v3611 = vsel %vm857, %v3606, %v3610
        %v3613 = vshrl.u32 %v3430, 16
        %v3615 = vrot.slane %v3613, 4
        %v3616 = vshll.u32 %v3430, 16
        %v3618 = vrot.slane %v3616, 5
        %v3619 = vor.u32 %v3615, %v3618
        %v3620 = vrot.slane %v3619, 4
        %v3622 = vshll.u32 %v3431, 16
        %v3624 = vrot.slane %v3622, 5
        %v3625 = vsel %vm857, %v3620, %v3624
        %v3626 = vshrl.u32 %v3431, 16
        %v3628 = vrot.slane %v3626, 4
        %v3629 = vor.u32 %v3628, %v3624
        %v3630 = vrot.slane %v3629, 4
        %v3632 = vshll.u32 %v3443, 16
        %v3634 = vrot.slane %v3632, 5
        %v3635 = vsel %vm857, %v3630, %v3634
        %v3636 = vld [vmem:[%s1050] sm:$0xf]
        %v3637 = vld [vmem:[%s1050 + $0x4] sm:$0xf]
        %v3638 = vld [vmem:[%s1050 + $0x8] sm:$0xf]
        %v3639 = vld [vmem:[%s1050 + $0xc] sm:$0xf]
        %v3640 = vunpack.c.l.b16 %v3457
        %v3641 = vunpack.c.l.b16 %v3467
        %v3642 = vunpack.c.l.b16 %v3481
        %v3643 = vunpack.c.l.b16 %v3491
        %v3644 = vunpack.c.l.b16 %v3505
        %v3645 = vunpack.c.l.b16 %v3515
        %v3646 = vunpack.c.l.b16 %v3529
        %v3647 = vunpack.c.l.b16 %v3539
        %v3648 = vunpack.c.l.b16 %v3553
        %v3649 = vunpack.c.l.b16 %v3563
        %v3650 = vunpack.c.l.b16 %v3577
        %v3651 = vunpack.c.l.b16 %v3587
        %v3652 = vunpack.c.l.b16 %v3601
        %v3653 = vunpack.c.l.b16 %v3611
        %v3654 = vunpack.c.l.b16 %v3625
        %v3655 = vunpack.c.l.b16 %v3635
        %v3656 = vpack.c.b16 %v3641, %v3640
        %v3657 = vpack.c.b16 %v3643, %v3642
        %v3658 = vpack.c.b16 %v3645, %v3644
        %v3659 = vpack.c.b16 %v3647, %v3646
        %v3660 = vpack.c.b16 %v3649, %v3648
        %v3661 = vpack.c.b16 %v3651, %v3650
        %v3662 = vpack.c.b16 %v3653, %v3652
        %v3663 = vpack.c.b16 %v3655, %v3654
        %v3668 = vunpack.c.l.b16 %v3636
        %v3669 = vunpack.c.l.b16 %v3637
        %v3670 = vunpack.c.l.b16 %v3638
        %v3671 = vunpack.c.l.b16 %v3639
        %v3672 = vpack.c.b16 %v3669, %v3668
        %v3673 = vpack.c.b16 %v3671, %v3670
        %v3677 = vsel %vm1091, %v3656, 0
        %v3680 = vsel %vm1091, %v3657, 0
        %v3683 = vsel %vm1091, %v3658, 0
        %v3686 = vsel %vm1091, %v3659, 0
        %v3689 = vsel %vm1091, %v3660, 0
        %v3692 = vsel %vm1091, %v3661, 0
        %v3695 = vsel %vm1091, %v3662, 0
        %v3698 = vsel %vm1091, %v3663, 0
        %3700 = vmatprep.subr.bf16.mxu0 0
        %3701 = vmatpush1.bf16.msra.mxu0 %v3672
        %3702 = vmatprep.subr.bf16.mxu0 0
        %3703 = vmatpush1.bf16.msra.mxu0 %v3673
        %3704 = vmatprep.subr.bf16.mxu0 0
        %3705 = vmatpush1.bf16.msra.mxu0 0
        %3706 = vmatprep.subr.bf16.mxu0 0
        %3707 = vmatpush1.bf16.msra.mxu0 0
        %3708 = vmatprep.subr.bf16.mxu0 0
        %3709 = vmatpush1.bf16.msra.mxu0 0
        %3710 = vmatprep.subr.bf16.mxu0 0
        %3711 = vmatpush1.bf16.msra.mxu0 0
        %3712 = vmatprep.subr.bf16.mxu0 0
        %3713 = vmatpush1.bf16.msra.mxu0 0
        %3714 = vmatprep.subr.bf16.mxu0 0
        %3715 = vmatpush1.bf16.msra.mxu0 0
        %3716 = vmatprep.subr.bf16.mxu0 0
        %3717 = vmatpush1.bf16.msra.mxu0 0
        %3718 = vmatprep.subr.bf16.mxu0 0
        %3719 = vmatpush1.bf16.msra.mxu0 0
        %3720 = vmatprep.subr.bf16.mxu0 0
        %3721 = vmatpush1.bf16.msra.mxu0 0
        %3722 = vmatprep.subr.bf16.mxu0 0
        %3723 = vmatpush1.bf16.msra.mxu0 0
        %3724 = vmatprep.subr.bf16.mxu0 0
        %3725 = vmatpush1.bf16.msra.mxu0 0
        %3726 = vmatprep.subr.bf16.mxu0 0
        %3727 = vmatpush1.bf16.msra.mxu0 0
        %3728 = vmatprep.subr.bf16.mxu0 0
        %3729 = vmatpush1.bf16.msra.mxu0 0
        %3730 = vmatprep.subr.bf16.mxu0 0
        %3731 = vmatpush1.bf16.msra.mxu0 0
        %3732 = vmatprep.mubr.bf16.mxu0 0
        %3733 = vmatmul.mubr.bf16.gmra.mrb[0].mxu0 %v3677
        %v3734 = vpop.f32.mrb[0].mxu0
        %v3735 = vadd.f32 0.0, %v3734
        %v3736 = vpop.f32.mrb[0].mxu0
        %v3737 = vpop.f32.mrb[0].mxu0
        %v3738 = vadd.f32 0.0, %v3737
        %v3739 = vpop.f32.mrb[0].mxu0
        %3740 = vmatprep.mubr.bf16.mxu0 0
        %3741 = vmatmul.mubr.bf16.gmra.mrb[0].mxu0 %v3680
        %v3742 = vpop.f32.mrb[0].mxu0
        %v3743 = vadd.f32 0.0, %v3742
        %v3744 = vpop.f32.mrb[0].mxu0
        %v3745 = vpop.f32.mrb[0].mxu0
        %v3746 = vadd.f32 0.0, %v3745
        %v3747 = vpop.f32.mrb[0].mxu0
        %3748 = vmatprep.mubr.bf16.mxu0 0
        %3749 = vmatmul.mubr.bf16.gmra.mrb[0].mxu0 %v3683
        %v3750 = vpop.f32.mrb[0].mxu0
        %v3751 = vadd.f32 0.0, %v3750
        %v3752 = vpop.f32.mrb[0].mxu0
        %v3753 = vpop.f32.mrb[0].mxu0
        %v3754 = vadd.f32 0.0, %v3753
        %v3755 = vpop.f32.mrb[0].mxu0
        %3756 = vmatprep.mubr.bf16.mxu0 0
        %3757 = vmatmul.mubr.bf16.gmra.mrb[0].mxu0 %v3686
        %v3758 = vpop.f32.mrb[0].mxu0
        %v3759 = vadd.f32 0.0, %v3758
        %v3760 = vpop.f32.mrb[0].mxu0
        %v3761 = vpop.f32.mrb[0].mxu0
        %v3762 = vadd.f32 0.0, %v3761
        %v3763 = vpop.f32.mrb[0].mxu0
        %3764 = vmatprep.mubr.bf16.mxu0 0
        %3765 = vmatmul.mubr.bf16.gmra.mrb[0].mxu0 %v3689
        %v3766 = vpop.f32.mrb[0].mxu0
        %v3767 = vadd.f32 0.0, %v3766
        %v3768 = vpop.f32.mrb[0].mxu0
        %v3769 = vpop.f32.mrb[0].mxu0
        %v3770 = vadd.f32 0.0, %v3769
        %v3771 = vpop.f32.mrb[0].mxu0
        %3772 = vmatprep.mubr.bf16.mxu0 0
        %3773 = vmatmul.mubr.bf16.gmra.mrb[0].mxu0 %v3692
        %v3774 = vpop.f32.mrb[0].mxu0
        %v3775 = vadd.f32 0.0, %v3774
        %v3776 = vpop.f32.mrb[0].mxu0
        %v3777 = vpop.f32.mrb[0].mxu0
        %v3778 = vadd.f32 0.0, %v3777
        %v3779 = vpop.f32.mrb[0].mxu0
        %3780 = vmatprep.mubr.bf16.mxu0 0
        %3781 = vmatmul.mubr.bf16.gmra.mrb[0].mxu0 %v3695
        %v3782 = vpop.f32.mrb[0].mxu0
        %v3783 = vadd.f32 0.0, %v3782
        %v3784 = vpop.f32.mrb[0].mxu0
        %v3785 = vpop.f32.mrb[0].mxu0
        %v3786 = vadd.f32 0.0, %v3785
        %v3787 = vpop.f32.mrb[0].mxu0
        %3788 = vmatprep.mubr.bf16.mxu0 0
        %3789 = vmatmul.mubr.bf16.gmra.mrb[0].mxu0 %v3698
        %v3790 = vpop.f32.mrb[0].mxu0
        %v3791 = vadd.f32 0.0, %v3790
        %v3792 = vpop.f32.mrb[0].mxu0
        %v3793 = vpop.f32.mrb[0].mxu0
        %v3794 = vadd.f32 0.0, %v3793
        %v3795 = vpop.f32.mrb[0].mxu0
        %3796 = vdwg.mxu0
        %v3813 = vunpack.c.l.b16 %v3416
        %v3814 = vunpack.c.l.b16 %v3417
        %v3815 = vunpack.c.l.b16 %v3418
        %v3816 = vunpack.c.l.b16 %v3419
        %v3817 = vunpack.c.l.b16 %v3420
        %v3818 = vunpack.c.l.b16 %v3421
        %v3819 = vunpack.c.l.b16 %v3422
        %v3820 = vunpack.c.l.b16 %v3423
        %v3821 = vunpack.c.l.b16 %v3424
        %v3822 = vunpack.c.l.b16 %v3425
        %v3823 = vunpack.c.l.b16 %v3426
        %v3824 = vunpack.c.l.b16 %v3427
        %v3825 = vunpack.c.l.b16 %v3428
        %v3826 = vunpack.c.l.b16 %v3429
        %v3827 = vunpack.c.l.b16 %v3430
        %v3828 = vunpack.c.l.b16 %v3431
        %v3829 = vpack.c.b16 %v3814, %v3813
        %v3830 = vpack.c.b16 %v3816, %v3815
        %v3831 = vpack.c.b16 %v3818, %v3817
        %v3832 = vpack.c.b16 %v3820, %v3819
        %v3833 = vpack.c.b16 %v3822, %v3821
        %v3834 = vpack.c.b16 %v3824, %v3823
        %v3835 = vpack.c.b16 %v3826, %v3825
        %v3836 = vpack.c.b16 %v3828, %v3827
        %v3841 = vunpack.c.l.b16 %v3432
        %v3842 = vunpack.c.l.b16 %v3433
        %v3843 = vunpack.c.l.b16 %v3434
        %v3844 = vunpack.c.l.b16 %v3435
        %v3845 = vpack.c.b16 %v3842, %v3841
        %v3846 = vpack.c.b16 %v3844, %v3843
        %v3850 = vsel %vm1091, %v3829, 0
        %v3853 = vsel %vm1091, %v3830, 0
        %v3856 = vsel %vm1091, %v3831, 0
        %v3859 = vsel %vm1091, %v3832, 0
        %v3862 = vsel %vm1091, %v3833, 0
        %v3865 = vsel %vm1091, %v3834, 0
        %v3868 = vsel %vm1091, %v3835, 0
        %v3871 = vsel %vm1091, %v3836, 0
        %3873 = vmatprep.subr.bf16.mxu0 0
        %3874 = vmatpush1.bf16.msra.mxu0 %v3845
        %3875 = vmatprep.subr.bf16.mxu0 0
        %3876 = vmatpush1.bf16.msra.mxu0 %v3846
        %3877 = vmatprep.subr.bf16.mxu0 0
        %3878 = vmatpush1.bf16.msra.mxu0 0
        %3879 = vmatprep.subr.bf16.mxu0 0
        %3880 = vmatpush1.bf16.msra.mxu0 0
        %3881 = vmatprep.subr.bf16.mxu0 0
        %3882 = vmatpush1.bf16.msra.mxu0 0
        %3883 = vmatprep.subr.bf16.mxu0 0
        %3884 = vmatpush1.bf16.msra.mxu0 0
        %3885 = vmatprep.subr.bf16.mxu0 0
        %3886 = vmatpush1.bf16.msra.mxu0 0
        %3887 = vmatprep.subr.bf16.mxu0 0
        %3888 = vmatpush1.bf16.msra.mxu0 0
        %3889 = vmatprep.subr.bf16.mxu0 0
        %3890 = vmatpush1.bf16.msra.mxu0 0
        %3891 = vmatprep.subr.bf16.mxu0 0
        %3892 = vmatpush1.bf16.msra.mxu0 0
        %3893 = vmatprep.subr.bf16.mxu0 0
        %3894 = vmatpush1.bf16.msra.mxu0 0
        %3895 = vmatprep.subr.bf16.mxu0 0
        %3896 = vmatpush1.bf16.msra.mxu0 0
        %3897 = vmatprep.subr.bf16.mxu0 0
        %3898 = vmatpush1.bf16.msra.mxu0 0
        %3899 = vmatprep.subr.bf16.mxu0 0
        %3900 = vmatpush1.bf16.msra.mxu0 0
        %3901 = vmatprep.subr.bf16.mxu0 0
        %3902 = vmatpush1.bf16.msra.mxu0 0
        %3903 = vmatprep.subr.bf16.mxu0 0
        %3904 = vmatpush1.bf16.msra.mxu0 0
        %3905 = vmatprep.mubr.bf16.mxu0 0
        %3906 = vmatmul.mubr.bf16.gmra.mrb[0].mxu0 %v3850
        %v3907 = vpop.f32.mrb[0].mxu0
        %v3908 = vadd.f32 %v3735, %v3907
        %v3909 = vpop.f32.mrb[0].mxu0
        %v3910 = vpop.f32.mrb[0].mxu0
        %v3911 = vadd.f32 %v3738, %v3910
        %v3912 = vpop.f32.mrb[0].mxu0
        %3913 = vmatprep.mubr.bf16.mxu0 0
        %3914 = vmatmul.mubr.bf16.gmra.mrb[0].mxu0 %v3853
        %v3915 = vpop.f32.mrb[0].mxu0
        %v3916 = vadd.f32 %v3743, %v3915
        %v3917 = vpop.f32.mrb[0].mxu0
        %v3918 = vpop.f32.mrb[0].mxu0
        %v3919 = vadd.f32 %v3746, %v3918
        %v3920 = vpop.f32.mrb[0].mxu0
        %3921 = vmatprep.mubr.bf16.mxu0 0
        %3922 = vmatmul.mubr.bf16.gmra.mrb[0].mxu0 %v3856
        %v3923 = vpop.f32.mrb[0].mxu0
        %v3924 = vadd.f32 %v3751, %v3923
        %v3925 = vpop.f32.mrb[0].mxu0
        %v3926 = vpop.f32.mrb[0].mxu0
        %v3927 = vadd.f32 %v3754, %v3926
        %v3928 = vpop.f32.mrb[0].mxu0
        %3929 = vmatprep.mubr.bf16.mxu0 0
        %3930 = vmatmul.mubr.bf16.gmra.mrb[0].mxu0 %v3859
        %v3931 = vpop.f32.mrb[0].mxu0
        %v3932 = vadd.f32 %v3759, %v3931
        %v3933 = vpop.f32.mrb[0].mxu0
        %v3934 = vpop.f32.mrb[0].mxu0
        %v3935 = vadd.f32 %v3762, %v3934
        %v3936 = vpop.f32.mrb[0].mxu0
        %3937 = vmatprep.mubr.bf16.mxu0 0
        %3938 = vmatmul.mubr.bf16.gmra.mrb[0].mxu0 %v3862
        %v3939 = vpop.f32.mrb[0].mxu0
        %v3940 = vadd.f32 %v3767, %v3939
        %v3941 = vpop.f32.mrb[0].mxu0
        %v3942 = vpop.f32.mrb[0].mxu0
        %v3943 = vadd.f32 %v3770, %v3942
        %v3944 = vpop.f32.mrb[0].mxu0
        %3945 = vmatprep.mubr.bf16.mxu0 0
        %3946 = vmatmul.mubr.bf16.gmra.mrb[0].mxu0 %v3865
        %v3947 = vpop.f32.mrb[0].mxu0
        %v3948 = vadd.f32 %v3775, %v3947
        %v3949 = vpop.f32.mrb[0].mxu0
        %v3950 = vpop.f32.mrb[0].mxu0
        %v3951 = vadd.f32 %v3778, %v3950
        %v3952 = vpop.f32.mrb[0].mxu0
        %3953 = vmatprep.mubr.bf16.mxu0 0
        %3954 = vmatmul.mubr.bf16.gmra.mrb[0].mxu0 %v3868
        %v3955 = vpop.f32.mrb[0].mxu0
        %v3956 = vadd.f32 %v3783, %v3955
        %v3957 = vpop.f32.mrb[0].mxu0
        %v3958 = vpop.f32.mrb[0].mxu0
        %v3959 = vadd.f32 %v3786, %v3958
        %v3960 = vpop.f32.mrb[0].mxu0
        %3961 = vmatprep.mubr.bf16.mxu0 0
        %3962 = vmatmul.mubr.bf16.gmra.mrb[0].mxu0 %v3871
        %v3963 = vpop.f32.mrb[0].mxu0
        %v3964 = vadd.f32 %v3791, %v3963
        %v3965 = vpop.f32.mrb[0].mxu0
        %v3966 = vpop.f32.mrb[0].mxu0
        %v3967 = vadd.f32 %v3794, %v3966
        %v3968 = vpop.f32.mrb[0].mxu0
        %3969 = vdwg.mxu0
        %v3970 = vld [vmem:[%s3415] sm:$0xe]
        %v3971 = vld [vmem:[%s3415 + $0xc] sm:$0xe]
        %v3972 = vld [vmem:[%s3415 + $0x18] sm:$0xe]
        %v3973 = vld [vmem:[%s3415 + $0x24] sm:$0xe]
        %v3974 = vld [vmem:[%s3415 + $0x30] sm:$0xe]
        %v3975 = vld [vmem:[%s3415 + $0x3c] sm:$0xe]
        %v3976 = vld [vmem:[%s3415 + $0x48] sm:$0xe]
        %v3977 = vld [vmem:[%s3415 + $0x54] sm:$0xe]
        %v3994 = vrot.slane %v3970, 5
        %v3995 = vrot.slane %v3994, 4
        %v3996 = vrot.slane %v3417, 5
        %v3997 = vsel %vm1412, %v3995, %v3996
        %v3998 = vrot.slane %v3996, 4
        %v3999 = vrot.slane %v3436, 5
        %v4000 = vsel %vm1412, %v3998, %v3999
        %v4001 = vrot.slane %v3971, 5
        %v4002 = vrot.slane %v4001, 4
        %v4003 = vrot.slane %v3419, 5
        %v4004 = vsel %vm1412, %v4002, %v4003
        %v4005 = vrot.slane %v4003, 4
        %v4006 = vrot.slane %v3437, 5
        %v4007 = vsel %vm1412, %v4005, %v4006
        %v4008 = vrot.slane %v3972, 5
        %v4009 = vrot.slane %v4008, 4
        %v4010 = vrot.slane %v3421, 5
        %v4011 = vsel %vm1412, %v4009, %v4010
        %v4012 = vrot.slane %v4010, 4
        %v4013 = vrot.slane %v3438, 5
        %v4014 = vsel %vm1412, %v4012, %v4013
        %v4015 = vrot.slane %v3973, 5
        %v4016 = vrot.slane %v4015, 4
        %v4017 = vrot.slane %v3423, 5
        %v4018 = vsel %vm1412, %v4016, %v4017
        %v4019 = vrot.slane %v4017, 4
        %v4020 = vrot.slane %v3439, 5
        %v4021 = vsel %vm1412, %v4019, %v4020
        %v4022 = vrot.slane %v3974, 5
        %v4023 = vrot.slane %v4022, 4
        %v4024 = vrot.slane %v3425, 5
        %v4025 = vsel %vm1412, %v4023, %v4024
        %v4026 = vrot.slane %v4024, 4
        %v4027 = vrot.slane %v3440, 5
        %v4028 = vsel %vm1412, %v4026, %v4027
        %v4029 = vrot.slane %v3975, 5
        %v4030 = vrot.slane %v4029, 4
        %v4031 = vrot.slane %v3427, 5
        %v4032 = vsel %vm1412, %v4030, %v4031
        %v4033 = vrot.slane %v4031, 4
        %v4034 = vrot.slane %v3441, 5
        %v4035 = vsel %vm1412, %v4033, %v4034
        %v4036 = vrot.slane %v3976, 5
        %v4037 = vrot.slane %v4036, 4
        %v4038 = vrot.slane %v3429, 5
        %v4039 = vsel %vm1412, %v4037, %v4038
        %v4040 = vrot.slane %v4038, 4
        %v4041 = vrot.slane %v3442, 5
        %v4042 = vsel %vm1412, %v4040, %v4041
        %v4043 = vrot.slane %v3977, 5
        %v4044 = vrot.slane %v4043, 4
        %v4045 = vrot.slane %v3431, 5
        %v4046 = vsel %vm1412, %v4044, %v4045
        %v4047 = vrot.slane %v4045, 4
        %v4048 = vrot.slane %v3443, 5
        %v4049 = vsel %vm1412, %v4047, %v4048
        %v4050 = vld [vmem:[%s1469] sm:$0xf]
        %v4051 = vld [vmem:[%s1469 + $0x4] sm:$0xf]
        %v4052 = vld [vmem:[%s1469 + $0x8] sm:$0xf]
        %v4053 = vld [vmem:[%s1469 + $0xc] sm:$0xf]
        %v4054 = vunpack.c.l.b16 %v3997
        %v4055 = vunpack.c.l.b16 %v4000
        %v4056 = vunpack.c.l.b16 %v4004
        %v4057 = vunpack.c.l.b16 %v4007
        %v4058 = vunpack.c.l.b16 %v4011
        %v4059 = vunpack.c.l.b16 %v4014
        %v4060 = vunpack.c.l.b16 %v4018
        %v4061 = vunpack.c.l.b16 %v4021
        %v4062 = vunpack.c.l.b16 %v4025
        %v4063 = vunpack.c.l.b16 %v4028
        %v4064 = vunpack.c.l.b16 %v4032
        %v4065 = vunpack.c.l.b16 %v4035
        %v4066 = vunpack.c.l.b16 %v4039
        %v4067 = vunpack.c.l.b16 %v4042
        %v4068 = vunpack.c.l.b16 %v4046
        %v4069 = vunpack.c.l.b16 %v4049
        %v4070 = vpack.c.b16 %v4055, %v4054
        %v4071 = vpack.c.b16 %v4057, %v4056
        %v4072 = vpack.c.b16 %v4059, %v4058
        %v4073 = vpack.c.b16 %v4061, %v4060
        %v4074 = vpack.c.b16 %v4063, %v4062
        %v4075 = vpack.c.b16 %v4065, %v4064
        %v4076 = vpack.c.b16 %v4067, %v4066
        %v4077 = vpack.c.b16 %v4069, %v4068
        %v4082 = vunpack.c.l.b16 %v4050
        %v4083 = vunpack.c.l.b16 %v4051
        %v4084 = vunpack.c.l.b16 %v4052
        %v4085 = vunpack.c.l.b16 %v4053
        %v4086 = vpack.c.b16 %v4083, %v4082
        %v4087 = vpack.c.b16 %v4085, %v4084
        %v4091 = vsel %vm1091, %v4070, 0
        %v4094 = vsel %vm1091, %v4071, 0
        %v4097 = vsel %vm1091, %v4072, 0
        %v4100 = vsel %vm1091, %v4073, 0
        %v4103 = vsel %vm1091, %v4074, 0
        %v4106 = vsel %vm1091, %v4075, 0
        %v4109 = vsel %vm1091, %v4076, 0
        %v4112 = vsel %vm1091, %v4077, 0
        %4114 = vmatprep.subr.bf16.mxu0 0
        %4115 = vmatpush1.bf16.msra.mxu0 %v4086
        %4116 = vmatprep.subr.bf16.mxu0 0
        %4117 = vmatpush1.bf16.msra.mxu0 %v4087
        %4118 = vmatprep.subr.bf16.mxu0 0
        %4119 = vmatpush1.bf16.msra.mxu0 0
        %4120 = vmatprep.subr.bf16.mxu0 0
        %4121 = vmatpush1.bf16.msra.mxu0 0
        %4122 = vmatprep.subr.bf16.mxu0 0
        %4123 = vmatpush1.bf16.msra.mxu0 0
        %4124 = vmatprep.subr.bf16.mxu0 0
        %4125 = vmatpush1.bf16.msra.mxu0 0
        %4126 = vmatprep.subr.bf16.mxu0 0
        %4127 = vmatpush1.bf16.msra.mxu0 0
        %4128 = vmatprep.subr.bf16.mxu0 0
        %4129 = vmatpush1.bf16.msra.mxu0 0
        %4130 = vmatprep.subr.bf16.mxu0 0
        %4131 = vmatpush1.bf16.msra.mxu0 0
        %4132 = vmatprep.subr.bf16.mxu0 0
        %4133 = vmatpush1.bf16.msra.mxu0 0
        %4134 = vmatprep.subr.bf16.mxu0 0
        %4135 = vmatpush1.bf16.msra.mxu0 0
        %4136 = vmatprep.subr.bf16.mxu0 0
        %4137 = vmatpush1.bf16.msra.mxu0 0
        %4138 = vmatprep.subr.bf16.mxu0 0
        %4139 = vmatpush1.bf16.msra.mxu0 0
        %4140 = vmatprep.subr.bf16.mxu0 0
        %4141 = vmatpush1.bf16.msra.mxu0 0
        %4142 = vmatprep.subr.bf16.mxu0 0
        %4143 = vmatpush1.bf16.msra.mxu0 0
        %4144 = vmatprep.subr.bf16.mxu0 0
        %4145 = vmatpush1.bf16.msra.mxu0 0
        %4146 = vmatprep.mubr.bf16.mxu0 0
        %4147 = vmatmul.mubr.bf16.gmra.mrb[0].mxu0 %v4091
        %v4148 = vpop.f32.mrb[0].mxu0
        %v4149 = vadd.f32 0.0, %v4148
        %v4150 = vpop.f32.mrb[0].mxu0
        %v4151 = vpop.f32.mrb[0].mxu0
        %v4152 = vadd.f32 0.0, %v4151
        %v4153 = vpop.f32.mrb[0].mxu0
        %4154 = vmatprep.mubr.bf16.mxu0 0
        %4155 = vmatmul.mubr.bf16.gmra.mrb[0].mxu0 %v4094
        %v4156 = vpop.f32.mrb[0].mxu0
        %v4157 = vadd.f32 0.0, %v4156
        %v4158 = vpop.f32.mrb[0].mxu0
        %v4159 = vpop.f32.mrb[0].mxu0
        %v4160 = vadd.f32 0.0, %v4159
        %v4161 = vpop.f32.mrb[0].mxu0
        %4162 = vmatprep.mubr.bf16.mxu0 0
        %4163 = vmatmul.mubr.bf16.gmra.mrb[0].mxu0 %v4097
        %v4164 = vpop.f32.mrb[0].mxu0
        %v4165 = vadd.f32 0.0, %v4164
        %v4166 = vpop.f32.mrb[0].mxu0
        %v4167 = vpop.f32.mrb[0].mxu0
        %v4168 = vadd.f32 0.0, %v4167
        %v4169 = vpop.f32.mrb[0].mxu0
        %4170 = vmatprep.mubr.bf16.mxu0 0
        %4171 = vmatmul.mubr.bf16.gmra.mrb[0].mxu0 %v4100
        %v4172 = vpop.f32.mrb[0].mxu0
        %v4173 = vadd.f32 0.0, %v4172
        %v4174 = vpop.f32.mrb[0].mxu0
        %v4175 = vpop.f32.mrb[0].mxu0
        %v4176 = vadd.f32 0.0, %v4175
        %v4177 = vpop.f32.mrb[0].mxu0
        %4178 = vmatprep.mubr.bf16.mxu0 0
        %4179 = vmatmul.mubr.bf16.gmra.mrb[0].mxu0 %v4103
        %v4180 = vpop.f32.mrb[0].mxu0
        %v4181 = vadd.f32 0.0, %v4180
        %v4182 = vpop.f32.mrb[0].mxu0
        %v4183 = vpop.f32.mrb[0].mxu0
        %v4184 = vadd.f32 0.0, %v4183
        %v4185 = vpop.f32.mrb[0].mxu0
        %4186 = vmatprep.mubr.bf16.mxu0 0
        %4187 = vmatmul.mubr.bf16.gmra.mrb[0].mxu0 %v4106
        %v4188 = vpop.f32.mrb[0].mxu0
        %v4189 = vadd.f32 0.0, %v4188
        %v4190 = vpop.f32.mrb[0].mxu0
        %v4191 = vpop.f32.mrb[0].mxu0
        %v4192 = vadd.f32 0.0, %v4191
        %v4193 = vpop.f32.mrb[0].mxu0
        %4194 = vmatprep.mubr.bf16.mxu0 0
        %4195 = vmatmul.mubr.bf16.gmra.mrb[0].mxu0 %v4109
        %v4196 = vpop.f32.mrb[0].mxu0
        %v4197 = vadd.f32 0.0, %v4196
        %v4198 = vpop.f32.mrb[0].mxu0
        %v4199 = vpop.f32.mrb[0].mxu0
        %v4200 = vadd.f32 0.0, %v4199
        %v4201 = vpop.f32.mrb[0].mxu0
        %4202 = vmatprep.mubr.bf16.mxu0 0
        %4203 = vmatmul.mubr.bf16.gmra.mrb[0].mxu0 %v4112
        %v4204 = vpop.f32.mrb[0].mxu0
        %v4205 = vadd.f32 0.0, %v4204
        %v4206 = vpop.f32.mrb[0].mxu0
        %v4207 = vpop.f32.mrb[0].mxu0
        %v4208 = vadd.f32 0.0, %v4207
        %v4209 = vpop.f32.mrb[0].mxu0
        %4210 = vdwg.mxu0
        %v4211 = vadd.f32 %v3908, %v4149
        %v4212 = vadd.f32 %v3911, %v4152
        %v4213 = vadd.f32 %v3916, %v4157
        %v4214 = vadd.f32 %v3919, %v4160
        %v4215 = vadd.f32 %v3924, %v4165
        %v4216 = vadd.f32 %v3927, %v4168
        %v4217 = vadd.f32 %v3932, %v4173
        %v4218 = vadd.f32 %v3935, %v4176
        %v4219 = vadd.f32 %v3940, %v4181
        %v4220 = vadd.f32 %v3943, %v4184
        %v4221 = vadd.f32 %v3948, %v4189
        %v4222 = vadd.f32 %v3951, %v4192
        %v4223 = vadd.f32 %v3956, %v4197
        %v4224 = vadd.f32 %v3959, %v4200
        %v4225 = vadd.f32 %v3964, %v4205
        %v4226 = vadd.f32 %v3967, %v4208
        %s4227 = sadd.s32 8, 1
        %s4228 = smul.u32 %s4227, 3
        %s4229 = smul.addr %s4228, 4
        %s4230 = scalar_lea.vmem [#allocation2], %s4229
        %v4231 = vld [vmem:[%s4230] sm:$0xf]
        %v4232 = vld [vmem:[%s4230 + $0x4] sm:$0xf]
        %v4233 = vld [vmem:[%s4230 + $0xc] sm:$0xf]
        %v4234 = vld [vmem:[%s4230 + $0x10] sm:$0xf]
        %v4235 = vld [vmem:[%s4230 + $0x18] sm:$0xf]
        %v4236 = vld [vmem:[%s4230 + $0x1c] sm:$0xf]
        %v4237 = vld [vmem:[%s4230 + $0x24] sm:$0xf]
        %v4238 = vld [vmem:[%s4230 + $0x28] sm:$0xf]
        %v4239 = vld [vmem:[%s4230 + $0x30] sm:$0xf]
        %v4240 = vld [vmem:[%s4230 + $0x34] sm:$0xf]
        %v4241 = vld [vmem:[%s4230 + $0x3c] sm:$0xf]
        %v4242 = vld [vmem:[%s4230 + $0x40] sm:$0xf]
        %v4243 = vld [vmem:[%s4230 + $0x48] sm:$0xf]
        %v4244 = vld [vmem:[%s4230 + $0x4c] sm:$0xf]
        %v4245 = vld [vmem:[%s4230 + $0x54] sm:$0xf]
        %v4246 = vld [vmem:[%s4230 + $0x58] sm:$0xf]
        %v4247 = vld [vmem:[%s1667] sm:$0xf]
        %v4248 = vld [vmem:[%s1667 + $0x4] sm:$0xf]
        %v4249 = vld [vmem:[%s1667 + $0x8] sm:$0xf]
        %v4250 = vld [vmem:[%s1667 + $0xc] sm:$0xf]
        %v4267 = vunpack.c.l.b16 %v4231
        %v4268 = vunpack.c.l.b16 %v4232
        %v4269 = vunpack.c.l.b16 %v4233
        %v4270 = vunpack.c.l.b16 %v4234
        %v4271 = vunpack.c.l.b16 %v4235
        %v4272 = vunpack.c.l.b16 %v4236
        %v4273 = vunpack.c.l.b16 %v4237
        %v4274 = vunpack.c.l.b16 %v4238
        %v4275 = vunpack.c.l.b16 %v4239
        %v4276 = vunpack.c.l.b16 %v4240
        %v4277 = vunpack.c.l.b16 %v4241
        %v4278 = vunpack.c.l.b16 %v4242
        %v4279 = vunpack.c.l.b16 %v4243
        %v4280 = vunpack.c.l.b16 %v4244
        %v4281 = vunpack.c.l.b16 %v4245
        %v4282 = vunpack.c.l.b16 %v4246
        %v4283 = vpack.c.b16 %v4268, %v4267
        %v4284 = vpack.c.b16 %v4270, %v4269
        %v4285 = vpack.c.b16 %v4272, %v4271
        %v4286 = vpack.c.b16 %v4274, %v4273
        %v4287 = vpack.c.b16 %v4276, %v4275
        %v4288 = vpack.c.b16 %v4278, %v4277
        %v4289 = vpack.c.b16 %v4280, %v4279
        %v4290 = vpack.c.b16 %v4282, %v4281
        %v4295 = vunpack.c.l.b16 %v4247
        %v4296 = vunpack.c.l.b16 %v4248
        %v4297 = vunpack.c.l.b16 %v4249
        %v4298 = vunpack.c.l.b16 %v4250
        %v4299 = vpack.c.b16 %v4296, %v4295
        %v4300 = vpack.c.b16 %v4298, %v4297
        %v4304 = vsel %vm1091, %v4283, 0
        %v4307 = vsel %vm1091, %v4284, 0
        %v4310 = vsel %vm1091, %v4285, 0
        %v4313 = vsel %vm1091, %v4286, 0
        %v4316 = vsel %vm1091, %v4287, 0
        %v4319 = vsel %vm1091, %v4288, 0
        %v4322 = vsel %vm1091, %v4289, 0
        %v4325 = vsel %vm1091, %v4290, 0
        %4327 = vmatprep.subr.bf16.mxu0 0
        %4328 = vmatpush1.bf16.msra.mxu0 %v4299
        %4329 = vmatprep.subr.bf16.mxu0 0
        %4330 = vmatpush1.bf16.msra.mxu0 %v4300
        %4331 = vmatprep.subr.bf16.mxu0 0
        %4332 = vmatpush1.bf16.msra.mxu0 0
        %4333 = vmatprep.subr.bf16.mxu0 0
        %4334 = vmatpush1.bf16.msra.mxu0 0
        %4335 = vmatprep.subr.bf16.mxu0 0
        %4336 = vmatpush1.bf16.msra.mxu0 0
        %4337 = vmatprep.subr.bf16.mxu0 0
        %4338 = vmatpush1.bf16.msra.mxu0 0
        %4339 = vmatprep.subr.bf16.mxu0 0
        %4340 = vmatpush1.bf16.msra.mxu0 0
        %4341 = vmatprep.subr.bf16.mxu0 0
        %4342 = vmatpush1.bf16.msra.mxu0 0
        %4343 = vmatprep.subr.bf16.mxu0 0
        %4344 = vmatpush1.bf16.msra.mxu0 0
        %4345 = vmatprep.subr.bf16.mxu0 0
        %4346 = vmatpush1.bf16.msra.mxu0 0
        %4347 = vmatprep.subr.bf16.mxu0 0
        %4348 = vmatpush1.bf16.msra.mxu0 0
        %4349 = vmatprep.subr.bf16.mxu0 0
        %4350 = vmatpush1.bf16.msra.mxu0 0
        %4351 = vmatprep.subr.bf16.mxu0 0
        %4352 = vmatpush1.bf16.msra.mxu0 0
        %4353 = vmatprep.subr.bf16.mxu0 0
        %4354 = vmatpush1.bf16.msra.mxu0 0
        %4355 = vmatprep.subr.bf16.mxu0 0
        %4356 = vmatpush1.bf16.msra.mxu0 0
        %4357 = vmatprep.subr.bf16.mxu0 0
        %4358 = vmatpush1.bf16.msra.mxu0 0
        %4359 = vmatprep.mubr.bf16.mxu0 0
        %4360 = vmatmul.mubr.bf16.gmra.mrb[0].mxu0 %v4304
        %v4361 = vpop.f32.mrb[0].mxu0
        %v4362 = vadd.f32 0.0, %v4361
        %v4363 = vpop.f32.mrb[0].mxu0
        %v4364 = vpop.f32.mrb[0].mxu0
        %v4365 = vadd.f32 0.0, %v4364
        %v4366 = vpop.f32.mrb[0].mxu0
        %4367 = vmatprep.mubr.bf16.mxu0 0
        %4368 = vmatmul.mubr.bf16.gmra.mrb[0].mxu0 %v4307
        %v4369 = vpop.f32.mrb[0].mxu0
        %v4370 = vadd.f32 0.0, %v4369
        %v4371 = vpop.f32.mrb[0].mxu0
        %v4372 = vpop.f32.mrb[0].mxu0
        %v4373 = vadd.f32 0.0, %v4372
        %v4374 = vpop.f32.mrb[0].mxu0
        %4375 = vmatprep.mubr.bf16.mxu0 0
        %4376 = vmatmul.mubr.bf16.gmra.mrb[0].mxu0 %v4310
        %v4377 = vpop.f32.mrb[0].mxu0
        %v4378 = vadd.f32 0.0, %v4377
        %v4379 = vpop.f32.mrb[0].mxu0
        %v4380 = vpop.f32.mrb[0].mxu0
        %v4381 = vadd.f32 0.0, %v4380
        %v4382 = vpop.f32.mrb[0].mxu0
        %4383 = vmatprep.mubr.bf16.mxu0 0
        %4384 = vmatmul.mubr.bf16.gmra.mrb[0].mxu0 %v4313
        %v4385 = vpop.f32.mrb[0].mxu0
        %v4386 = vadd.f32 0.0, %v4385
        %v4387 = vpop.f32.mrb[0].mxu0
        %v4388 = vpop.f32.mrb[0].mxu0
        %v4389 = vadd.f32 0.0, %v4388
        %v4390 = vpop.f32.mrb[0].mxu0
        %4391 = vmatprep.mubr.bf16.mxu0 0
        %4392 = vmatmul.mubr.bf16.gmra.mrb[0].mxu0 %v4316
        %v4393 = vpop.f32.mrb[0].mxu0
        %v4394 = vadd.f32 0.0, %v4393
        %v4395 = vpop.f32.mrb[0].mxu0
        %v4396 = vpop.f32.mrb[0].mxu0
        %v4397 = vadd.f32 0.0, %v4396
        %v4398 = vpop.f32.mrb[0].mxu0
        %4399 = vmatprep.mubr.bf16.mxu0 0
        %4400 = vmatmul.mubr.bf16.gmra.mrb[0].mxu0 %v4319
        %v4401 = vpop.f32.mrb[0].mxu0
        %v4402 = vadd.f32 0.0, %v4401
        %v4403 = vpop.f32.mrb[0].mxu0
        %v4404 = vpop.f32.mrb[0].mxu0
        %v4405 = vadd.f32 0.0, %v4404
        %v4406 = vpop.f32.mrb[0].mxu0
        %4407 = vmatprep.mubr.bf16.mxu0 0
        %4408 = vmatmul.mubr.bf16.gmra.mrb[0].mxu0 %v4322
        %v4409 = vpop.f32.mrb[0].mxu0
        %v4410 = vadd.f32 0.0, %v4409
        %v4411 = vpop.f32.mrb[0].mxu0
        %v4412 = vpop.f32.mrb[0].mxu0
        %v4413 = vadd.f32 0.0, %v4412
        %v4414 = vpop.f32.mrb[0].mxu0
        %4415 = vmatprep.mubr.bf16.mxu0 0
        %4416 = vmatmul.mubr.bf16.gmra.mrb[0].mxu0 %v4325
        %v4417 = vpop.f32.mrb[0].mxu0
        %v4418 = vadd.f32 0.0, %v4417
        %v4419 = vpop.f32.mrb[0].mxu0
        %v4420 = vpop.f32.mrb[0].mxu0
        %v4421 = vadd.f32 0.0, %v4420
        %v4422 = vpop.f32.mrb[0].mxu0
        %4423 = vdwg.mxu0
        %v4424 = vadd.f32 %v4211, %v4362
        %v4425 = vadd.f32 %v4212, %v4365
        %v4426 = vadd.f32 %v4213, %v4370
        %v4427 = vadd.f32 %v4214, %v4373
        %v4428 = vadd.f32 %v4215, %v4378
        %v4429 = vadd.f32 %v4216, %v4381
        %v4430 = vadd.f32 %v4217, %v4386
        %v4431 = vadd.f32 %v4218, %v4389
        %v4432 = vadd.f32 %v4219, %v4394
        %v4433 = vadd.f32 %v4220, %v4397
        %v4434 = vadd.f32 %v4221, %v4402
        %v4435 = vadd.f32 %v4222, %v4405
        %v4436 = vadd.f32 %v4223, %v4410
        %v4437 = vadd.f32 %v4224, %v4413
        %v4438 = vadd.f32 %v4225, %v4418
        %v4439 = vadd.f32 %v4226, %v4421
        %v4440 = vld [vmem:[%s4230] sm:$0xf]
        %v4441 = vld [vmem:[%s4230 + $0x4] sm:$0xf]
        %v4442 = vld [vmem:[%s4230 + $0x8] sm:$0x1]
        %v4443 = vld [vmem:[%s4230 + $0xc] sm:$0xf]
        %v4444 = vld [vmem:[%s4230 + $0x10] sm:$0xf]
        %v4445 = vld [vmem:[%s4230 + $0x14] sm:$0x1]
        %v4446 = vld [vmem:[%s4230 + $0x18] sm:$0xf]
        %v4447 = vld [vmem:[%s4230 + $0x1c] sm:$0xf]
        %v4448 = vld [vmem:[%s4230 + $0x20] sm:$0x1]
        %v4449 = vld [vmem:[%s4230 + $0x24] sm:$0xf]
        %v4450 = vld [vmem:[%s4230 + $0x28] sm:$0xf]
        %v4451 = vld [vmem:[%s4230 + $0x2c] sm:$0x1]
        %v4452 = vld [vmem:[%s4230 + $0x30] sm:$0xf]
        %v4453 = vld [vmem:[%s4230 + $0x34] sm:$0xf]
        %v4454 = vld [vmem:[%s4230 + $0x38] sm:$0x1]
        %v4455 = vld [vmem:[%s4230 + $0x3c] sm:$0xf]
        %v4456 = vld [vmem:[%s4230 + $0x40] sm:$0xf]
        %v4457 = vld [vmem:[%s4230 + $0x44] sm:$0x1]
        %v4458 = vld [vmem:[%s4230 + $0x48] sm:$0xf]
        %v4459 = vld [vmem:[%s4230 + $0x4c] sm:$0xf]
        %v4460 = vld [vmem:[%s4230 + $0x50] sm:$0x1]
        %v4461 = vld [vmem:[%s4230 + $0x54] sm:$0xf]
        %v4462 = vld [vmem:[%s4230 + $0x58] sm:$0xf]
        %v4463 = vld [vmem:[%s4230 + $0x5c] sm:$0x1]
        %v4465 = vshrl.u32 %v4440, 16
        %v4467 = vrot.slane %v4465, 4
        %v4468 = vshll.u32 %v4440, 16
        %v4470 = vrot.slane %v4468, 5
        %v4471 = vor.u32 %v4467, %v4470
        %v4472 = vrot.slane %v4471, 4
        %v4474 = vshll.u32 %v4441, 16
        %v4476 = vrot.slane %v4474, 5
        %v4477 = vsel %vm857, %v4472, %v4476
        %v4478 = vshrl.u32 %v4441, 16
        %v4480 = vrot.slane %v4478, 4
        %v4481 = vor.u32 %v4480, %v4476
        %v4482 = vrot.slane %v4481, 4
        %v4484 = vshll.u32 %v4442, 16
        %v4486 = vrot.slane %v4484, 5
        %v4487 = vsel %vm857, %v4482, %v4486
        %v4489 = vshrl.u32 %v4443, 16
        %v4491 = vrot.slane %v4489, 4
        %v4492 = vshll.u32 %v4443, 16
        %v4494 = vrot.slane %v4492, 5
        %v4495 = vor.u32 %v4491, %v4494
        %v4496 = vrot.slane %v4495, 4
        %v4498 = vshll.u32 %v4444, 16
        %v4500 = vrot.slane %v4498, 5
        %v4501 = vsel %vm857, %v4496, %v4500
        %v4502 = vshrl.u32 %v4444, 16
        %v4504 = vrot.slane %v4502, 4
        %v4505 = vor.u32 %v4504, %v4500
        %v4506 = vrot.slane %v4505, 4
        %v4508 = vshll.u32 %v4445, 16
        %v4510 = vrot.slane %v4508, 5
        %v4511 = vsel %vm857, %v4506, %v4510
        %v4513 = vshrl.u32 %v4446, 16
        %v4515 = vrot.slane %v4513, 4
        %v4516 = vshll.u32 %v4446, 16
        %v4518 = vrot.slane %v4516, 5
        %v4519 = vor.u32 %v4515, %v4518
        %v4520 = vrot.slane %v4519, 4
        %v4522 = vshll.u32 %v4447, 16
        %v4524 = vrot.slane %v4522, 5
        %v4525 = vsel %vm857, %v4520, %v4524
        %v4526 = vshrl.u32 %v4447, 16
        %v4528 = vrot.slane %v4526, 4
        %v4529 = vor.u32 %v4528, %v4524
        %v4530 = vrot.slane %v4529, 4
        %v4532 = vshll.u32 %v4448, 16
        %v4534 = vrot.slane %v4532, 5
        %v4535 = vsel %vm857, %v4530, %v4534
        %v4537 = vshrl.u32 %v4449, 16
        %v4539 = vrot.slane %v4537, 4
        %v4540 = vshll.u32 %v4449, 16
        %v4542 = vrot.slane %v4540, 5
        %v4543 = vor.u32 %v4539, %v4542
        %v4544 = vrot.slane %v4543, 4
        %v4546 = vshll.u32 %v4450, 16
        %v4548 = vrot.slane %v4546, 5
        %v4549 = vsel %vm857, %v4544, %v4548
        %v4550 = vshrl.u32 %v4450, 16
        %v4552 = vrot.slane %v4550, 4
        %v4553 = vor.u32 %v4552, %v4548
        %v4554 = vrot.slane %v4553, 4
        %v4556 = vshll.u32 %v4451, 16
        %v4558 = vrot.slane %v4556, 5
        %v4559 = vsel %vm857, %v4554, %v4558
        %v4561 = vshrl.u32 %v4452, 16
        %v4563 = vrot.slane %v4561, 4
        %v4564 = vshll.u32 %v4452, 16
        %v4566 = vrot.slane %v4564, 5
        %v4567 = vor.u32 %v4563, %v4566
        %v4568 = vrot.slane %v4567, 4
        %v4570 = vshll.u32 %v4453, 16
        %v4572 = vrot.slane %v4570, 5
        %v4573 = vsel %vm857, %v4568, %v4572
        %v4574 = vshrl.u32 %v4453, 16
        %v4576 = vrot.slane %v4574, 4
        %v4577 = vor.u32 %v4576, %v4572
        %v4578 = vrot.slane %v4577, 4
        %v4580 = vshll.u32 %v4454, 16
        %v4582 = vrot.slane %v4580, 5
        %v4583 = vsel %vm857, %v4578, %v4582
        %v4585 = vshrl.u32 %v4455, 16
        %v4587 = vrot.slane %v4585, 4
        %v4588 = vshll.u32 %v4455, 16
        %v4590 = vrot.slane %v4588, 5
        %v4591 = vor.u32 %v4587, %v4590
        %v4592 = vrot.slane %v4591, 4
        %v4594 = vshll.u32 %v4456, 16
        %v4596 = vrot.slane %v4594, 5
        %v4597 = vsel %vm857, %v4592, %v4596
        %v4598 = vshrl.u32 %v4456, 16
        %v4600 = vrot.slane %v4598, 4
        %v4601 = vor.u32 %v4600, %v4596
        %v4602 = vrot.slane %v4601, 4
        %v4604 = vshll.u32 %v4457, 16
        %v4606 = vrot.slane %v4604, 5
        %v4607 = vsel %vm857, %v4602, %v4606
        %v4609 = vshrl.u32 %v4458, 16
        %v4611 = vrot.slane %v4609, 4
        %v4612 = vshll.u32 %v4458, 16
        %v4614 = vrot.slane %v4612, 5
        %v4615 = vor.u32 %v4611, %v4614
        %v4616 = vrot.slane %v4615, 4
        %v4618 = vshll.u32 %v4459, 16
        %v4620 = vrot.slane %v4618, 5
        %v4621 = vsel %vm857, %v4616, %v4620
        %v4622 = vshrl.u32 %v4459, 16
        %v4624 = vrot.slane %v4622, 4
        %v4625 = vor.u32 %v4624, %v4620
        %v4626 = vrot.slane %v4625, 4
        %v4628 = vshll.u32 %v4460, 16
        %v4630 = vrot.slane %v4628, 5
        %v4631 = vsel %vm857, %v4626, %v4630
        %v4633 = vshrl.u32 %v4461, 16
        %v4635 = vrot.slane %v4633, 4
        %v4636 = vshll.u32 %v4461, 16
        %v4638 = vrot.slane %v4636, 5
        %v4639 = vor.u32 %v4635, %v4638
        %v4640 = vrot.slane %v4639, 4
        %v4642 = vshll.u32 %v4462, 16
        %v4644 = vrot.slane %v4642, 5
        %v4645 = vsel %vm857, %v4640, %v4644
        %v4646 = vshrl.u32 %v4462, 16
        %v4648 = vrot.slane %v4646, 4
        %v4649 = vor.u32 %v4648, %v4644
        %v4650 = vrot.slane %v4649, 4
        %v4652 = vshll.u32 %v4463, 16
        %v4654 = vrot.slane %v4652, 5
        %v4655 = vsel %vm857, %v4650, %v4654
        %v4656 = vld [vmem:[%s2077] sm:$0xf]
        %v4657 = vld [vmem:[%s2077 + $0x4] sm:$0xf]
        %v4658 = vld [vmem:[%s2077 + $0x8] sm:$0xf]
        %v4659 = vld [vmem:[%s2077 + $0xc] sm:$0xf]
        %v4660 = vunpack.c.l.b16 %v4477
        %v4661 = vunpack.c.l.b16 %v4487
        %v4662 = vunpack.c.l.b16 %v4501
        %v4663 = vunpack.c.l.b16 %v4511
        %v4664 = vunpack.c.l.b16 %v4525
        %v4665 = vunpack.c.l.b16 %v4535
        %v4666 = vunpack.c.l.b16 %v4549
        %v4667 = vunpack.c.l.b16 %v4559
        %v4668 = vunpack.c.l.b16 %v4573
        %v4669 = vunpack.c.l.b16 %v4583
        %v4670 = vunpack.c.l.b16 %v4597
        %v4671 = vunpack.c.l.b16 %v4607
        %v4672 = vunpack.c.l.b16 %v4621
        %v4673 = vunpack.c.l.b16 %v4631
        %v4674 = vunpack.c.l.b16 %v4645
        %v4675 = vunpack.c.l.b16 %v4655
        %v4676 = vpack.c.b16 %v4661, %v4660
        %v4677 = vpack.c.b16 %v4663, %v4662
        %v4678 = vpack.c.b16 %v4665, %v4664
        %v4679 = vpack.c.b16 %v4667, %v4666
        %v4680 = vpack.c.b16 %v4669, %v4668
        %v4681 = vpack.c.b16 %v4671, %v4670
        %v4682 = vpack.c.b16 %v4673, %v4672
        %v4683 = vpack.c.b16 %v4675, %v4674
        %v4688 = vunpack.c.l.b16 %v4656
        %v4689 = vunpack.c.l.b16 %v4657
        %v4690 = vunpack.c.l.b16 %v4658
        %v4691 = vunpack.c.l.b16 %v4659
        %v4692 = vpack.c.b16 %v4689, %v4688
        %v4693 = vpack.c.b16 %v4691, %v4690
        %v4697 = vsel %vm1091, %v4676, 0
        %v4700 = vsel %vm1091, %v4677, 0
        %v4703 = vsel %vm1091, %v4678, 0
        %v4706 = vsel %vm1091, %v4679, 0
        %v4709 = vsel %vm1091, %v4680, 0
        %v4712 = vsel %vm1091, %v4681, 0
        %v4715 = vsel %vm1091, %v4682, 0
        %v4718 = vsel %vm1091, %v4683, 0
        %4720 = vmatprep.subr.bf16.mxu0 0
        %4721 = vmatpush1.bf16.msra.mxu0 %v4692
        %4722 = vmatprep.subr.bf16.mxu0 0
        %4723 = vmatpush1.bf16.msra.mxu0 %v4693
        %4724 = vmatprep.subr.bf16.mxu0 0
        %4725 = vmatpush1.bf16.msra.mxu0 0
        %4726 = vmatprep.subr.bf16.mxu0 0
        %4727 = vmatpush1.bf16.msra.mxu0 0
        %4728 = vmatprep.subr.bf16.mxu0 0
        %4729 = vmatpush1.bf16.msra.mxu0 0
        %4730 = vmatprep.subr.bf16.mxu0 0
        %4731 = vmatpush1.bf16.msra.mxu0 0
        %4732 = vmatprep.subr.bf16.mxu0 0
        %4733 = vmatpush1.bf16.msra.mxu0 0
        %4734 = vmatprep.subr.bf16.mxu0 0
        %4735 = vmatpush1.bf16.msra.mxu0 0
        %4736 = vmatprep.subr.bf16.mxu0 0
        %4737 = vmatpush1.bf16.msra.mxu0 0
        %4738 = vmatprep.subr.bf16.mxu0 0
        %4739 = vmatpush1.bf16.msra.mxu0 0
        %4740 = vmatprep.subr.bf16.mxu0 0
        %4741 = vmatpush1.bf16.msra.mxu0 0
        %4742 = vmatprep.subr.bf16.mxu0 0
        %4743 = vmatpush1.bf16.msra.mxu0 0
        %4744 = vmatprep.subr.bf16.mxu0 0
        %4745 = vmatpush1.bf16.msra.mxu0 0
        %4746 = vmatprep.subr.bf16.mxu0 0
        %4747 = vmatpush1.bf16.msra.mxu0 0
        %4748 = vmatprep.subr.bf16.mxu0 0
        %4749 = vmatpush1.bf16.msra.mxu0 0
        %4750 = vmatprep.subr.bf16.mxu0 0
        %4751 = vmatpush1.bf16.msra.mxu0 0
        %4752 = vmatprep.mubr.bf16.mxu0 0
        %4753 = vmatmul.mubr.bf16.gmra.mrb[0].mxu0 %v4697
        %v4754 = vpop.f32.mrb[0].mxu0
        %v4755 = vadd.f32 0.0, %v4754
        %v4756 = vpop.f32.mrb[0].mxu0
        %v4757 = vpop.f32.mrb[0].mxu0
        %v4758 = vadd.f32 0.0, %v4757
        %v4759 = vpop.f32.mrb[0].mxu0
        %4760 = vmatprep.mubr.bf16.mxu0 0
        %4761 = vmatmul.mubr.bf16.gmra.mrb[0].mxu0 %v4700
        %v4762 = vpop.f32.mrb[0].mxu0
        %v4763 = vadd.f32 0.0, %v4762
        %v4764 = vpop.f32.mrb[0].mxu0
        %v4765 = vpop.f32.mrb[0].mxu0
        %v4766 = vadd.f32 0.0, %v4765
        %v4767 = vpop.f32.mrb[0].mxu0
        %4768 = vmatprep.mubr.bf16.mxu0 0
        %4769 = vmatmul.mubr.bf16.gmra.mrb[0].mxu0 %v4703
        %v4770 = vpop.f32.mrb[0].mxu0
        %v4771 = vadd.f32 0.0, %v4770
        %v4772 = vpop.f32.mrb[0].mxu0
        %v4773 = vpop.f32.mrb[0].mxu0
        %v4774 = vadd.f32 0.0, %v4773
        %v4775 = vpop.f32.mrb[0].mxu0
        %4776 = vmatprep.mubr.bf16.mxu0 0
        %4777 = vmatmul.mubr.bf16.gmra.mrb[0].mxu0 %v4706
        %v4778 = vpop.f32.mrb[0].mxu0
        %v4779 = vadd.f32 0.0, %v4778
        %v4780 = vpop.f32.mrb[0].mxu0
        %v4781 = vpop.f32.mrb[0].mxu0
        %v4782 = vadd.f32 0.0, %v4781
        %v4783 = vpop.f32.mrb[0].mxu0
        %4784 = vmatprep.mubr.bf16.mxu0 0
        %4785 = vmatmul.mubr.bf16.gmra.mrb[0].mxu0 %v4709
        %v4786 = vpop.f32.mrb[0].mxu0
        %v4787 = vadd.f32 0.0, %v4786
        %v4788 = vpop.f32.mrb[0].mxu0
        %v4789 = vpop.f32.mrb[0].mxu0
        %v4790 = vadd.f32 0.0, %v4789
        %v4791 = vpop.f32.mrb[0].mxu0
        %4792 = vmatprep.mubr.bf16.mxu0 0
        %4793 = vmatmul.mubr.bf16.gmra.mrb[0].mxu0 %v4712
        %v4794 = vpop.f32.mrb[0].mxu0
        %v4795 = vadd.f32 0.0, %v4794
        %v4796 = vpop.f32.mrb[0].mxu0
        %v4797 = vpop.f32.mrb[0].mxu0
        %v4798 = vadd.f32 0.0, %v4797
        %v4799 = vpop.f32.mrb[0].mxu0
        %4800 = vmatprep.mubr.bf16.mxu0 0
        %4801 = vmatmul.mubr.bf16.gmra.mrb[0].mxu0 %v4715
        %v4802 = vpop.f32.mrb[0].mxu0
        %v4803 = vadd.f32 0.0, %v4802
        %v4804 = vpop.f32.mrb[0].mxu0
        %v4805 = vpop.f32.mrb[0].mxu0
        %v4806 = vadd.f32 0.0, %v4805
        %v4807 = vpop.f32.mrb[0].mxu0
        %4808 = vmatprep.mubr.bf16.mxu0 0
        %4809 = vmatmul.mubr.bf16.gmra.mrb[0].mxu0 %v4718
        %v4810 = vpop.f32.mrb[0].mxu0
        %v4811 = vadd.f32 0.0, %v4810
        %v4812 = vpop.f32.mrb[0].mxu0
        %v4813 = vpop.f32.mrb[0].mxu0
        %v4814 = vadd.f32 0.0, %v4813
        %v4815 = vpop.f32.mrb[0].mxu0
        %4816 = vdwg.mxu0
        %v4817 = vadd.f32 %v4424, %v4755
        %v4818 = vadd.f32 %v4425, %v4758
        %v4819 = vadd.f32 %v4426, %v4763
        %v4820 = vadd.f32 %v4427, %v4766
        %v4821 = vadd.f32 %v4428, %v4771
        %v4822 = vadd.f32 %v4429, %v4774
        %v4823 = vadd.f32 %v4430, %v4779
        %v4824 = vadd.f32 %v4431, %v4782
        %v4825 = vadd.f32 %v4432, %v4787
        %v4826 = vadd.f32 %v4433, %v4790
        %v4827 = vadd.f32 %v4434, %v4795
        %v4828 = vadd.f32 %v4435, %v4798
        %v4829 = vadd.f32 %v4436, %v4803
        %v4830 = vadd.f32 %v4437, %v4806
        %v4831 = vadd.f32 %v4438, %v4811
        %v4832 = vadd.f32 %v4439, %v4814
        %v4833 = vld [vmem:[%s4230] sm:$0xe]
        %v4834 = vld [vmem:[%s4230 + $0xc] sm:$0xe]
        %v4835 = vld [vmem:[%s4230 + $0x18] sm:$0xe]
        %v4836 = vld [vmem:[%s4230 + $0x24] sm:$0xe]
        %v4837 = vld [vmem:[%s4230 + $0x30] sm:$0xe]
        %v4838 = vld [vmem:[%s4230 + $0x3c] sm:$0xe]
        %v4839 = vld [vmem:[%s4230 + $0x48] sm:$0xe]
        %v4840 = vld [vmem:[%s4230 + $0x54] sm:$0xe]
        %v4865 = vrot.slane %v4833, 5
        %v4866 = vrot.slane %v4865, 4
        %v4867 = vrot.slane %v4441, 5
        %v4868 = vsel %vm1412, %v4866, %v4867
        %v4869 = vrot.slane %v4867, 4
        %v4870 = vrot.slane %v4442, 5
        %v4871 = vsel %vm1412, %v4869, %v4870
        %v4872 = vrot.slane %v4834, 5
        %v4873 = vrot.slane %v4872, 4
        %v4874 = vrot.slane %v4444, 5
        %v4875 = vsel %vm1412, %v4873, %v4874
        %v4876 = vrot.slane %v4874, 4
        %v4877 = vrot.slane %v4445, 5
        %v4878 = vsel %vm1412, %v4876, %v4877
        %v4879 = vrot.slane %v4835, 5
        %v4880 = vrot.slane %v4879, 4
        %v4881 = vrot.slane %v4447, 5
        %v4882 = vsel %vm1412, %v4880, %v4881
        %v4883 = vrot.slane %v4881, 4
        %v4884 = vrot.slane %v4448, 5
        %v4885 = vsel %vm1412, %v4883, %v4884
        %v4886 = vrot.slane %v4836, 5
        %v4887 = vrot.slane %v4886, 4
        %v4888 = vrot.slane %v4450, 5
        %v4889 = vsel %vm1412, %v4887, %v4888
        %v4890 = vrot.slane %v4888, 4
        %v4891 = vrot.slane %v4451, 5
        %v4892 = vsel %vm1412, %v4890, %v4891
        %v4893 = vrot.slane %v4837, 5
        %v4894 = vrot.slane %v4893, 4
        %v4895 = vrot.slane %v4453, 5
        %v4896 = vsel %vm1412, %v4894, %v4895
        %v4897 = vrot.slane %v4895, 4
        %v4898 = vrot.slane %v4454, 5
        %v4899 = vsel %vm1412, %v4897, %v4898
        %v4900 = vrot.slane %v4838, 5
        %v4901 = vrot.slane %v4900, 4
        %v4902 = vrot.slane %v4456, 5
        %v4903 = vsel %vm1412, %v4901, %v4902
        %v4904 = vrot.slane %v4902, 4
        %v4905 = vrot.slane %v4457, 5
        %v4906 = vsel %vm1412, %v4904, %v4905
        %v4907 = vrot.slane %v4839, 5
        %v4908 = vrot.slane %v4907, 4
        %v4909 = vrot.slane %v4459, 5
        %v4910 = vsel %vm1412, %v4908, %v4909
        %v4911 = vrot.slane %v4909, 4
        %v4912 = vrot.slane %v4460, 5
        %v4913 = vsel %vm1412, %v4911, %v4912
        %v4914 = vrot.slane %v4840, 5
        %v4915 = vrot.slane %v4914, 4
        %v4916 = vrot.slane %v4462, 5
        %v4917 = vsel %vm1412, %v4915, %v4916
        %v4918 = vrot.slane %v4916, 4
        %v4919 = vrot.slane %v4463, 5
        %v4920 = vsel %vm1412, %v4918, %v4919
        %v4921 = vld [vmem:[%s2343] sm:$0xf]
        %v4922 = vld [vmem:[%s2343 + $0x4] sm:$0xf]
        %v4923 = vld [vmem:[%s2343 + $0x8] sm:$0xf]
        %v4924 = vld [vmem:[%s2343 + $0xc] sm:$0xf]
        %v4925 = vunpack.c.l.b16 %v4868
        %v4926 = vunpack.c.l.b16 %v4871
        %v4927 = vunpack.c.l.b16 %v4875
        %v4928 = vunpack.c.l.b16 %v4878
        %v4929 = vunpack.c.l.b16 %v4882
        %v4930 = vunpack.c.l.b16 %v4885
        %v4931 = vunpack.c.l.b16 %v4889
        %v4932 = vunpack.c.l.b16 %v4892
        %v4933 = vunpack.c.l.b16 %v4896
        %v4934 = vunpack.c.l.b16 %v4899
        %v4935 = vunpack.c.l.b16 %v4903
        %v4936 = vunpack.c.l.b16 %v4906
        %v4937 = vunpack.c.l.b16 %v4910
        %v4938 = vunpack.c.l.b16 %v4913
        %v4939 = vunpack.c.l.b16 %v4917
        %v4940 = vunpack.c.l.b16 %v4920
        %v4941 = vpack.c.b16 %v4926, %v4925
        %v4942 = vpack.c.b16 %v4928, %v4927
        %v4943 = vpack.c.b16 %v4930, %v4929
        %v4944 = vpack.c.b16 %v4932, %v4931
        %v4945 = vpack.c.b16 %v4934, %v4933
        %v4946 = vpack.c.b16 %v4936, %v4935
        %v4947 = vpack.c.b16 %v4938, %v4937
        %v4948 = vpack.c.b16 %v4940, %v4939
        %v4953 = vunpack.c.l.b16 %v4921
        %v4954 = vunpack.c.l.b16 %v4922
        %v4955 = vunpack.c.l.b16 %v4923
        %v4956 = vunpack.c.l.b16 %v4924
        %v4957 = vpack.c.b16 %v4954, %v4953
        %v4958 = vpack.c.b16 %v4956, %v4955
        %v4962 = vsel %vm1091, %v4941, 0
        %v4965 = vsel %vm1091, %v4942, 0
        %v4968 = vsel %vm1091, %v4943, 0
        %v4971 = vsel %vm1091, %v4944, 0
        %v4974 = vsel %vm1091, %v4945, 0
        %v4977 = vsel %vm1091, %v4946, 0
        %v4980 = vsel %vm1091, %v4947, 0
        %v4983 = vsel %vm1091, %v4948, 0
        %4985 = vmatprep.subr.bf16.mxu0 0
        %4986 = vmatpush1.bf16.msra.mxu0 %v4957
        %4987 = vmatprep.subr.bf16.mxu0 0
        %4988 = vmatpush1.bf16.msra.mxu0 %v4958
        %4989 = vmatprep.subr.bf16.mxu0 0
        %4990 = vmatpush1.bf16.msra.mxu0 0
        %4991 = vmatprep.subr.bf16.mxu0 0
        %4992 = vmatpush1.bf16.msra.mxu0 0
        %4993 = vmatprep.subr.bf16.mxu0 0
        %4994 = vmatpush1.bf16.msra.mxu0 0
        %4995 = vmatprep.subr.bf16.mxu0 0
        %4996 = vmatpush1.bf16.msra.mxu0 0
        %4997 = vmatprep.subr.bf16.mxu0 0
        %4998 = vmatpush1.bf16.msra.mxu0 0
        %4999 = vmatprep.subr.bf16.mxu0 0
        %5000 = vmatpush1.bf16.msra.mxu0 0
        %5001 = vmatprep.subr.bf16.mxu0 0
        %5002 = vmatpush1.bf16.msra.mxu0 0
        %5003 = vmatprep.subr.bf16.mxu0 0
        %5004 = vmatpush1.bf16.msra.mxu0 0
        %5005 = vmatprep.subr.bf16.mxu0 0
        %5006 = vmatpush1.bf16.msra.mxu0 0
        %5007 = vmatprep.subr.bf16.mxu0 0
        %5008 = vmatpush1.bf16.msra.mxu0 0
        %5009 = vmatprep.subr.bf16.mxu0 0
        %5010 = vmatpush1.bf16.msra.mxu0 0
        %5011 = vmatprep.subr.bf16.mxu0 0
        %5012 = vmatpush1.bf16.msra.mxu0 0
        %5013 = vmatprep.subr.bf16.mxu0 0
        %5014 = vmatpush1.bf16.msra.mxu0 0
        %5015 = vmatprep.subr.bf16.mxu0 0
        %5016 = vmatpush1.bf16.msra.mxu0 0
        %5017 = vmatprep.mubr.bf16.mxu0 0
        %5018 = vmatmul.mubr.bf16.gmra.mrb[0].mxu0 %v4962
        %v5019 = vpop.f32.mrb[0].mxu0
        %v5020 = vadd.f32 0.0, %v5019
        %v5021 = vpop.f32.mrb[0].mxu0
        %v5022 = vpop.f32.mrb[0].mxu0
        %v5023 = vadd.f32 0.0, %v5022
        %v5024 = vpop.f32.mrb[0].mxu0
        %5025 = vmatprep.mubr.bf16.mxu0 0
        %5026 = vmatmul.mubr.bf16.gmra.mrb[0].mxu0 %v4965
        %v5027 = vpop.f32.mrb[0].mxu0
        %v5028 = vadd.f32 0.0, %v5027
        %v5029 = vpop.f32.mrb[0].mxu0
        %v5030 = vpop.f32.mrb[0].mxu0
        %v5031 = vadd.f32 0.0, %v5030
        %v5032 = vpop.f32.mrb[0].mxu0
        %5033 = vmatprep.mubr.bf16.mxu0 0
        %5034 = vmatmul.mubr.bf16.gmra.mrb[0].mxu0 %v4968
        %v5035 = vpop.f32.mrb[0].mxu0
        %v5036 = vadd.f32 0.0, %v5035
        %v5037 = vpop.f32.mrb[0].mxu0
        %v5038 = vpop.f32.mrb[0].mxu0
        %v5039 = vadd.f32 0.0, %v5038
        %v5040 = vpop.f32.mrb[0].mxu0
        %5041 = vmatprep.mubr.bf16.mxu0 0
        %5042 = vmatmul.mubr.bf16.gmra.mrb[0].mxu0 %v4971
        %v5043 = vpop.f32.mrb[0].mxu0
        %v5044 = vadd.f32 0.0, %v5043
        %v5045 = vpop.f32.mrb[0].mxu0
        %v5046 = vpop.f32.mrb[0].mxu0
        %v5047 = vadd.f32 0.0, %v5046
        %v5048 = vpop.f32.mrb[0].mxu0
        %5049 = vmatprep.mubr.bf16.mxu0 0
        %5050 = vmatmul.mubr.bf16.gmra.mrb[0].mxu0 %v4974
        %v5051 = vpop.f32.mrb[0].mxu0
        %v5052 = vadd.f32 0.0, %v5051
        %v5053 = vpop.f32.mrb[0].mxu0
        %v5054 = vpop.f32.mrb[0].mxu0
        %v5055 = vadd.f32 0.0, %v5054
        %v5056 = vpop.f32.mrb[0].mxu0
        %5057 = vmatprep.mubr.bf16.mxu0 0
        %5058 = vmatmul.mubr.bf16.gmra.mrb[0].mxu0 %v4977
        %v5059 = vpop.f32.mrb[0].mxu0
        %v5060 = vadd.f32 0.0, %v5059
        %v5061 = vpop.f32.mrb[0].mxu0
        %v5062 = vpop.f32.mrb[0].mxu0
        %v5063 = vadd.f32 0.0, %v5062
        %v5064 = vpop.f32.mrb[0].mxu0
        %5065 = vmatprep.mubr.bf16.mxu0 0
        %5066 = vmatmul.mubr.bf16.gmra.mrb[0].mxu0 %v4980
        %v5067 = vpop.f32.mrb[0].mxu0
        %v5068 = vadd.f32 0.0, %v5067
        %v5069 = vpop.f32.mrb[0].mxu0
        %v5070 = vpop.f32.mrb[0].mxu0
        %v5071 = vadd.f32 0.0, %v5070
        %v5072 = vpop.f32.mrb[0].mxu0
        %5073 = vmatprep.mubr.bf16.mxu0 0
        %5074 = vmatmul.mubr.bf16.gmra.mrb[0].mxu0 %v4983
        %v5075 = vpop.f32.mrb[0].mxu0
        %v5076 = vadd.f32 0.0, %v5075
        %v5077 = vpop.f32.mrb[0].mxu0
        %v5078 = vpop.f32.mrb[0].mxu0
        %v5079 = vadd.f32 0.0, %v5078
        %v5080 = vpop.f32.mrb[0].mxu0
        %5081 = vdwg.mxu0
        %v5082 = vadd.f32 %v4817, %v5020
        %v5083 = vadd.f32 %v4818, %v5023
        %v5084 = vadd.f32 %v4819, %v5028
        %v5085 = vadd.f32 %v4820, %v5031
        %v5086 = vadd.f32 %v4821, %v5036
        %v5087 = vadd.f32 %v4822, %v5039
        %v5088 = vadd.f32 %v4823, %v5044
        %v5089 = vadd.f32 %v4824, %v5047
        %v5090 = vadd.f32 %v4825, %v5052
        %v5091 = vadd.f32 %v4826, %v5055
        %v5092 = vadd.f32 %v4827, %v5060
        %v5093 = vadd.f32 %v4828, %v5063
        %v5094 = vadd.f32 %v4829, %v5068
        %v5095 = vadd.f32 %v4830, %v5071
        %v5096 = vadd.f32 %v4831, %v5076
        %v5097 = vadd.f32 %v4832, %v5079
        %s5098 = sadd.s32 8, 2
        %s5099 = smul.u32 %s5098, 3
        %s5100 = smul.addr %s5099, 4
        %s5101 = scalar_lea.vmem [#allocation2], %s5100
        %v5102 = vld [vmem:[%s5101] sm:$0xf]
        %v5103 = vld [vmem:[%s5101 + $0x4] sm:$0xf]
        %v5104 = vld [vmem:[%s5101 + $0xc] sm:$0xf]
        %v5105 = vld [vmem:[%s5101 + $0x10] sm:$0xf]
        %v5106 = vld [vmem:[%s5101 + $0x18] sm:$0xf]
        %v5107 = vld [vmem:[%s5101 + $0x1c] sm:$0xf]
        %v5108 = vld [vmem:[%s5101 + $0x24] sm:$0xf]
        %v5109 = vld [vmem:[%s5101 + $0x28] sm:$0xf]
        %v5110 = vld [vmem:[%s5101 + $0x30] sm:$0xf]
        %v5111 = vld [vmem:[%s5101 + $0x34] sm:$0xf]
        %v5112 = vld [vmem:[%s5101 + $0x3c] sm:$0xf]
        %v5113 = vld [vmem:[%s5101 + $0x40] sm:$0xf]
        %v5114 = vld [vmem:[%s5101 + $0x48] sm:$0xf]
        %v5115 = vld [vmem:[%s5101 + $0x4c] sm:$0xf]
        %v5116 = vld [vmem:[%s5101 + $0x54] sm:$0xf]
        %v5117 = vld [vmem:[%s5101 + $0x58] sm:$0xf]
        %v5118 = vld [vmem:[%s2541] sm:$0xf]
        %v5119 = vld [vmem:[%s2541 + $0x4] sm:$0xf]
        %v5120 = vld [vmem:[%s2541 + $0x8] sm:$0xf]
        %v5121 = vld [vmem:[%s2541 + $0xc] sm:$0xf]
        %v5138 = vunpack.c.l.b16 %v5102
        %v5139 = vunpack.c.l.b16 %v5103
        %v5140 = vunpack.c.l.b16 %v5104
        %v5141 = vunpack.c.l.b16 %v5105
        %v5142 = vunpack.c.l.b16 %v5106
        %v5143 = vunpack.c.l.b16 %v5107
        %v5144 = vunpack.c.l.b16 %v5108
        %v5145 = vunpack.c.l.b16 %v5109
        %v5146 = vunpack.c.l.b16 %v5110
        %v5147 = vunpack.c.l.b16 %v5111
        %v5148 = vunpack.c.l.b16 %v5112
        %v5149 = vunpack.c.l.b16 %v5113
        %v5150 = vunpack.c.l.b16 %v5114
        %v5151 = vunpack.c.l.b16 %v5115
        %v5152 = vunpack.c.l.b16 %v5116
        %v5153 = vunpack.c.l.b16 %v5117
        %v5154 = vpack.c.b16 %v5139, %v5138
        %v5155 = vpack.c.b16 %v5141, %v5140
        %v5156 = vpack.c.b16 %v5143, %v5142
        %v5157 = vpack.c.b16 %v5145, %v5144
        %v5158 = vpack.c.b16 %v5147, %v5146
        %v5159 = vpack.c.b16 %v5149, %v5148
        %v5160 = vpack.c.b16 %v5151, %v5150
        %v5161 = vpack.c.b16 %v5153, %v5152
        %v5166 = vunpack.c.l.b16 %v5118
        %v5167 = vunpack.c.l.b16 %v5119
        %v5168 = vunpack.c.l.b16 %v5120
        %v5169 = vunpack.c.l.b16 %v5121
        %v5170 = vpack.c.b16 %v5167, %v5166
        %v5171 = vpack.c.b16 %v5169, %v5168
        %v5175 = vsel %vm1091, %v5154, 0
        %v5178 = vsel %vm1091, %v5155, 0
        %v5181 = vsel %vm1091, %v5156, 0
        %v5184 = vsel %vm1091, %v5157, 0
        %v5187 = vsel %vm1091, %v5158, 0
        %v5190 = vsel %vm1091, %v5159, 0
        %v5193 = vsel %vm1091, %v5160, 0
        %v5196 = vsel %vm1091, %v5161, 0
        %5198 = vmatprep.subr.bf16.mxu0 0
        %5199 = vmatpush1.bf16.msra.mxu0 %v5170
        %5200 = vmatprep.subr.bf16.mxu0 0
        %5201 = vmatpush1.bf16.msra.mxu0 %v5171
        %5202 = vmatprep.subr.bf16.mxu0 0
        %5203 = vmatpush1.bf16.msra.mxu0 0
        %5204 = vmatprep.subr.bf16.mxu0 0
        %5205 = vmatpush1.bf16.msra.mxu0 0
        %5206 = vmatprep.subr.bf16.mxu0 0
        %5207 = vmatpush1.bf16.msra.mxu0 0
        %5208 = vmatprep.subr.bf16.mxu0 0
        %5209 = vmatpush1.bf16.msra.mxu0 0
        %5210 = vmatprep.subr.bf16.mxu0 0
        %5211 = vmatpush1.bf16.msra.mxu0 0
        %5212 = vmatprep.subr.bf16.mxu0 0
        %5213 = vmatpush1.bf16.msra.mxu0 0
        %5214 = vmatprep.subr.bf16.mxu0 0
        %5215 = vmatpush1.bf16.msra.mxu0 0
        %5216 = vmatprep.subr.bf16.mxu0 0
        %5217 = vmatpush1.bf16.msra.mxu0 0
        %5218 = vmatprep.subr.bf16.mxu0 0
        %5219 = vmatpush1.bf16.msra.mxu0 0
        %5220 = vmatprep.subr.bf16.mxu0 0
        %5221 = vmatpush1.bf16.msra.mxu0 0
        %5222 = vmatprep.subr.bf16.mxu0 0
        %5223 = vmatpush1.bf16.msra.mxu0 0
        %5224 = vmatprep.subr.bf16.mxu0 0
        %5225 = vmatpush1.bf16.msra.mxu0 0
        %5226 = vmatprep.subr.bf16.mxu0 0
        %5227 = vmatpush1.bf16.msra.mxu0 0
        %5228 = vmatprep.subr.bf16.mxu0 0
        %5229 = vmatpush1.bf16.msra.mxu0 0
        %5230 = vmatprep.mubr.bf16.mxu0 0
        %5231 = vmatmul.mubr.bf16.gmra.mrb[0].mxu0 %v5175
        %v5232 = vpop.f32.mrb[0].mxu0
        %v5233 = vadd.f32 0.0, %v5232
        %v5234 = vpop.f32.mrb[0].mxu0
        %v5235 = vpop.f32.mrb[0].mxu0
        %v5236 = vadd.f32 0.0, %v5235
        %v5237 = vpop.f32.mrb[0].mxu0
        %5238 = vmatprep.mubr.bf16.mxu0 0
        %5239 = vmatmul.mubr.bf16.gmra.mrb[0].mxu0 %v5178
        %v5240 = vpop.f32.mrb[0].mxu0
        %v5241 = vadd.f32 0.0, %v5240
        %v5242 = vpop.f32.mrb[0].mxu0
        %v5243 = vpop.f32.mrb[0].mxu0
        %v5244 = vadd.f32 0.0, %v5243
        %v5245 = vpop.f32.mrb[0].mxu0
        %5246 = vmatprep.mubr.bf16.mxu0 0
        %5247 = vmatmul.mubr.bf16.gmra.mrb[0].mxu0 %v5181
        %v5248 = vpop.f32.mrb[0].mxu0
        %v5249 = vadd.f32 0.0, %v5248
        %v5250 = vpop.f32.mrb[0].mxu0
        %v5251 = vpop.f32.mrb[0].mxu0
        %v5252 = vadd.f32 0.0, %v5251
        %v5253 = vpop.f32.mrb[0].mxu0
        %5254 = vmatprep.mubr.bf16.mxu0 0
        %5255 = vmatmul.mubr.bf16.gmra.mrb[0].mxu0 %v5184
        %v5256 = vpop.f32.mrb[0].mxu0
        %v5257 = vadd.f32 0.0, %v5256
        %v5258 = vpop.f32.mrb[0].mxu0
        %v5259 = vpop.f32.mrb[0].mxu0
        %v5260 = vadd.f32 0.0, %v5259
        %v5261 = vpop.f32.mrb[0].mxu0
        %5262 = vmatprep.mubr.bf16.mxu0 0
        %5263 = vmatmul.mubr.bf16.gmra.mrb[0].mxu0 %v5187
        %v5264 = vpop.f32.mrb[0].mxu0
        %v5265 = vadd.f32 0.0, %v5264
        %v5266 = vpop.f32.mrb[0].mxu0
        %v5267 = vpop.f32.mrb[0].mxu0
        %v5268 = vadd.f32 0.0, %v5267
        %v5269 = vpop.f32.mrb[0].mxu0
        %5270 = vmatprep.mubr.bf16.mxu0 0
        %5271 = vmatmul.mubr.bf16.gmra.mrb[0].mxu0 %v5190
        %v5272 = vpop.f32.mrb[0].mxu0
        %v5273 = vadd.f32 0.0, %v5272
        %v5274 = vpop.f32.mrb[0].mxu0
        %v5275 = vpop.f32.mrb[0].mxu0
        %v5276 = vadd.f32 0.0, %v5275
        %v5277 = vpop.f32.mrb[0].mxu0
        %5278 = vmatprep.mubr.bf16.mxu0 0
        %5279 = vmatmul.mubr.bf16.gmra.mrb[0].mxu0 %v5193
        %v5280 = vpop.f32.mrb[0].mxu0
        %v5281 = vadd.f32 0.0, %v5280
        %v5282 = vpop.f32.mrb[0].mxu0
        %v5283 = vpop.f32.mrb[0].mxu0
        %v5284 = vadd.f32 0.0, %v5283
        %v5285 = vpop.f32.mrb[0].mxu0
        %5286 = vmatprep.mubr.bf16.mxu0 0
        %5287 = vmatmul.mubr.bf16.gmra.mrb[0].mxu0 %v5196
        %v5288 = vpop.f32.mrb[0].mxu0
        %v5289 = vadd.f32 0.0, %v5288
        %v5290 = vpop.f32.mrb[0].mxu0
        %v5291 = vpop.f32.mrb[0].mxu0
        %v5292 = vadd.f32 0.0, %v5291
        %v5293 = vpop.f32.mrb[0].mxu0
        %5294 = vdwg.mxu0
        %v5295 = vadd.f32 %v5082, %v5233
        %v5296 = vadd.f32 %v5083, %v5236
        %v5297 = vadd.f32 %v5084, %v5241
        %v5298 = vadd.f32 %v5085, %v5244
        %v5299 = vadd.f32 %v5086, %v5249
        %v5300 = vadd.f32 %v5087, %v5252
        %v5301 = vadd.f32 %v5088, %v5257
        %v5302 = vadd.f32 %v5089, %v5260
        %v5303 = vadd.f32 %v5090, %v5265
        %v5304 = vadd.f32 %v5091, %v5268
        %v5305 = vadd.f32 %v5092, %v5273
        %v5306 = vadd.f32 %v5093, %v5276
        %v5307 = vadd.f32 %v5094, %v5281
        %v5308 = vadd.f32 %v5095, %v5284
        %v5309 = vadd.f32 %v5096, %v5289
        %v5310 = vadd.f32 %v5097, %v5292
        %v5311 = vld [vmem:[%s5101] sm:$0xf]
        %v5312 = vld [vmem:[%s5101 + $0x4] sm:$0xf]
        %v5313 = vld [vmem:[%s5101 + $0x8] sm:$0x1]
        %v5314 = vld [vmem:[%s5101 + $0xc] sm:$0xf]
        %v5315 = vld [vmem:[%s5101 + $0x10] sm:$0xf]
        %v5316 = vld [vmem:[%s5101 + $0x14] sm:$0x1]
        %v5317 = vld [vmem:[%s5101 + $0x18] sm:$0xf]
        %v5318 = vld [vmem:[%s5101 + $0x1c] sm:$0xf]
        %v5319 = vld [vmem:[%s5101 + $0x20] sm:$0x1]
        %v5320 = vld [vmem:[%s5101 + $0x24] sm:$0xf]
        %v5321 = vld [vmem:[%s5101 + $0x28] sm:$0xf]
        %v5322 = vld [vmem:[%s5101 + $0x2c] sm:$0x1]
        %v5323 = vld [vmem:[%s5101 + $0x30] sm:$0xf]
        %v5324 = vld [vmem:[%s5101 + $0x34] sm:$0xf]
        %v5325 = vld [vmem:[%s5101 + $0x38] sm:$0x1]
        %v5326 = vld [vmem:[%s5101 + $0x3c] sm:$0xf]
        %v5327 = vld [vmem:[%s5101 + $0x40] sm:$0xf]
        %v5328 = vld [vmem:[%s5101 + $0x44] sm:$0x1]
        %v5329 = vld [vmem:[%s5101 + $0x48] sm:$0xf]
        %v5330 = vld [vmem:[%s5101 + $0x4c] sm:$0xf]
        %v5331 = vld [vmem:[%s5101 + $0x50] sm:$0x1]
        %v5332 = vld [vmem:[%s5101 + $0x54] sm:$0xf]
        %v5333 = vld [vmem:[%s5101 + $0x58] sm:$0xf]
        %v5334 = vld [vmem:[%s5101 + $0x5c] sm:$0x1]
        %v5336 = vshrl.u32 %v5311, 16
        %v5338 = vrot.slane %v5336, 4
        %v5339 = vshll.u32 %v5311, 16
        %v5341 = vrot.slane %v5339, 5
        %v5342 = vor.u32 %v5338, %v5341
        %v5343 = vrot.slane %v5342, 4
        %v5345 = vshll.u32 %v5312, 16
        %v5347 = vrot.slane %v5345, 5
        %v5348 = vsel %vm857, %v5343, %v5347
        %v5349 = vshrl.u32 %v5312, 16
        %v5351 = vrot.slane %v5349, 4
        %v5352 = vor.u32 %v5351, %v5347
        %v5353 = vrot.slane %v5352, 4
        %v5355 = vshll.u32 %v5313, 16
        %v5357 = vrot.slane %v5355, 5
        %v5358 = vsel %vm857, %v5353, %v5357
        %v5360 = vshrl.u32 %v5314, 16
        %v5362 = vrot.slane %v5360, 4
        %v5363 = vshll.u32 %v5314, 16
        %v5365 = vrot.slane %v5363, 5
        %v5366 = vor.u32 %v5362, %v5365
        %v5367 = vrot.slane %v5366, 4
        %v5369 = vshll.u32 %v5315, 16
        %v5371 = vrot.slane %v5369, 5
        %v5372 = vsel %vm857, %v5367, %v5371
        %v5373 = vshrl.u32 %v5315, 16
        %v5375 = vrot.slane %v5373, 4
        %v5376 = vor.u32 %v5375, %v5371
        %v5377 = vrot.slane %v5376, 4
        %v5379 = vshll.u32 %v5316, 16
        %v5381 = vrot.slane %v5379, 5
        %v5382 = vsel %vm857, %v5377, %v5381
        %v5384 = vshrl.u32 %v5317, 16
        %v5386 = vrot.slane %v5384, 4
        %v5387 = vshll.u32 %v5317, 16
        %v5389 = vrot.slane %v5387, 5
        %v5390 = vor.u32 %v5386, %v5389
        %v5391 = vrot.slane %v5390, 4
        %v5393 = vshll.u32 %v5318, 16
        %v5395 = vrot.slane %v5393, 5
        %v5396 = vsel %vm857, %v5391, %v5395
        %v5397 = vshrl.u32 %v5318, 16
        %v5399 = vrot.slane %v5397, 4
        %v5400 = vor.u32 %v5399, %v5395
        %v5401 = vrot.slane %v5400, 4
        %v5403 = vshll.u32 %v5319, 16
        %v5405 = vrot.slane %v5403, 5
        %v5406 = vsel %vm857, %v5401, %v5405
        %v5408 = vshrl.u32 %v5320, 16
        %v5410 = vrot.slane %v5408, 4
        %v5411 = vshll.u32 %v5320, 16
        %v5413 = vrot.slane %v5411, 5
        %v5414 = vor.u32 %v5410, %v5413
        %v5415 = vrot.slane %v5414, 4
        %v5417 = vshll.u32 %v5321, 16
        %v5419 = vrot.slane %v5417, 5
        %v5420 = vsel %vm857, %v5415, %v5419
        %v5421 = vshrl.u32 %v5321, 16
        %v5423 = vrot.slane %v5421, 4
        %v5424 = vor.u32 %v5423, %v5419
        %v5425 = vrot.slane %v5424, 4
        %v5427 = vshll.u32 %v5322, 16
        %v5429 = vrot.slane %v5427, 5
        %v5430 = vsel %vm857, %v5425, %v5429
        %v5432 = vshrl.u32 %v5323, 16
        %v5434 = vrot.slane %v5432, 4
        %v5435 = vshll.u32 %v5323, 16
        %v5437 = vrot.slane %v5435, 5
        %v5438 = vor.u32 %v5434, %v5437
        %v5439 = vrot.slane %v5438, 4
        %v5441 = vshll.u32 %v5324, 16
        %v5443 = vrot.slane %v5441, 5
        %v5444 = vsel %vm857, %v5439, %v5443
        %v5445 = vshrl.u32 %v5324, 16
        %v5447 = vrot.slane %v5445, 4
        %v5448 = vor.u32 %v5447, %v5443
        %v5449 = vrot.slane %v5448, 4
        %v5451 = vshll.u32 %v5325, 16
        %v5453 = vrot.slane %v5451, 5
        %v5454 = vsel %vm857, %v5449, %v5453
        %v5456 = vshrl.u32 %v5326, 16
        %v5458 = vrot.slane %v5456, 4
        %v5459 = vshll.u32 %v5326, 16
        %v5461 = vrot.slane %v5459, 5
        %v5462 = vor.u32 %v5458, %v5461
        %v5463 = vrot.slane %v5462, 4
        %v5465 = vshll.u32 %v5327, 16
        %v5467 = vrot.slane %v5465, 5
        %v5468 = vsel %vm857, %v5463, %v5467
        %v5469 = vshrl.u32 %v5327, 16
        %v5471 = vrot.slane %v5469, 4
        %v5472 = vor.u32 %v5471, %v5467
        %v5473 = vrot.slane %v5472, 4
        %v5475 = vshll.u32 %v5328, 16
        %v5477 = vrot.slane %v5475, 5
        %v5478 = vsel %vm857, %v5473, %v5477
        %v5480 = vshrl.u32 %v5329, 16
        %v5482 = vrot.slane %v5480, 4
        %v5483 = vshll.u32 %v5329, 16
        %v5485 = vrot.slane %v5483, 5
        %v5486 = vor.u32 %v5482, %v5485
        %v5487 = vrot.slane %v5486, 4
        %v5489 = vshll.u32 %v5330, 16
        %v5491 = vrot.slane %v5489, 5
        %v5492 = vsel %vm857, %v5487, %v5491
        %v5493 = vshrl.u32 %v5330, 16
        %v5495 = vrot.slane %v5493, 4
        %v5496 = vor.u32 %v5495, %v5491
        %v5497 = vrot.slane %v5496, 4
        %v5499 = vshll.u32 %v5331, 16
        %v5501 = vrot.slane %v5499, 5
        %v5502 = vsel %vm857, %v5497, %v5501
        %v5504 = vshrl.u32 %v5332, 16
        %v5506 = vrot.slane %v5504, 4
        %v5507 = vshll.u32 %v5332, 16
        %v5509 = vrot.slane %v5507, 5
        %v5510 = vor.u32 %v5506, %v5509
        %v5511 = vrot.slane %v5510, 4
        %v5513 = vshll.u32 %v5333, 16
        %v5515 = vrot.slane %v5513, 5
        %v5516 = vsel %vm857, %v5511, %v5515
        %v5517 = vshrl.u32 %v5333, 16
        %v5519 = vrot.slane %v5517, 4
        %v5520 = vor.u32 %v5519, %v5515
        %v5521 = vrot.slane %v5520, 4
        %v5523 = vshll.u32 %v5334, 16
        %v5525 = vrot.slane %v5523, 5
        %v5526 = vsel %vm857, %v5521, %v5525
        %v5527 = vld [vmem:[%s2951] sm:$0xf]
        %v5528 = vld [vmem:[%s2951 + $0x4] sm:$0xf]
        %v5529 = vld [vmem:[%s2951 + $0x8] sm:$0xf]
        %v5530 = vld [vmem:[%s2951 + $0xc] sm:$0xf]
        %v5531 = vunpack.c.l.b16 %v5348
        %v5532 = vunpack.c.l.b16 %v5358
        %v5533 = vunpack.c.l.b16 %v5372
        %v5534 = vunpack.c.l.b16 %v5382
        %v5535 = vunpack.c.l.b16 %v5396
        %v5536 = vunpack.c.l.b16 %v5406
        %v5537 = vunpack.c.l.b16 %v5420
        %v5538 = vunpack.c.l.b16 %v5430
        %v5539 = vunpack.c.l.b16 %v5444
        %v5540 = vunpack.c.l.b16 %v5454
        %v5541 = vunpack.c.l.b16 %v5468
        %v5542 = vunpack.c.l.b16 %v5478
        %v5543 = vunpack.c.l.b16 %v5492
        %v5544 = vunpack.c.l.b16 %v5502
        %v5545 = vunpack.c.l.b16 %v5516
        %v5546 = vunpack.c.l.b16 %v5526
        %v5547 = vpack.c.b16 %v5532, %v5531
        %v5548 = vpack.c.b16 %v5534, %v5533
        %v5549 = vpack.c.b16 %v5536, %v5535
        %v5550 = vpack.c.b16 %v5538, %v5537
        %v5551 = vpack.c.b16 %v5540, %v5539
        %v5552 = vpack.c.b16 %v5542, %v5541
        %v5553 = vpack.c.b16 %v5544, %v5543
        %v5554 = vpack.c.b16 %v5546, %v5545
        %v5559 = vunpack.c.l.b16 %v5527
        %v5560 = vunpack.c.l.b16 %v5528
        %v5561 = vunpack.c.l.b16 %v5529
        %v5562 = vunpack.c.l.b16 %v5530
        %v5563 = vpack.c.b16 %v5560, %v5559
        %v5564 = vpack.c.b16 %v5562, %v5561
        %v5568 = vsel %vm1091, %v5547, 0
        %v5571 = vsel %vm1091, %v5548, 0
        %v5574 = vsel %vm1091, %v5549, 0
        %v5577 = vsel %vm1091, %v5550, 0
        %v5580 = vsel %vm1091, %v5551, 0
        %v5583 = vsel %vm1091, %v5552, 0
        %v5586 = vsel %vm1091, %v5553, 0
        %v5589 = vsel %vm1091, %v5554, 0
        %5591 = vmatprep.subr.bf16.mxu0 0
        %5592 = vmatpush1.bf16.msra.mxu0 %v5563
        %5593 = vmatprep.subr.bf16.mxu0 0
        %5594 = vmatpush1.bf16.msra.mxu0 %v5564
        %5595 = vmatprep.subr.bf16.mxu0 0
        %5596 = vmatpush1.bf16.msra.mxu0 0
        %5597 = vmatprep.subr.bf16.mxu0 0
        %5598 = vmatpush1.bf16.msra.mxu0 0
        %5599 = vmatprep.subr.bf16.mxu0 0
        %5600 = vmatpush1.bf16.msra.mxu0 0
        %5601 = vmatprep.subr.bf16.mxu0 0
        %5602 = vmatpush1.bf16.msra.mxu0 0
        %5603 = vmatprep.subr.bf16.mxu0 0
        %5604 = vmatpush1.bf16.msra.mxu0 0
        %5605 = vmatprep.subr.bf16.mxu0 0
        %5606 = vmatpush1.bf16.msra.mxu0 0
        %5607 = vmatprep.subr.bf16.mxu0 0
        %5608 = vmatpush1.bf16.msra.mxu0 0
        %5609 = vmatprep.subr.bf16.mxu0 0
        %5610 = vmatpush1.bf16.msra.mxu0 0
        %5611 = vmatprep.subr.bf16.mxu0 0
        %5612 = vmatpush1.bf16.msra.mxu0 0
        %5613 = vmatprep.subr.bf16.mxu0 0
        %5614 = vmatpush1.bf16.msra.mxu0 0
        %5615 = vmatprep.subr.bf16.mxu0 0
        %5616 = vmatpush1.bf16.msra.mxu0 0
        %5617 = vmatprep.subr.bf16.mxu0 0
        %5618 = vmatpush1.bf16.msra.mxu0 0
        %5619 = vmatprep.subr.bf16.mxu0 0
        %5620 = vmatpush1.bf16.msra.mxu0 0
        %5621 = vmatprep.subr.bf16.mxu0 0
        %5622 = vmatpush1.bf16.msra.mxu0 0
        %5623 = vmatprep.mubr.bf16.mxu0 0
        %5624 = vmatmul.mubr.bf16.gmra.mrb[0].mxu0 %v5568
        %v5625 = vpop.f32.mrb[0].mxu0
        %v5626 = vadd.f32 0.0, %v5625
        %v5627 = vpop.f32.mrb[0].mxu0
        %v5628 = vpop.f32.mrb[0].mxu0
        %v5629 = vadd.f32 0.0, %v5628
        %v5630 = vpop.f32.mrb[0].mxu0
        %5631 = vmatprep.mubr.bf16.mxu0 0
        %5632 = vmatmul.mubr.bf16.gmra.mrb[0].mxu0 %v5571
        %v5633 = vpop.f32.mrb[0].mxu0
        %v5634 = vadd.f32 0.0, %v5633
        %v5635 = vpop.f32.mrb[0].mxu0
        %v5636 = vpop.f32.mrb[0].mxu0
        %v5637 = vadd.f32 0.0, %v5636
        %v5638 = vpop.f32.mrb[0].mxu0
        %5639 = vmatprep.mubr.bf16.mxu0 0
        %5640 = vmatmul.mubr.bf16.gmra.mrb[0].mxu0 %v5574
        %v5641 = vpop.f32.mrb[0].mxu0
        %v5642 = vadd.f32 0.0, %v5641
        %v5643 = vpop.f32.mrb[0].mxu0
        %v5644 = vpop.f32.mrb[0].mxu0
        %v5645 = vadd.f32 0.0, %v5644
        %v5646 = vpop.f32.mrb[0].mxu0
        %5647 = vmatprep.mubr.bf16.mxu0 0
        %5648 = vmatmul.mubr.bf16.gmra.mrb[0].mxu0 %v5577
        %v5649 = vpop.f32.mrb[0].mxu0
        %v5650 = vadd.f32 0.0, %v5649
        %v5651 = vpop.f32.mrb[0].mxu0
        %v5652 = vpop.f32.mrb[0].mxu0
        %v5653 = vadd.f32 0.0, %v5652
        %v5654 = vpop.f32.mrb[0].mxu0
        %5655 = vmatprep.mubr.bf16.mxu0 0
        %5656 = vmatmul.mubr.bf16.gmra.mrb[0].mxu0 %v5580
        %v5657 = vpop.f32.mrb[0].mxu0
        %v5658 = vadd.f32 0.0, %v5657
        %v5659 = vpop.f32.mrb[0].mxu0
        %v5660 = vpop.f32.mrb[0].mxu0
        %v5661 = vadd.f32 0.0, %v5660
        %v5662 = vpop.f32.mrb[0].mxu0
        %5663 = vmatprep.mubr.bf16.mxu0 0
        %5664 = vmatmul.mubr.bf16.gmra.mrb[0].mxu0 %v5583
        %v5665 = vpop.f32.mrb[0].mxu0
        %v5666 = vadd.f32 0.0, %v5665
        %v5667 = vpop.f32.mrb[0].mxu0
        %v5668 = vpop.f32.mrb[0].mxu0
        %v5669 = vadd.f32 0.0, %v5668
        %v5670 = vpop.f32.mrb[0].mxu0
        %5671 = vmatprep.mubr.bf16.mxu0 0
        %5672 = vmatmul.mubr.bf16.gmra.mrb[0].mxu0 %v5586
        %v5673 = vpop.f32.mrb[0].mxu0
        %v5674 = vadd.f32 0.0, %v5673
        %v5675 = vpop.f32.mrb[0].mxu0
        %v5676 = vpop.f32.mrb[0].mxu0
        %v5677 = vadd.f32 0.0, %v5676
        %v5678 = vpop.f32.mrb[0].mxu0
        %5679 = vmatprep.mubr.bf16.mxu0 0
        %5680 = vmatmul.mubr.bf16.gmra.mrb[0].mxu0 %v5589
        %v5681 = vpop.f32.mrb[0].mxu0
        %v5682 = vadd.f32 0.0, %v5681
        %v5683 = vpop.f32.mrb[0].mxu0
        %v5684 = vpop.f32.mrb[0].mxu0
        %v5685 = vadd.f32 0.0, %v5684
        %v5686 = vpop.f32.mrb[0].mxu0
        %5687 = vdwg.mxu0
        %v5688 = vadd.f32 %v5295, %v5626
        %v5689 = vadd.f32 %v5296, %v5629
        %v5690 = vadd.f32 %v5297, %v5634
        %v5691 = vadd.f32 %v5298, %v5637
        %v5692 = vadd.f32 %v5299, %v5642
        %v5693 = vadd.f32 %v5300, %v5645
        %v5694 = vadd.f32 %v5301, %v5650
        %v5695 = vadd.f32 %v5302, %v5653
        %v5696 = vadd.f32 %v5303, %v5658
        %v5697 = vadd.f32 %v5304, %v5661
        %v5698 = vadd.f32 %v5305, %v5666
        %v5699 = vadd.f32 %v5306, %v5669
        %v5700 = vadd.f32 %v5307, %v5674
        %v5701 = vadd.f32 %v5308, %v5677
        %v5702 = vadd.f32 %v5309, %v5682
        %v5703 = vadd.f32 %v5310, %v5685
        %v5704 = vld [vmem:[%s5101] sm:$0xe]
        %v5705 = vld [vmem:[%s5101 + $0xc] sm:$0xe]
        %v5706 = vld [vmem:[%s5101 + $0x18] sm:$0xe]
        %v5707 = vld [vmem:[%s5101 + $0x24] sm:$0xe]
        %v5708 = vld [vmem:[%s5101 + $0x30] sm:$0xe]
        %v5709 = vld [vmem:[%s5101 + $0x3c] sm:$0xe]
        %v5710 = vld [vmem:[%s5101 + $0x48] sm:$0xe]
        %v5711 = vld [vmem:[%s5101 + $0x54] sm:$0xe]
        %v5736 = vrot.slane %v5704, 5
        %v5737 = vrot.slane %v5736, 4
        %v5738 = vrot.slane %v5312, 5
        %v5739 = vsel %vm1412, %v5737, %v5738
        %v5740 = vrot.slane %v5738, 4
        %v5741 = vrot.slane %v5313, 5
        %v5742 = vsel %vm1412, %v5740, %v5741
        %v5743 = vrot.slane %v5705, 5
        %v5744 = vrot.slane %v5743, 4
        %v5745 = vrot.slane %v5315, 5
        %v5746 = vsel %vm1412, %v5744, %v5745
        %v5747 = vrot.slane %v5745, 4
        %v5748 = vrot.slane %v5316, 5
        %v5749 = vsel %vm1412, %v5747, %v5748
        %v5750 = vrot.slane %v5706, 5
        %v5751 = vrot.slane %v5750, 4
        %v5752 = vrot.slane %v5318, 5
        %v5753 = vsel %vm1412, %v5751, %v5752
        %v5754 = vrot.slane %v5752, 4
        %v5755 = vrot.slane %v5319, 5
        %v5756 = vsel %vm1412, %v5754, %v5755
        %v5757 = vrot.slane %v5707, 5
        %v5758 = vrot.slane %v5757, 4
        %v5759 = vrot.slane %v5321, 5
        %v5760 = vsel %vm1412, %v5758, %v5759
        %v5761 = vrot.slane %v5759, 4
        %v5762 = vrot.slane %v5322, 5
        %v5763 = vsel %vm1412, %v5761, %v5762
        %v5764 = vrot.slane %v5708, 5
        %v5765 = vrot.slane %v5764, 4
        %v5766 = vrot.slane %v5324, 5
        %v5767 = vsel %vm1412, %v5765, %v5766
        %v5768 = vrot.slane %v5766, 4
        %v5769 = vrot.slane %v5325, 5
        %v5770 = vsel %vm1412, %v5768, %v5769
        %v5771 = vrot.slane %v5709, 5
        %v5772 = vrot.slane %v5771, 4
        %v5773 = vrot.slane %v5327, 5
        %v5774 = vsel %vm1412, %v5772, %v5773
        %v5775 = vrot.slane %v5773, 4
        %v5776 = vrot.slane %v5328, 5
        %v5777 = vsel %vm1412, %v5775, %v5776
        %v5778 = vrot.slane %v5710, 5
        %v5779 = vrot.slane %v5778, 4
        %v5780 = vrot.slane %v5330, 5
        %v5781 = vsel %vm1412, %v5779, %v5780
        %v5782 = vrot.slane %v5780, 4
        %v5783 = vrot.slane %v5331, 5
        %v5784 = vsel %vm1412, %v5782, %v5783
        %v5785 = vrot.slane %v5711, 5
        %v5786 = vrot.slane %v5785, 4
        %v5787 = vrot.slane %v5333, 5
        %v5788 = vsel %vm1412, %v5786, %v5787
        %v5789 = vrot.slane %v5787, 4
        %v5790 = vrot.slane %v5334, 5
        %v5791 = vsel %vm1412, %v5789, %v5790
        %v5792 = vld [vmem:[%s3217] sm:$0xf]
        %v5793 = vld [vmem:[%s3217 + $0x4] sm:$0xf]
        %v5794 = vld [vmem:[%s3217 + $0x8] sm:$0xf]
        %v5795 = vld [vmem:[%s3217 + $0xc] sm:$0xf]
        %v5796 = vunpack.c.l.b16 %v5739
        %v5797 = vunpack.c.l.b16 %v5742
        %v5798 = vunpack.c.l.b16 %v5746
        %v5799 = vunpack.c.l.b16 %v5749
        %v5800 = vunpack.c.l.b16 %v5753
        %v5801 = vunpack.c.l.b16 %v5756
        %v5802 = vunpack.c.l.b16 %v5760
        %v5803 = vunpack.c.l.b16 %v5763
        %v5804 = vunpack.c.l.b16 %v5767
        %v5805 = vunpack.c.l.b16 %v5770
        %v5806 = vunpack.c.l.b16 %v5774
        %v5807 = vunpack.c.l.b16 %v5777
        %v5808 = vunpack.c.l.b16 %v5781
        %v5809 = vunpack.c.l.b16 %v5784
        %v5810 = vunpack.c.l.b16 %v5788
        %v5811 = vunpack.c.l.b16 %v5791
        %v5812 = vpack.c.b16 %v5797, %v5796
        %v5813 = vpack.c.b16 %v5799, %v5798
        %v5814 = vpack.c.b16 %v5801, %v5800
        %v5815 = vpack.c.b16 %v5803, %v5802
        %v5816 = vpack.c.b16 %v5805, %v5804
        %v5817 = vpack.c.b16 %v5807, %v5806
        %v5818 = vpack.c.b16 %v5809, %v5808
        %v5819 = vpack.c.b16 %v5811, %v5810
        %v5824 = vunpack.c.l.b16 %v5792
        %v5825 = vunpack.c.l.b16 %v5793
        %v5826 = vunpack.c.l.b16 %v5794
        %v5827 = vunpack.c.l.b16 %v5795
        %v5828 = vpack.c.b16 %v5825, %v5824
        %v5829 = vpack.c.b16 %v5827, %v5826
        %v5833 = vsel %vm1091, %v5812, 0
        %v5836 = vsel %vm1091, %v5813, 0
        %v5839 = vsel %vm1091, %v5814, 0
        %v5842 = vsel %vm1091, %v5815, 0
        %v5845 = vsel %vm1091, %v5816, 0
        %v5848 = vsel %vm1091, %v5817, 0
        %v5851 = vsel %vm1091, %v5818, 0
        %v5854 = vsel %vm1091, %v5819, 0
        %5856 = vmatprep.subr.bf16.mxu0 0
        %5857 = vmatpush1.bf16.msra.mxu0 %v5828
        %5858 = vmatprep.subr.bf16.mxu0 0
        %5859 = vmatpush1.bf16.msra.mxu0 %v5829
        %5860 = vmatprep.subr.bf16.mxu0 0
        %5861 = vmatpush1.bf16.msra.mxu0 0
        %5862 = vmatprep.subr.bf16.mxu0 0
        %5863 = vmatpush1.bf16.msra.mxu0 0
        %5864 = vmatprep.subr.bf16.mxu0 0
        %5865 = vmatpush1.bf16.msra.mxu0 0
        %5866 = vmatprep.subr.bf16.mxu0 0
        %5867 = vmatpush1.bf16.msra.mxu0 0
        %5868 = vmatprep.subr.bf16.mxu0 0
        %5869 = vmatpush1.bf16.msra.mxu0 0
        %5870 = vmatprep.subr.bf16.mxu0 0
        %5871 = vmatpush1.bf16.msra.mxu0 0
        %5872 = vmatprep.subr.bf16.mxu0 0
        %5873 = vmatpush1.bf16.msra.mxu0 0
        %5874 = vmatprep.subr.bf16.mxu0 0
        %5875 = vmatpush1.bf16.msra.mxu0 0
        %5876 = vmatprep.subr.bf16.mxu0 0
        %5877 = vmatpush1.bf16.msra.mxu0 0
        %5878 = vmatprep.subr.bf16.mxu0 0
        %5879 = vmatpush1.bf16.msra.mxu0 0
        %5880 = vmatprep.subr.bf16.mxu0 0
        %5881 = vmatpush1.bf16.msra.mxu0 0
        %5882 = vmatprep.subr.bf16.mxu0 0
        %5883 = vmatpush1.bf16.msra.mxu0 0
        %5884 = vmatprep.subr.bf16.mxu0 0
        %5885 = vmatpush1.bf16.msra.mxu0 0
        %5886 = vmatprep.subr.bf16.mxu0 0
        %5887 = vmatpush1.bf16.msra.mxu0 0
        %5888 = vmatprep.mubr.bf16.mxu0 0
        %5889 = vmatmul.mubr.bf16.gmra.mrb[0].mxu0 %v5833
        %v5890 = vpop.f32.mrb[0].mxu0
        %v5891 = vadd.f32 0.0, %v5890
        %v5892 = vpop.f32.mrb[0].mxu0
        %v5893 = vpop.f32.mrb[0].mxu0
        %v5894 = vadd.f32 0.0, %v5893
        %v5895 = vpop.f32.mrb[0].mxu0
        %5896 = vmatprep.mubr.bf16.mxu0 0
        %5897 = vmatmul.mubr.bf16.gmra.mrb[0].mxu0 %v5836
        %v5898 = vpop.f32.mrb[0].mxu0
        %v5899 = vadd.f32 0.0, %v5898
        %v5900 = vpop.f32.mrb[0].mxu0
        %v5901 = vpop.f32.mrb[0].mxu0
        %v5902 = vadd.f32 0.0, %v5901
        %v5903 = vpop.f32.mrb[0].mxu0
        %5904 = vmatprep.mubr.bf16.mxu0 0
        %5905 = vmatmul.mubr.bf16.gmra.mrb[0].mxu0 %v5839
        %v5906 = vpop.f32.mrb[0].mxu0
        %v5907 = vadd.f32 0.0, %v5906
        %v5908 = vpop.f32.mrb[0].mxu0
        %v5909 = vpop.f32.mrb[0].mxu0
        %v5910 = vadd.f32 0.0, %v5909
        %v5911 = vpop.f32.mrb[0].mxu0
        %5912 = vmatprep.mubr.bf16.mxu0 0
        %5913 = vmatmul.mubr.bf16.gmra.mrb[0].mxu0 %v5842
        %v5914 = vpop.f32.mrb[0].mxu0
        %v5915 = vadd.f32 0.0, %v5914
        %v5916 = vpop.f32.mrb[0].mxu0
        %v5917 = vpop.f32.mrb[0].mxu0
        %v5918 = vadd.f32 0.0, %v5917
        %v5919 = vpop.f32.mrb[0].mxu0
        %5920 = vmatprep.mubr.bf16.mxu0 0
        %5921 = vmatmul.mubr.bf16.gmra.mrb[0].mxu0 %v5845
        %v5922 = vpop.f32.mrb[0].mxu0
        %v5923 = vadd.f32 0.0, %v5922
        %v5924 = vpop.f32.mrb[0].mxu0
        %v5925 = vpop.f32.mrb[0].mxu0
        %v5926 = vadd.f32 0.0, %v5925
        %v5927 = vpop.f32.mrb[0].mxu0
        %5928 = vmatprep.mubr.bf16.mxu0 0
        %5929 = vmatmul.mubr.bf16.gmra.mrb[0].mxu0 %v5848
        %v5930 = vpop.f32.mrb[0].mxu0
        %v5931 = vadd.f32 0.0, %v5930
        %v5932 = vpop.f32.mrb[0].mxu0
        %v5933 = vpop.f32.mrb[0].mxu0
        %v5934 = vadd.f32 0.0, %v5933
        %v5935 = vpop.f32.mrb[0].mxu0
        %5936 = vmatprep.mubr.bf16.mxu0 0
        %5937 = vmatmul.mubr.bf16.gmra.mrb[0].mxu0 %v5851
        %v5938 = vpop.f32.mrb[0].mxu0
        %v5939 = vadd.f32 0.0, %v5938
        %v5940 = vpop.f32.mrb[0].mxu0
        %v5941 = vpop.f32.mrb[0].mxu0
        %v5942 = vadd.f32 0.0, %v5941
        %v5943 = vpop.f32.mrb[0].mxu0
        %5944 = vmatprep.mubr.bf16.mxu0 0
        %5945 = vmatmul.mubr.bf16.gmra.mrb[0].mxu0 %v5854
        %v5946 = vpop.f32.mrb[0].mxu0
        %v5947 = vadd.f32 0.0, %v5946
        %v5948 = vpop.f32.mrb[0].mxu0
        %v5949 = vpop.f32.mrb[0].mxu0
        %v5950 = vadd.f32 0.0, %v5949
        %v5951 = vpop.f32.mrb[0].mxu0
        %5952 = vdwg.mxu0
        %v5953 = vadd.f32 %v5688, %v5891
        %v5954 = vadd.f32 %v5689, %v5894
        %v5955 = vadd.f32 %v5690, %v5899
        %v5956 = vadd.f32 %v5691, %v5902
        %v5957 = vadd.f32 %v5692, %v5907
        %v5958 = vadd.f32 %v5693, %v5910
        %v5959 = vadd.f32 %v5694, %v5915
        %v5960 = vadd.f32 %v5695, %v5918
        %v5961 = vadd.f32 %v5696, %v5923
        %v5962 = vadd.f32 %v5697, %v5926
        %v5963 = vadd.f32 %v5698, %v5931
        %v5964 = vadd.f32 %v5699, %v5934
        %v5965 = vadd.f32 %v5700, %v5939
        %v5966 = vadd.f32 %v5701, %v5942
        %v5967 = vadd.f32 %v5702, %v5947
        %v5968 = vadd.f32 %v5703, %v5950
        %s5969 = smul.u32 8, 16
        %s5970 = scalar_lea.vmem %s197, %s5969 [#allocation8]
        %5971 = vst [vmem:[%s5970] sm:$0xff] %v5953
        %5972 = vst [vmem:[%s5970 + $0x8] sm:$0xff] %v5954
        %5973 = vst [vmem:[%s5970 + $0x10] sm:$0xff] %v5955
        %5974 = vst [vmem:[%s5970 + $0x18] sm:$0xff] %v5956
        %5975 = vst [vmem:[%s5970 + $0x20] sm:$0xff] %v5957
        %5976 = vst [vmem:[%s5970 + $0x28] sm:$0xff] %v5958
        %5977 = vst [vmem:[%s5970 + $0x30] sm:$0xff] %v5959
        %5978 = vst [vmem:[%s5970 + $0x38] sm:$0xff] %v5960
        %5979 = vst [vmem:[%s5970 + $0x40] sm:$0xff] %v5961
        %5980 = vst [vmem:[%s5970 + $0x48] sm:$0xff] %v5962
        %5981 = vst [vmem:[%s5970 + $0x50] sm:$0xff] %v5963
        %5982 = vst [vmem:[%s5970 + $0x58] sm:$0xff] %v5964
        %5983 = vst [vmem:[%s5970 + $0x60] sm:$0xff] %v5965
        %5984 = vst [vmem:[%s5970 + $0x68] sm:$0xff] %v5966
        %5985 = vst [vmem:[%s5970 + $0x70] sm:$0xff] %v5967
        %5986 = vst [vmem:[%s5970 + $0x78] sm:$0xff] %v5968
        %s5987 = sand.u32 %s94, 1
        %s5988 = scalar_lea.sflag [#allocation5], %s5987
        %s5989 = sand.u32 %s94, 1
        %s5990 = smul.addr %s5989, 256
        %s5991 = scalar_lea.vmem [#allocation8], %s5990
        // Predicated region
        $region37: #{tpu_custom_call.1} parent=27 // pred_check
          %p5992 = pneg %p104
        $region38: #{tpu_custom_call.1} parent=27 // pred_check_branch
          %5994 = sbr.rel (%p5992) target = $region40
        $region39: #{tpu_custom_call.1} parent=27 // pred_region
          %s5996 = ssub.s32 4096, 4096
          %5997 = vsyncadd %s5988, %s5996
          %s5998 = smul.addr %s24, 32
          %s5999 = sadd.s32 %s25, %s5998
          %s6000 = smul.addr %s5999, 128
          %s6001 = scalar_lea.hbm %s2, %s6000
          %s6002 = sshll.u32 %s5991, 4
          %s6003 = int_to_ptr.vmem [resolvable:$true] %s6002
          %6008 = dma.vmem_to_hbm [thread:$0]  %s6003, 4096, %s6001, %s5988, 128, 128, 8
        $region40: #{tpu_custom_call.1} parent=27 // pred_fallthru
          _
      $region28: #{tpu_custom_call.1} parent=5 // pred_fallthru
        _
      %p6009 = scmp.le.s32.totalorder 2, %s15
      // Predicated region
      $region41: #{tpu_custom_call.1} parent=5 // pred_check
        %p6010 = pneg %p6009
      $region42: #{tpu_custom_call.1} parent=5 // pred_check_branch
        %6012 = sbr.rel (%p6010) target = $region44
      $region43: #{tpu_custom_call.1} parent=5 // pred_region
        %s6013 = ssub.s32 %s15, 2
        // Predicated region
        $region45: #{tpu_custom_call.1} parent=43 // pred_check
          %p6014 = pneg %p110
        $region46: #{tpu_custom_call.1} parent=43 // pred_check_branch
          %6016 = sbr.rel (%p6014) target = $region48
        $region47: #{tpu_custom_call.1} parent=43 // pred_region
          %s6017 = sand.u32 %s95, 1
          %s6018 = scalar_lea.sflag [#allocation5], %s6017
          %s6019 = sand.u32 %s95, 1
          %s6020 = smul.addr %s6019, 256
          %s6021 = scalar_lea.vmem [#allocation8], %s6020
          %6022 = dma.done %s6018, 4096
        $region48: #{tpu_custom_call.1} parent=43 // pred_fallthru
          _
      $region44: #{tpu_custom_call.1} parent=5 // pred_fallthru
        _
    $region6: #{tpu_custom_call.1} parent=1 // loop_footer
      %s19 = sadd.s32 1, %s15
    $region7: #{tpu_custom_call.1} parent=1 // loop_footer_branch
      %14 = sbr.rel target = $region3
    $region8: #{tpu_custom_call.1} parent=1 // loop_exit
      _
    %6023 = vsyncpa [#allocation4], 1
    %s6024 = scalar_lea.sflag [#allocation4], 1
    %6025 = vsyncpa %s6024, 1
    %6026 = vsyncpa [#allocation7], 1
    %6027 = vsyncpa [#allocation5], 1
    %s6028 = scalar_lea.sflag [#allocation5], 1
    %6029 = vsyncpa %s6028, 1

</llo_original>
